<compile_context>
chip_gen: v7x
topology: tpu7x:2x2x1
jax: 0.10.0
libtpu: 0.0.40
codegen_flags: <defaults>
</compile_context>

<pallas_src>
import jax
import jax.numpy as jnp
from jax.experimental import pallas as pl
from jax.experimental.pallas import tpu as pltpu


def relposemb_kernel(q_ref, h_emb_t_ref, w_emb_ref, o_ref):
    # q_ref:       (TB, TX, W, D)     block of (batch*head, height-rows)
    # h_emb_t_ref: (TX, D, H)         rel-height embeddings, [x, d, u]
    # w_emb_ref:   (W, W, D)          rel-width embeddings,  [y, v, d]
    # o_ref:       (TB, TX, W, H*W)   lane-dense output block
    tb, tx, w, d = q_ref.shape
    h = h_emb_t_ref.shape[2]

    w_emb = w_emb_ref[...]                                   # (W, W, D)

    # Stream one height row (x) at a time so only that row's f32 intermediates
    # are live (no block-wide ws tensor held across the unrolled loop).
    # tx is a static block-shape constant, so this loop unrolls.
    for x in range(tx):
        q_x = q_ref[:, x]                                    # (TB, W, D)

        # Height score: one (TB*W, D) @ (D, H) MXU matmul.
        hs_x = jnp.dot(q_x.reshape(tb * w, d), h_emb_t_ref[x],
                       preferred_element_type=jnp.float32)   # (TB*W, H)
        hs_x = hs_x.reshape(tb, w, h)

        # Width score for this row only:
        #   ws[m, y, v] = sum_d q_x[m, y, d] * w_emb[y, v, d]
        ws_x = jnp.einsum('myd,yvd->myv', q_x, w_emb,
                          preferred_element_type=jnp.float32)  # (TB, W, W)

        out_x = hs_x[:, :, :, None] + ws_x[:, :, None, :]    # (TB, W, H, W)
        # Full-block, offset-0 store into the (TB, W, H*W) slice for row x.
        o_ref[:, x] = out_x.reshape(tb, w, h * w).astype(o_ref.dtype)


def _vmem_budget_bytes():
    """~50% of physical VMEM; portable across v5e/v6e (128 MiB) and v7x (64 MiB)."""
    try:
        phys = int(pltpu.get_tpu_info().vmem_capacity_bytes)
    except Exception:
        phys = 64 << 20  # conservative fallback = v7x per-core VMEM
    return max(phys // 2, 16 << 20)


def _choose_tiles(bh, h, w, d, out_itemsize, in_itemsize):
    """Pick (TB, TX) and a vmem limit.

    Legality is trivial with the 4-D output layout (the last two block dims of
    every operand equal the full array dims), so the chooser only balances:
      * VMEM: 2x double-buffered (out + q + h_emb + w_emb) blocks + per-row
        f32 intermediates must fit the budget; out block capped at 8 MiB.
      * Parallelism: target >= 8 grid steps so megacore sharding and the
        double-buffered pipelines always have work (per-step overhead
        ~0.35 us is negligible vs multi-us slab DMAs).
    """
    hw = h * w
    budget = _vmem_budget_bytes()
    out_blk_cap = 8 << 20

    def divisors(n):
        return [k for k in range(1, n + 1) if n % k == 0]

    def vmem_need(tb, tx):
        out_blk = tb * tx * w * hw * out_itemsize
        q_blk = tb * tx * w * d * in_itemsize
        hemb_blk = tx * d * h * in_itemsize
        wemb_blk = w * w * d * in_itemsize
        live = tb * w * (h + w + 2 * hw) * 4        # per-row f32 intermediates
        need = 2 * (out_blk + q_blk + hemb_blk + wemb_blk) + live
        return need, out_blk

    target_steps = min(8, bh * h)
    candidates = []
    for tb in divisors(bh):
        for tx in divisors(h):
            if tx > 16:                 # bound the unrolled per-row loop
                continue
            need, out_blk = vmem_need(tb, tx)
            if need > budget or out_blk > out_blk_cap:
                continue
            steps = (bh // tb) * (h // tx)
            candidates.append((tb, tx, out_blk, steps, need))

    if not candidates:
        # Degenerate fall-back: smallest possible block (raise the limit).
        need, out_blk = vmem_need(1, 1)
        candidates = [(1, 1, out_blk, bh * h, need)]

    good = [c for c in candidates if c[3] >= target_steps]
    if good:
        # Enough parallel steps: largest block (best DMA amortization),
        # tie-broken toward larger TB (bigger matmul M dimension).
        tb, tx, _, _, need = max(good, key=lambda c: (c[2], c[0], c[1]))
    else:
        # Otherwise maximize the number of grid steps.
        tb, tx, _, _, need = max(candidates, key=lambda c: (c[3], c[2]))

    vmem_limit = int(max(need + (4 << 20), 16 << 20))
    return tb, tx, vmem_limit


def rel_pos_emb_forward(q, rel_height_table, rel_width_table, max_pos_size,
                        out_dtype=None):
    """Pallas implementation of RelPosEmb.forward.

    out_dtype: output dtype (default q.dtype).  Passing jnp.bfloat16 halves the
    HBM writeback of this writeback-bound kernel.
    """
    b, heads, h, w, d = q.shape
    bh = b * heads
    hw = h * w
    out_dtype = q.dtype if out_dtype is None else jnp.dtype(out_dtype)

    # rel_ind[i, j] = j - i + max_pos_size - 1  (same buffer as PyTorch module)
    deltas = jnp.arange(max_pos_size)[None, :] - jnp.arange(max_pos_size)[:, None]
    rel_ind = deltas + max_pos_size - 1

    # Embedding lookups (gather glue, plain JAX).
    h_emb = rel_height_table[rel_ind[:h, :h]]      # (h, h, d)  ~ [x, u, d]
    w_emb = rel_width_table[rel_ind[:w, :w]]       # (w, w, d)  ~ [y, v, d]
    h_emb_t = jnp.transpose(h_emb, (0, 2, 1))      # (h, d, h)  ~ [x, d, u]

    q_flat = q.reshape(bh, h, w, d)

    in_itemsize = jnp.dtype(q.dtype).itemsize
    out_itemsize = jnp.dtype(out_dtype).itemsize
    tb, tx, vmem_limit = _choose_tiles(bh, h, w, d, out_itemsize, in_itemsize)
    grid = (bh // tb, h // tx)

    # Advisory cost estimate: bytes are dominated by the output writeback.
    flops = 2 * bh * h * w * d * (h + w)
    bytes_out = bh * h * w * hw * out_itemsize
    bytes_in = (bh * h * w * d + h * h * d + w * w * d) * in_itemsize
    cost = pl.CostEstimate(flops=flops, transcendentals=0,
                           bytes_accessed=bytes_out + bytes_in)

    # TODO(synk): mark the grid-invariant w_emb spec with
    # pipeline_mode=pl.Buffered(1) (single buffer) once verified on the target
    # jax version; saves one w*w*d copy of VMEM on v7x.
    # TODO(synk): for full HBM-writeback savings, fuse this kernel into the
    # downstream attention-score add so the (h,w,h,w) tensor never hits HBM.
    out4 = pl.pallas_call(
        relposemb_kernel,
        out_shape=jax.ShapeDtypeStruct((bh, h, w, hw), out_dtype),
        grid_spec=pltpu.PrefetchScalarGridSpec(
            num_scalar_prefetch=0,
            grid=grid,
            in_specs=[
                pl.BlockSpec((tb, tx, w, d), lambda i, j: (i, j, 0, 0)),
                pl.BlockSpec((tx, d, h), lambda i, j: (j, 0, 0)),
                pl.BlockSpec((w, w, d), lambda i, j: (0, 0, 0)),
            ],
            out_specs=pl.BlockSpec((tb, tx, w, hw), lambda i, j: (i, j, 0, 0)),
        ),
        compiler_params=pltpu.CompilerParams(
            dimension_semantics=("parallel", "parallel"),
            vmem_limit_bytes=vmem_limit),
        cost_estimate=cost,
    )(q_flat, h_emb_t, w_emb)

    # (bh, h, w, h*w) -> (b, heads, h, w, h, w): contiguity-preserving, free.
    return out4.reshape(b, heads, h, w, h, w)


def rel_pos_emb_reference(q, rel_height_table, rel_width_table, max_pos_size):
    """Pure-JAX reference mirroring the PyTorch forward."""
    b, heads, h, w, d = q.shape
    deltas = jnp.arange(max_pos_size)[None, :] - jnp.arange(max_pos_size)[:, None]
    rel_ind = deltas + max_pos_size - 1
    h_emb = rel_height_table[rel_ind[:h, :h]]   # (h, h, d)
    w_emb = rel_width_table[rel_ind[:w, :w]]    # (w, w, d)
    hs = jnp.einsum('bhxyd,xud->bhxyu', q, h_emb)      # (b, heads, h, w, h)
    ws = jnp.einsum('bhxyd,yvd->bhxyv', q, w_emb)      # (b, heads, h, w, w)
    return hs[..., :, None] + ws[..., None, :]         # (b, heads, h, w, h, w)


if __name__ == "__main__":
    # Small, deterministic shapes consistent with the module.
    batch, heads, h, w, dim_head = 2, 2, 8, 8, 32
    max_pos_size = 16

    key = jax.random.PRNGKey(0)
    k_q, k_h, k_w = jax.random.split(key, 3)

    q = jax.random.normal(k_q, (batch, heads, h, w, dim_head), dtype=jnp.float32)
    # nn.Embedding(2*max_pos_size - 1, dim_head) weight tables, deterministic init.
    rel_height_table = jax.random.normal(
        k_h, (2 * max_pos_size - 1, dim_head), dtype=jnp.float32)
    rel_width_table = jax.random.normal(
        k_w, (2 * max_pos_size - 1, dim_head), dtype=jnp.float32)

    ref = rel_pos_emb_reference(q, rel_height_table, rel_width_table, max_pos_size)

    # Default path: output dtype matches q (module semantics preserved).
    out = rel_pos_emb_forward(q, rel_height_table, rel_width_table, max_pos_size)
    out = jax.block_until_ready(out)
    assert out.shape == (batch, heads, h, w, h, w)
    assert out.dtype == q.dtype
    assert jnp.allclose(out, ref, atol=1e-3, rtol=1e-3)

    # bf16 output path: halves HBM writeback on this writeback-bound kernel.
    out_bf16 = rel_pos_emb_forward(q, rel_height_table, rel_width_table,
                                   max_pos_size, out_dtype=jnp.bfloat16)
    out_bf16 = jax.block_until_ready(out_bf16)
    assert out_bf16.shape == (batch, heads, h, w, h, w)
    assert out_bf16.dtype == jnp.bfloat16
    assert jnp.allclose(out_bf16.astype(jnp.float32), ref, atol=0.5, rtol=0.05)

    print("KERNEL_OK")
</pallas_src>

<mosaic_0001>
module attributes {stable_mosaic.version = 11 : i64} {
  func.func @relposemb_kernel(%arg0: i32, %arg1: i32, %arg2: memref<4x1x8x32xf32, #tpu.memory_space<vmem>>, %arg3: memref<1x32x8xf32, #tpu.memory_space<vmem>>, %arg4: memref<8x8x32xf32, #tpu.memory_space<vmem>>, %arg5: memref<4x1x8x64xf32, #tpu.memory_space<vmem>>) attributes {dimension_semantics = [#tpu.dimension_semantics<parallel>, #tpu.dimension_semantics<parallel>], iteration_bounds = array<i64: 1, 8>, scalar_prefetch = 0 : i64, scratch_operands = 0 : i64, tpu.core_type = #tpu.core_type<tc>, window_params = [{transform_indices = @transform_0, window_bounds = array<i64: 4, 1, 8, 32>}, {transform_indices = @transform_1, window_bounds = array<i64: 1, 32, 8>}, {pipeline_mode = #tpu.pipeline_mode<synchronous>, transform_indices = @transform_2, window_bounds = array<i64: 8, 8, 32>}, {transform_indices = @transform_3, window_bounds = array<i64: 4, 1, 8, 64>}]} {
    %c0 = arith.constant 0 : index
    %c0_0 = arith.constant 0 : index
    %c0_1 = arith.constant 0 : index
    %0 = vector.load %arg4[%c0, %c0_0, %c0_1] : memref<8x8x32xf32, #tpu.memory_space<vmem>>, vector<8x8x32xf32>
    %c0_2 = arith.constant 0 : index
    %c0_3 = arith.constant 0 : index
    %c0_4 = arith.constant 0 : index
    %c0_5 = arith.constant 0 : index
    %1 = vector.load %arg2[%c0_2, %c0_3, %c0_4, %c0_5] : memref<4x1x8x32xf32, #tpu.memory_space<vmem>>, vector<4x1x8x32xf32>
    %2 = vector.shape_cast %1 : vector<4x1x8x32xf32> to vector<4x8x32xf32>
    %3 = vector.shape_cast %2 : vector<4x8x32xf32> to vector<32x32xf32>
    %c0_6 = arith.constant 0 : index
    %c0_7 = arith.constant 0 : index
    %c0_8 = arith.constant 0 : index
    %4 = vector.load %arg3[%c0_6, %c0_7, %c0_8] : memref<1x32x8xf32, #tpu.memory_space<vmem>>, vector<1x32x8xf32>
    %5 = vector.shape_cast %4 : vector<1x32x8xf32> to vector<32x8xf32>
    %cst = arith.constant dense<0.000000e+00> : vector<32x8xf32>
    %6 = tpu.matmul %3, %5, %cst {dimension_numbers = #tpu.dot_dimension_numbers<[1], [0], [0], [1], [0, 0, 1, 1], [], []>} : vector<32x32xf32>, vector<32x8xf32>, vector<32x8xf32> -> vector<32x8xf32>
    %7 = vector.shape_cast %6 : vector<32x8xf32> to vector<4x8x8xf32>
    "tpu.trace_start"() <{level = 10 : i32, message = "myd,yvd->myv"}> : () -> ()
    %cst_9 = arith.constant dense<0.000000e+00> : vector<8x8x4xf32>
    %8 = tpu.matmul %0, %2, %cst_9 {dimension_numbers = #tpu.dot_dimension_numbers<[2], [2], [1], [0], [0, 0, 0, 1, 1, 0], [0], [1]>} : vector<8x8x32xf32>, vector<4x8x32xf32>, vector<8x8x4xf32> -> vector<8x8x4xf32>
    %9 = tpu.transpose %8, [2, 0, 1] : vector<8x8x4xf32> -> vector<4x8x8xf32>
    "tpu.trace_stop"() : () -> ()
    %10 = vector.shape_cast %7 : vector<4x8x8xf32> to vector<4x8x8x1xf32>
    %11 = vector.shape_cast %9 : vector<4x8x8xf32> to vector<4x8x1x8xf32>
    %12 = vector.broadcast %10 : vector<4x8x8x1xf32> to vector<4x8x8x8xf32>
    %13 = vector.broadcast %11 : vector<4x8x1x8xf32> to vector<4x8x8x8xf32>
    %14 = arith.addf %12, %13 : vector<4x8x8x8xf32>
    %15 = vector.shape_cast %14 : vector<4x8x8x8xf32> to vector<4x8x64xf32>
    %c0_10 = arith.constant 0 : index
    %c0_11 = arith.constant 0 : index
    %c0_12 = arith.constant 0 : index
    %c0_13 = arith.constant 0 : index
    %16 = vector.load %arg5[%c0_10, %c0_11, %c0_12, %c0_13] : memref<4x1x8x64xf32, #tpu.memory_space<vmem>>, vector<4x1x8x64xf32>
    %17 = vector.shape_cast %16 : vector<4x1x8x64xf32> to vector<4x8x64xf32>
    %18 = vector.shape_cast %15 : vector<4x8x64xf32> to vector<4x1x8x64xf32>
    tpu.vector_store %arg5[%c0_10, %c0_11, %c0_12, %c0_13], %18 {strides = array<i32>} : memref<4x1x8x64xf32, #tpu.memory_space<vmem>>, vector<4x1x8x64xf32>,
    return
  }
  func.func @transform_0(%arg0: i32, %arg1: i32) -> (i32, i32, i32, i32) {
    %c0_i32 = arith.constant 0 : i32
    %c0_i32_0 = arith.constant 0 : i32
    %c0_i32_1 = arith.constant 0 : i32
    return %arg0, %arg1, %c0_i32, %c0_i32_0 : i32, i32, i32, i32
  }
  func.func @transform_1(%arg0: i32, %arg1: i32) -> (i32, i32, i32) {
    %c0_i32 = arith.constant 0 : i32
    %c0_i32_0 = arith.constant 0 : i32
    %c0_i32_1 = arith.constant 0 : i32
    return %arg1, %c0_i32, %c0_i32_0 : i32, i32, i32
  }
  func.func @transform_2(%arg0: i32, %arg1: i32) -> (i32, i32, i32) {
    %c0_i32 = arith.constant 0 : i32
    %c0_i32_0 = arith.constant 0 : i32
    %c0_i32_1 = arith.constant 0 : i32
    %c0_i32_2 = arith.constant 0 : i32
    return %c0_i32, %c0_i32_0, %c0_i32_1 : i32, i32, i32
  }
  func.func @transform_3(%arg0: i32, %arg1: i32) -> (i32, i32, i32, i32) {
    %c0_i32 = arith.constant 0 : i32
    %c0_i32_0 = arith.constant 0 : i32
    %c0_i32_1 = arith.constant 0 : i32
    return %arg0, %arg1, %c0_i32, %c0_i32_0 : i32, i32, i32, i32
  }
}

</mosaic_0001>

<llo_original>
// kernel: tpu_custom_call.1
$region0: #{tpu_custom_call.1}
  #allocation0 [shape = 'u32[]', space=smem, size = 0x4, offset = 0x4, fixed_abs, tag = 'smem constant byte address 0x4 - core index']
  #allocation1 [shape = 'u32[144,128]{1,0:T(1,128)}', space=vmem, size = 0x12000, scoped, tag = 'internal scratch']
  %s0 = inlined_call_operand.vmem [shape: f32[4,8,8,32], index: 0, kind: input, shape index: {}]
  %s1 = inlined_call_operand.vmem [shape: f32[8,32,8], index: 1, kind: input, shape index: {}]
  %s2 = inlined_call_operand.vmem [shape: f32[8,8,32], index: 2, kind: input, shape index: {}]
  %s3 = inlined_call_operand.hbm [shape: f32[4,8,8,64], index: 3, kind: output, shape index: {}]
  %s4 = sld [smem:[#allocation0]]
  $region83: #{tpu_custom_call.1} parent=0
    _
  %s6 = ssub.s32 1, %s4
  %s7 = scalar_select 0, %s6, %s4
  $region1: #{tpu_custom_call.1} parent=0
    #allocation2 [shape = 'u8[32768]{0}', space=vmem, size = 0x8000, scoped, tag = 'input window, operand 0']
    #allocation3 [shape = 'u8[32768]{0}', space=vmem, size = 0x8000, scoped, tag = 'output window, operand 0']
    #allocation4 [shape = 's32[2]{0}', space=sflag, size = 0x8, scoped, tag = 'scoped memory for tpu_custom_call.1']
    %8 = vsyncpa [#allocation4], 0
    %s9 = scalar_lea.sflag [#allocation4], 1
    %10 = vsyncpa %s9, 0
    loop: start=0, step=1, limit=10
    $region2: #{tpu_custom_call.1} parent=1 // loop_pre_header
      _
    $region3: #{tpu_custom_call.1} parent=1 // loop_header
      %s12 = sphi 0, %s16
      %p13 = scmp.ge.s32.totalorder %s12, 10
      %s19 = sphi 0, %s31
      %s20 = sphi 0, %s27
      %s21 = sphi 0, %s19
      %s22 = sphi 0, %s20
      %s23 = sphi 0, %s21
      %s24 = sphi 0, %s22
      %s36 = sphi 0, %s38
      %s39 = sphi 0, %s36
      %s40 = sphi 0, %s39
      %s56 = sphi 0, %s40
      %s62 = sphi 0, %s64
      %s65 = sphi 0, %s62
      %s66 = sphi 0, %s65
      %s82 = sphi 0, %s66
      %s86 = sphi 0, %s86
      %s88 = sphi 0, %s86
      %s89 = sphi 0, %s88
      %s103 = sphi 0, %s89
      %s111 = sphi 0, %s113
      %s114 = sphi 0, %s111
      %s115 = sphi 0, %s114
      %s131 = sphi 0, %s115
    $region4: #{tpu_custom_call.1} parent=1 // loop_header_branch
      %15 = sbr.rel (%p13) target = $region8
    $region5: #{tpu_custom_call.1} parent=1 // loop_body
      %s17 = ssub.s32 %s12, 1
      %s18 = ssub.s32 %s12, 2
      %s25 = sadd.s32 1, %s20
      %p26 = scmp.ge.s32.totalorder %s25, 8
      %s27 = scalar_select %p26, 0, %s25
      %s28 = sadd.s32 1, %s19
      %s29 = scalar_select %p26, %s28, %s19
      %p30 = scmp.ge.s32.totalorder %s29, 1
      %s31 = scalar_select %p30, 0, %s29
      %s32 = ssub.s32 %s19, %s31
      %s33 = ssub.s32 %s20, %s27
      %s34 = sor.u32 %s32, %s33
      %p35 = scmp.eq.s32.totalorder %s34, 0
      %s37 = sadd.s32 %s36, 1
      %s38 = scalar_select %p35, %s36, %s37
      %p41 = pneg %p35
      %p42 = scmp.eq.s32.totalorder %s12, 7
      %p43 = por %p41, %p42
      %p44 = scmp.ne.s32.totalorder %s36, %s39
      %p45 = scmp.eq.s32.totalorder %s12, 0
      %p46 = por %p44, %p45
      %p47 = scmp.ne.s32.totalorder %s36, %s39
      %p48 = scmp.eq.s32.totalorder %s17, 7
      %p49 = por %p47, %p48
      %p50 = scmp.ne.s32.totalorder %s39, %s40
      %p51 = scmp.eq.s32.totalorder %s17, 0
      %p52 = por %p50, %p51
      %p53 = scmp.ne.s32.totalorder %s39, %s40
      %p54 = scmp.eq.s32.totalorder %s18, 7
      %p55 = por %p53, %p54
      %p57 = scmp.ne.s32.totalorder %s40, %s56
      %p58 = scmp.eq.s32.totalorder %s18, 0
      %p59 = por %p57, %p58
      %s60 = ssub.s32 %s20, %s27
      %p61 = scmp.eq.s32.totalorder %s60, 0
      %s63 = sadd.s32 %s62, 1
      %s64 = scalar_select %p61, %s62, %s63
      %p67 = pneg %p61
      %p68 = scmp.eq.s32.totalorder %s12, 7
      %p69 = por %p67, %p68
      %p70 = scmp.ne.s32.totalorder %s62, %s65
      %p71 = scmp.eq.s32.totalorder %s12, 0
      %p72 = por %p70, %p71
      %p73 = scmp.ne.s32.totalorder %s62, %s65
      %p74 = scmp.eq.s32.totalorder %s17, 7
      %p75 = por %p73, %p74
      %p76 = scmp.ne.s32.totalorder %s65, %s66
      %p77 = scmp.eq.s32.totalorder %s17, 0
      %p78 = por %p76, %p77
      %p79 = scmp.ne.s32.totalorder %s65, %s66
      %p80 = scmp.eq.s32.totalorder %s18, 7
      %p81 = por %p79, %p80
      %p83 = scmp.ne.s32.totalorder %s66, %s82
      %p84 = scmp.eq.s32.totalorder %s18, 0
      %p85 = por %p83, %p84
      %s87 = sadd.s32 %s86, 1
      %p90 = scmp.eq.s32.totalorder %s12, 7
      %p91 = scmp.ne.s32.totalorder %s86, %s88
      %p92 = scmp.eq.s32.totalorder %s12, 0
      %p93 = por %p91, %p92
      %p94 = scmp.ne.s32.totalorder %s86, %s88
      %p95 = scmp.eq.s32.totalorder %s17, 7
      %p96 = por %p94, %p95
      %p97 = scmp.ne.s32.totalorder %s88, %s89
      %p98 = scmp.eq.s32.totalorder %s17, 0
      %p99 = por %p97, %p98
      %p100 = scmp.ne.s32.totalorder %s88, %s89
      %p101 = scmp.eq.s32.totalorder %s18, 7
      %p102 = por %p100, %p101
      %p104 = scmp.ne.s32.totalorder %s89, %s103
      %p105 = scmp.eq.s32.totalorder %s18, 0
      %p106 = por %p104, %p105
      %s107 = ssub.s32 %s19, %s31
      %s108 = ssub.s32 %s20, %s27
      %s109 = sor.u32 %s107, %s108
      %p110 = scmp.eq.s32.totalorder %s109, 0
      %s112 = sadd.s32 %s111, 1
      %s113 = scalar_select %p110, %s111, %s112
      %p116 = pneg %p110
      %p117 = scmp.eq.s32.totalorder %s12, 7
      %p118 = por %p116, %p117
      %p119 = scmp.ne.s32.totalorder %s111, %s114
      %p120 = scmp.eq.s32.totalorder %s12, 0
      %p121 = por %p119, %p120
      %p122 = scmp.ne.s32.totalorder %s111, %s114
      %p123 = scmp.eq.s32.totalorder %s17, 7
      %p124 = por %p122, %p123
      %p125 = scmp.ne.s32.totalorder %s114, %s115
      %p126 = scmp.eq.s32.totalorder %s17, 0
      %p127 = por %p125, %p126
      %p128 = scmp.ne.s32.totalorder %s114, %s115
      %p129 = scmp.eq.s32.totalorder %s18, 7
      %p130 = por %p128, %p129
      %p132 = scmp.ne.s32.totalorder %s115, %s131
      %p133 = scmp.eq.s32.totalorder %s18, 0
      %p134 = por %p132, %p133
      %p135 = scmp.le.s32.totalorder 1, %s12
      %p136 = scmp.lt.s32.totalorder %s12, 9
      %p137 = pnand %p135, %p136
      %p138 = pneg %p137
      // Predicated region
      $region9: #{tpu_custom_call.1} parent=5 // pred_check
        _
      $region10: #{tpu_custom_call.1} parent=5 // pred_check_branch
        %140 = sbr.rel (%p137) target = $region12
      $region11: #{tpu_custom_call.1} parent=5 // pred_region
        %s141 = ssub.s32 %s12, 1
        // Predicated region
        $region13: #{tpu_custom_call.1} parent=11 // pred_check
          %p142 = pneg %p99
        $region14: #{tpu_custom_call.1} parent=11 // pred_check_branch
          %144 = sbr.rel (%p142) target = $region16
        $region15: #{tpu_custom_call.1} parent=11 // pred_region
          _
        $region16: #{tpu_custom_call.1} parent=11 // pred_fallthru
          _
      $region12: #{tpu_custom_call.1} parent=5 // pred_fallthru
        _
      %p145 = scmp.lt.s32.totalorder %s12, 8
      // Predicated region
      $region17: #{tpu_custom_call.1} parent=5 // pred_check
        %p146 = pneg %p145
      $region18: #{tpu_custom_call.1} parent=5 // pred_check_branch
        %148 = sbr.rel (%p146) target = $region20
      $region19: #{tpu_custom_call.1} parent=5 // pred_region
        // Predicated region
        $region21: #{tpu_custom_call.1} parent=19 // pred_check
          %p149 = pneg %p46
        $region22: #{tpu_custom_call.1} parent=19 // pred_check_branch
          %151 = sbr.rel (%p149) target = $region24
        $region23: #{tpu_custom_call.1} parent=19 // pred_region
          %s152 = sand.u32 %s36, 1
          %s153 = sand.u32 %s36, 1
          %s154 = smul.addr %s153, 32
          %s155 = scalar_lea.vmem [#allocation2], %s154
          %s156 = smul.u32 4, %s19
          %s157 = smul.addr %s156, 8
          %s158 = sadd.s32 %s20, %s157
          %s159 = smul.addr %s158, 8
          %s160 = scalar_lea.vmem %s0, %s159
          // Predicated region
          $region25: #{tpu_custom_call.1} parent=23 // pred_check
            _
          $region26: #{tpu_custom_call.1} parent=23 // pred_check_branch
            %162 = sbr.rel (0) target = $region28
          $region27: #{tpu_custom_call.1} parent=23 // pred_region
            // Predicated region
            $region29: #{tpu_custom_call.1} parent=27 // pred_check
              _
            $region30: #{tpu_custom_call.1} parent=27 // pred_check_branch
              %164 = sbr.rel (0) target = $region32
            $region31: #{tpu_custom_call.1} parent=27 // pred_region
              // Predicated region
              $region44: #{tpu_custom_call.1} parent=31 // pred_check
                _
              $region45: #{tpu_custom_call.1} parent=31 // pred_check_branch
                %185 = sbr.rel (0) target = $region47
              $region46: #{tpu_custom_call.1} parent=31 // pred_region
                loop: start=0, step=1, limit=1
                $region48: #{tpu_custom_call.1} parent=46 // loop_pre_header
                  _
                $region49: #{tpu_custom_call.1} parent=46 // loop_header
                  %s187 = sphi 0, %s191
                  %p188 = scmp.ge.s32.totalorder %s187, 1
                  %s192 = sphi %s160, %s160
                  %s193 = sphi %s155, %s155
                $region50: #{tpu_custom_call.1} parent=46 // loop_header_branch
                  %190 = sbr.rel (%p188) target = $region54
                $region51: #{tpu_custom_call.1} parent=46 // loop_body
                  %v194 = vld [vmem:[%s192] sm:$0xff]
                  %195 = vst [vmem:[%s193] sm:$0xff] %v194
                  %v196 = vld [vmem:[%s192 + $0x40] sm:$0xff]
                  %197 = vst [vmem:[%s193 + $0x8] sm:$0xff] %v196
                  %v198 = vld [vmem:[%s192 + $0x80] sm:$0xff]
                  %199 = vst [vmem:[%s193 + $0x10] sm:$0xff] %v198
                  %v200 = vld [vmem:[%s192 + $0xc0] sm:$0xff]
                  %201 = vst [vmem:[%s193 + $0x18] sm:$0xff] %v200
                $region52: #{tpu_custom_call.1} parent=46 // loop_footer
                  %s191 = sadd.s32 1, %s187
                $region53: #{tpu_custom_call.1} parent=46 // loop_footer_branch
                  %186 = sbr.rel target = $region49
                $region54: #{tpu_custom_call.1} parent=46 // loop_exit
                  _
              $region47: #{tpu_custom_call.1} parent=31 // pred_fallthru
                _
              // Predicated region
              $region55: #{tpu_custom_call.1} parent=31 // pred_check
                _
              $region56: #{tpu_custom_call.1} parent=31 // pred_check_branch
                %203 = sbr.rel target = $region58
              $region57: #{tpu_custom_call.1} parent=31 // pred_region
                _
              $region58: #{tpu_custom_call.1} parent=31 // pred_fallthru
                _
            $region32: #{tpu_custom_call.1} parent=27 // pred_fallthru
              _
            // Predicated region
            $region33: #{tpu_custom_call.1} parent=27 // pred_check
              _
            $region34: #{tpu_custom_call.1} parent=27 // pred_check_branch
              %166 = sbr.rel target = $region36
            $region35: #{tpu_custom_call.1} parent=27 // pred_region
              loop: start=0, step=1, limit=1
              $region37: #{tpu_custom_call.1} parent=35 // loop_pre_header
                _
              $region38: #{tpu_custom_call.1} parent=35 // loop_header
                %s169 = sphi 0, %s173
                %p170 = scmp.ge.s32.totalorder %s169, 1
                %s174 = sphi %s160, %s160
                %s175 = sphi %s155, %s155
              $region39: #{tpu_custom_call.1} parent=35 // loop_header_branch
                %172 = sbr.rel (%p170) target = $region43
              $region40: #{tpu_custom_call.1} parent=35 // loop_body
                %v176 = vld [vmem:[%s174] sm:$0xff]
                %177 = vst [vmem:[%s175] sm:$0xff] %v176
                %v178 = vld [vmem:[%s174 + $0x40] sm:$0xff]
                %179 = vst [vmem:[%s175 + $0x8] sm:$0xff] %v178
                %v180 = vld [vmem:[%s174 + $0x80] sm:$0xff]
                %181 = vst [vmem:[%s175 + $0x10] sm:$0xff] %v180
                %v182 = vld [vmem:[%s174 + $0xc0] sm:$0xff]
                %183 = vst [vmem:[%s175 + $0x18] sm:$0xff] %v182
              $region41: #{tpu_custom_call.1} parent=35 // loop_footer
                %s173 = sadd.s32 1, %s169
              $region42: #{tpu_custom_call.1} parent=35 // loop_footer_branch
                %168 = sbr.rel target = $region38
              $region43: #{tpu_custom_call.1} parent=35 // loop_exit
                _
            $region36: #{tpu_custom_call.1} parent=27 // pred_fallthru
              _
          $region28: #{tpu_custom_call.1} parent=23 // pred_fallthru
            _
          %204 = vnop
        $region24: #{tpu_custom_call.1} parent=19 // pred_fallthru
          _
        // Predicated region
        $region59: #{tpu_custom_call.1} parent=19 // pred_check
          %p205 = pneg %p72
        $region60: #{tpu_custom_call.1} parent=19 // pred_check_branch
          %207 = sbr.rel (%p205) target = $region62
        $region61: #{tpu_custom_call.1} parent=19 // pred_region
          %p208 = scmp.lt.s32.totalorder %s20, 7
          %s209 = scalar_select %p208, %s20, 7
          %s210 = smul.addr %s209, 4
          %s211 = smul.addr %s210, 8
          %s212 = scalar_lea.vmem %s1, %s211
        $region62: #{tpu_custom_call.1} parent=19 // pred_fallthru
          _
      $region20: #{tpu_custom_call.1} parent=5 // pred_fallthru
        _
      %p213 = scmp.le.s32.totalorder 1, %s12
      %p214 = scmp.lt.s32.totalorder %s12, 9
      %p215 = pnand %p213, %p214
      %p216 = pneg %p215
      // Predicated region
      $region63: #{tpu_custom_call.1} parent=5 // pred_check
        _
      $region64: #{tpu_custom_call.1} parent=5 // pred_check_branch
        %218 = sbr.rel (%p215) target = $region66
      $region65: #{tpu_custom_call.1} parent=5 // pred_region
        %s219 = ssub.s32 %s12, 1
        %s220 = sand.u32 %s39, 1
        %s221 = sand.u32 %s39, 1
        %s222 = smul.addr %s221, 32
        %s223 = scalar_lea.vmem [#allocation2], %s222
        // Predicated region
        $region67: #{tpu_custom_call.1} parent=65 // pred_check
          %p224 = pneg %p52
        $region68: #{tpu_custom_call.1} parent=65 // pred_check_branch
          %226 = sbr.rel (%p224) target = $region70
        $region69: #{tpu_custom_call.1} parent=65 // pred_region
          _
        $region70: #{tpu_custom_call.1} parent=65 // pred_fallthru
          _
        %s227 = sand.u32 %s39, 1
        %s228 = sand.u32 %s39, 1
        %s229 = smul.addr %s228, 32
        %s230 = scalar_lea.vmem [#allocation2], %s229
        %p231 = pneg %p52
        %p232 = pneg %p49
        %p233 = scmp.lt.s32.totalorder %s22, 7
        %s234 = scalar_select %p233, %s22, 7
        %s235 = smul.addr %s234, 4
        %s236 = smul.addr %s235, 8
        %s237 = scalar_lea.vmem %s1, %s236
        %p238 = pneg %p78
        %p239 = pneg %p75
        %p240 = pneg %p99
        %p241 = pneg %p96
        %p242 = pneg %p127
        %p243 = pneg %p124
        %s244 = sand.u32 %s114, 1
        %s245 = scalar_lea.sflag [#allocation4], %s244
        %s246 = sand.u32 %s114, 1
        %s247 = smul.addr %s246, 32
        %s248 = scalar_lea.vmem [#allocation3], %s247
        %s249 = smul.u32 4, %s21
        %p250 = scmp.lt.s32.totalorder %s22, 7
        %s251 = scalar_select %p250, %s22, 7
        %s252 = smul.addr %s251, 4
        %s253 = smul.addr %s252, 8
        %s254 = scalar_lea.vmem %s1, %s253
        %s255 = smul.u32 4, %s21
        %v256 = vld [vmem:[%s2] sm:$0xff]
        %v257 = vld [vmem:[%s2 + $0x8] sm:$0xff]
        %v258 = vld [vmem:[%s2 + $0x10] sm:$0xff]
        %v259 = vld [vmem:[%s2 + $0x18] sm:$0xff]
        %v260 = vld [vmem:[%s2 + $0x20] sm:$0xff]
        %v261 = vld [vmem:[%s2 + $0x28] sm:$0xff]
        %v262 = vld [vmem:[%s2 + $0x30] sm:$0xff]
        %v263 = vld [vmem:[%s2 + $0x38] sm:$0xff]
        %v264 = vld [vmem:[%s223] sm:$0xff]
        %v265 = vld [vmem:[%s223 + $0x8] sm:$0xff]
        %v266 = vld [vmem:[%s223 + $0x10] sm:$0xff]
        %v267 = vld [vmem:[%s223 + $0x18] sm:$0xff]
        %v268 = vld [vmem:[%s254] sm:$0xff]
        %v269 = vld [vmem:[%s254 + $0x8] sm:$0xff]
        %v270 = vld [vmem:[%s254 + $0x10] sm:$0xff]
        %v271 = vld [vmem:[%s254 + $0x18] sm:$0xff]
        %vm272 = vcmask 261120
        %v274 = vsel %vm272, %v264, 0
        %v277 = vsel %vm272, %v265, 0
        %v280 = vsel %vm272, %v266, 0
        %v283 = vsel %vm272, %v267, 0
        %285 = vmatprep.subr.mxu0 0.0
        %286 = vmatpush1.msra.mxu0 %v268
        %287 = vmatprep.subr.mxu0 0.0
        %288 = vmatpush1.msra.mxu0 %v269
        %289 = vmatprep.subr.mxu0 0.0
        %290 = vmatpush1.msra.mxu0 %v270
        %291 = vmatprep.subr.mxu0 0.0
        %292 = vmatpush1.msra.mxu0 %v271
        %293 = vmatprep.subr.mxu0 0.0
        %294 = vmatpush1.msra.mxu0 0.0
        %295 = vmatprep.subr.mxu0 0.0
        %296 = vmatpush1.msra.mxu0 0.0
        %297 = vmatprep.subr.mxu0 0.0
        %298 = vmatpush1.msra.mxu0 0.0
        %299 = vmatprep.subr.mxu0 0.0
        %300 = vmatpush1.msra.mxu0 0.0
        %301 = vmatprep.subr.mxu0 0.0
        %302 = vmatpush1.msra.mxu0 0.0
        %303 = vmatprep.subr.mxu0 0.0
        %304 = vmatpush1.msra.mxu0 0.0
        %305 = vmatprep.subr.mxu0 0.0
        %306 = vmatpush1.msra.mxu0 0.0
        %307 = vmatprep.subr.mxu0 0.0
        %308 = vmatpush1.msra.mxu0 0.0
        %309 = vmatprep.subr.mxu0 0.0
        %310 = vmatpush1.msra.mxu0 0.0
        %311 = vmatprep.subr.mxu0 0.0
        %312 = vmatpush1.msra.mxu0 0.0
        %313 = vmatprep.subr.mxu0 0.0
        %314 = vmatpush1.msra.mxu0 0.0
        %315 = vmatprep.subr.mxu0 0.0
        %316 = vmatpush1.msra.mxu0 0.0
        %317 = vmatprep.subr.mxu0 0.0
        %318 = vmatpush1.msra.mxu0 0.0
        %319 = vmatprep.subr.mxu0 0.0
        %320 = vmatpush1.msra.mxu0 0.0
        %321 = vmatprep.subr.mxu0 0.0
        %322 = vmatpush1.msra.mxu0 0.0
        %323 = vmatprep.subr.mxu0 0.0
        %324 = vmatpush1.msra.mxu0 0.0
        %325 = vmatprep.subr.mxu0 0.0
        %326 = vmatpush1.msra.mxu0 0.0
        %327 = vmatprep.subr.mxu0 0.0
        %328 = vmatpush1.msra.mxu0 0.0
        %329 = vmatprep.subr.mxu0 0.0
        %330 = vmatpush1.msra.mxu0 0.0
        %331 = vmatprep.subr.mxu0 0.0
        %332 = vmatpush1.msra.mxu0 0.0
        %333 = vmatprep.subr.mxu0 0.0
        %334 = vmatpush1.msra.mxu0 0.0
        %335 = vmatprep.subr.mxu0 0.0
        %336 = vmatpush1.msra.mxu0 0.0
        %337 = vmatprep.subr.mxu0 0.0
        %338 = vmatpush1.msra.mxu0 0.0
        %339 = vmatprep.subr.mxu0 0.0
        %340 = vmatpush1.msra.mxu0 0.0
        %341 = vmatprep.subr.mxu0 0.0
        %342 = vmatpush1.msra.mxu0 0.0
        %343 = vmatprep.subr.mxu0 0.0
        %344 = vmatpush1.msra.mxu0 0.0
        %345 = vmatprep.subr.mxu0 0.0
        %346 = vmatpush1.msra.mxu0 0.0
        %347 = vmatprep.subr.mxu0 0.0
        %348 = vmatpush1.msra.mxu0 0.0
        %349 = vmatprep.mubr.f32.mxu0 0.0
        %350 = vmatmul.mubr.f32.gmra.mrb[0].mxu0 %v274
        %v351 = vpop.f32.mrb[0].mxu0
        %v352 = vadd.f32 0.0, %v351
        %v353 = vpop.f32.mrb[0].mxu0
        %354 = vmatprep.mubr.f32.mxu0 0.0
        %355 = vmatmul.mubr.f32.gmra.mrb[0].mxu0 %v277
        %v356 = vpop.f32.mrb[0].mxu0
        %v357 = vadd.f32 0.0, %v356
        %v358 = vpop.f32.mrb[0].mxu0
        %359 = vmatprep.mubr.f32.mxu0 0.0
        %360 = vmatmul.mubr.f32.gmra.mrb[0].mxu0 %v280
        %v361 = vpop.f32.mrb[0].mxu0
        %v362 = vadd.f32 0.0, %v361
        %v363 = vpop.f32.mrb[0].mxu0
        %364 = vmatprep.mubr.f32.mxu0 0.0
        %365 = vmatmul.mubr.f32.gmra.mrb[0].mxu0 %v283
        %v366 = vpop.f32.mrb[0].mxu0
        %v367 = vadd.f32 0.0, %v366
        %v368 = vpop.f32.mrb[0].mxu0
        %369 = vdwg.mxu0
        %370 = vxpose.xlu0.b32.start [1/16] %v264, 128
        %371 = vxpose.xlu0.b32.cont [2/16] 0.0, 128
        %372 = vxpose.xlu0.b32.cont [3/16] 0.0, 128
        %373 = vxpose.xlu0.b32.cont [4/16] 0.0, 128
        %374 = vxpose.xlu0.b32.cont [5/16] 0.0, 128
        %375 = vxpose.xlu0.b32.cont [6/16] 0.0, 128
        %376 = vxpose.xlu0.b32.cont [7/16] 0.0, 128
        %377 = vxpose.xlu0.b32.cont [8/16] 0.0, 128
        %378 = vxpose.xlu0.b32.cont [9/16] 0.0, 128
        %379 = vxpose.xlu0.b32.cont [10/16] 0.0, 128
        %380 = vxpose.xlu0.b32.cont [11/16] 0.0, 128
        %381 = vxpose.xlu0.b32.cont [12/16] 0.0, 128
        %382 = vxpose.xlu0.b32.cont [13/16] 0.0, 128
        %383 = vxpose.xlu0.b32.cont [14/16] 0.0, 128
        %384 = vxpose.xlu0.b32.cont [15/16] 0.0, 128
        %385 = vxpose.xlu0.b32.end [16/16] 0.0, 128
        %v386 = vpop.trf.xlu0
        %v387 = vpop.trf.xlu0
        %v388 = vpop.trf.xlu0
        %v389 = vpop.trf.xlu0
        %v390 = vpop.trf.xlu0
        %v391 = vpop.trf.xlu0
        %v392 = vpop.trf.xlu0
        %v393 = vpop.trf.xlu0
        %v394 = vpop.trf.xlu0
        %v395 = vpop.trf.xlu0
        %v396 = vpop.trf.xlu0
        %v397 = vpop.trf.xlu0
        %v398 = vpop.trf.xlu0
        %v399 = vpop.trf.xlu0
        %v400 = vpop.trf.xlu0
        %v401 = vpop.trf.xlu0
        %402 = vxpose.xlu0.b32.start [1/16] %v265, 128
        %403 = vxpose.xlu0.b32.cont [2/16] 0.0, 128
        %404 = vxpose.xlu0.b32.cont [3/16] 0.0, 128
        %405 = vxpose.xlu0.b32.cont [4/16] 0.0, 128
        %406 = vxpose.xlu0.b32.cont [5/16] 0.0, 128
        %407 = vxpose.xlu0.b32.cont [6/16] 0.0, 128
        %408 = vxpose.xlu0.b32.cont [7/16] 0.0, 128
        %409 = vxpose.xlu0.b32.cont [8/16] 0.0, 128
        %410 = vxpose.xlu0.b32.cont [9/16] 0.0, 128
        %411 = vxpose.xlu0.b32.cont [10/16] 0.0, 128
        %412 = vxpose.xlu0.b32.cont [11/16] 0.0, 128
        %413 = vxpose.xlu0.b32.cont [12/16] 0.0, 128
        %414 = vxpose.xlu0.b32.cont [13/16] 0.0, 128
        %415 = vxpose.xlu0.b32.cont [14/16] 0.0, 128
        %416 = vxpose.xlu0.b32.cont [15/16] 0.0, 128
        %417 = vxpose.xlu0.b32.end [16/16] 0.0, 128
        %v418 = vpop.trf.xlu0
        %v419 = vpop.trf.xlu0
        %v420 = vpop.trf.xlu0
        %v421 = vpop.trf.xlu0
        %v422 = vpop.trf.xlu0
        %v423 = vpop.trf.xlu0
        %v424 = vpop.trf.xlu0
        %v425 = vpop.trf.xlu0
        %v426 = vpop.trf.xlu0
        %v427 = vpop.trf.xlu0
        %v428 = vpop.trf.xlu0
        %v429 = vpop.trf.xlu0
        %v430 = vpop.trf.xlu0
        %v431 = vpop.trf.xlu0
        %v432 = vpop.trf.xlu0
        %v433 = vpop.trf.xlu0
        %434 = vxpose.xlu0.b32.start [1/16] %v266, 128
        %435 = vxpose.xlu0.b32.cont [2/16] 0.0, 128
        %436 = vxpose.xlu0.b32.cont [3/16] 0.0, 128
        %437 = vxpose.xlu0.b32.cont [4/16] 0.0, 128
        %438 = vxpose.xlu0.b32.cont [5/16] 0.0, 128
        %439 = vxpose.xlu0.b32.cont [6/16] 0.0, 128
        %440 = vxpose.xlu0.b32.cont [7/16] 0.0, 128
        %441 = vxpose.xlu0.b32.cont [8/16] 0.0, 128
        %442 = vxpose.xlu0.b32.cont [9/16] 0.0, 128
        %443 = vxpose.xlu0.b32.cont [10/16] 0.0, 128
        %444 = vxpose.xlu0.b32.cont [11/16] 0.0, 128
        %445 = vxpose.xlu0.b32.cont [12/16] 0.0, 128
        %446 = vxpose.xlu0.b32.cont [13/16] 0.0, 128
        %447 = vxpose.xlu0.b32.cont [14/16] 0.0, 128
        %448 = vxpose.xlu0.b32.cont [15/16] 0.0, 128
        %449 = vxpose.xlu0.b32.end [16/16] 0.0, 128
        %v450 = vpop.trf.xlu0
        %v451 = vpop.trf.xlu0
        %v452 = vpop.trf.xlu0
        %v453 = vpop.trf.xlu0
        %v454 = vpop.trf.xlu0
        %v455 = vpop.trf.xlu0
        %v456 = vpop.trf.xlu0
        %v457 = vpop.trf.xlu0
        %v458 = vpop.trf.xlu0
        %v459 = vpop.trf.xlu0
        %v460 = vpop.trf.xlu0
        %v461 = vpop.trf.xlu0
        %v462 = vpop.trf.xlu0
        %v463 = vpop.trf.xlu0
        %v464 = vpop.trf.xlu0
        %v465 = vpop.trf.xlu0
        %466 = vxpose.xlu0.b32.start [1/16] %v267, 128
        %467 = vxpose.xlu0.b32.cont [2/16] 0.0, 128
        %468 = vxpose.xlu0.b32.cont [3/16] 0.0, 128
        %469 = vxpose.xlu0.b32.cont [4/16] 0.0, 128
        %470 = vxpose.xlu0.b32.cont [5/16] 0.0, 128
        %471 = vxpose.xlu0.b32.cont [6/16] 0.0, 128
        %472 = vxpose.xlu0.b32.cont [7/16] 0.0, 128
        %473 = vxpose.xlu0.b32.cont [8/16] 0.0, 128
        %474 = vxpose.xlu0.b32.cont [9/16] 0.0, 128
        %475 = vxpose.xlu0.b32.cont [10/16] 0.0, 128
        %476 = vxpose.xlu0.b32.cont [11/16] 0.0, 128
        %477 = vxpose.xlu0.b32.cont [12/16] 0.0, 128
        %478 = vxpose.xlu0.b32.cont [13/16] 0.0, 128
        %479 = vxpose.xlu0.b32.cont [14/16] 0.0, 128
        %480 = vxpose.xlu0.b32.cont [15/16] 0.0, 128
        %481 = vxpose.xlu0.b32.end [16/16] 0.0, 128
        %v482 = vpop.trf.xlu0
        %v483 = vpop.trf.xlu0
        %v484 = vpop.trf.xlu0
        %v485 = vpop.trf.xlu0
        %v486 = vpop.trf.xlu0
        %v487 = vpop.trf.xlu0
        %v488 = vpop.trf.xlu0
        %v489 = vpop.trf.xlu0
        %v490 = vpop.trf.xlu0
        %v491 = vpop.trf.xlu0
        %v492 = vpop.trf.xlu0
        %v493 = vpop.trf.xlu0
        %v494 = vpop.trf.xlu0
        %v495 = vpop.trf.xlu0
        %v496 = vpop.trf.xlu0
        %v497 = vpop.trf.xlu0
        %v498 = vcombine.low %v386, %v450
        %v499 = vcombine.high %v386, %v450
        %v501 = vunpack.c.l.s4 1983009808
        %v502 = vunpack.c.0.s8 %v501
        %v503 = vlaneseq
        %v504 = vshrl.u32 %v503, 7
        %v505 = vsub.s32 %v502, %v504
        %v506 = vrot.slane %v498, %v505
        %v508 = vunpack.c.l.s4 1983009808
        %v509 = vunpack.c.0.s8 %v508
        %v510 = vlaneseq
        %v511 = vshrl.u32 %v510, 7
        %v512 = vsub.s32 %v509, %v511
        %v513 = vrot.slane %v499, %v512
        %v514 = vcombine.low %v418, %v482
        %v515 = vcombine.high %v418, %v482
        %v517 = vunpack.c.l.s4 1983009808
        %v518 = vunpack.c.0.s8 %v517
        %v519 = vlaneseq
        %v520 = vshrl.u32 %v519, 7
        %v521 = vsub.s32 %v518, %v520
        %v522 = vrot.slane %v514, %v521
        %v524 = vunpack.c.l.s4 1983009808
        %v525 = vunpack.c.0.s8 %v524
        %v526 = vlaneseq
        %v527 = vshrl.u32 %v526, 7
        %v528 = vsub.s32 %v525, %v527
        %v529 = vrot.slane %v515, %v528
        %v530 = vcombine.low %v506, %v522
        %v531 = vcombine.high %v506, %v522
        %v533 = vunpack.c.l.s4 1934713408
        %v534 = vunpack.c.0.s8 %v533
        %v535 = vlaneseq
        %v536 = vshrl.u32 %v535, 7
        %v537 = vsub.s32 %v534, %v536
        %v538 = vrot.slane %v530, %v537
        %v540 = vunpack.c.l.s4 1934713408
        %v541 = vunpack.c.0.s8 %v540
        %v542 = vlaneseq
        %v543 = vshrl.u32 %v542, 7
        %v544 = vsub.s32 %v541, %v543
        %v545 = vrot.slane %v531, %v544
        %v546 = vcombine.low %v513, %v529
        %v547 = vcombine.high %v513, %v529
        %v549 = vunpack.c.l.s4 1934713408
        %v550 = vunpack.c.0.s8 %v549
        %v551 = vlaneseq
        %v552 = vshrl.u32 %v551, 7
        %v553 = vsub.s32 %v550, %v552
        %v554 = vrot.slane %v546, %v553
        %v556 = vunpack.c.l.s4 1934713408
        %v557 = vunpack.c.0.s8 %v556
        %v558 = vlaneseq
        %v559 = vshrl.u32 %v558, 7
        %v560 = vsub.s32 %v557, %v559
        %v561 = vrot.slane %v547, %v560
        %v562 = vcombine.high %v538, 0.0
        %v563 = vcombine.high %v545, 0.0
        %v564 = vcombine.high %v554, 0.0
        %v565 = vcombine.high %v561, 0.0
        %v566 = vcombine.low %v387, %v451
        %v567 = vcombine.high %v387, %v451
        %v569 = vunpack.c.l.s4 1983009808
        %v570 = vunpack.c.0.s8 %v569
        %v571 = vlaneseq
        %v572 = vshrl.u32 %v571, 7
        %v573 = vsub.s32 %v570, %v572
        %v574 = vrot.slane %v566, %v573
        %v576 = vunpack.c.l.s4 1983009808
        %v577 = vunpack.c.0.s8 %v576
        %v578 = vlaneseq
        %v579 = vshrl.u32 %v578, 7
        %v580 = vsub.s32 %v577, %v579
        %v581 = vrot.slane %v567, %v580
        %v582 = vcombine.low %v419, %v483
        %v583 = vcombine.high %v419, %v483
        %v585 = vunpack.c.l.s4 1983009808
        %v586 = vunpack.c.0.s8 %v585
        %v587 = vlaneseq
        %v588 = vshrl.u32 %v587, 7
        %v589 = vsub.s32 %v586, %v588
        %v590 = vrot.slane %v582, %v589
        %v592 = vunpack.c.l.s4 1983009808
        %v593 = vunpack.c.0.s8 %v592
        %v594 = vlaneseq
        %v595 = vshrl.u32 %v594, 7
        %v596 = vsub.s32 %v593, %v595
        %v597 = vrot.slane %v583, %v596
        %v598 = vcombine.low %v574, %v590
        %v599 = vcombine.high %v574, %v590
        %v601 = vunpack.c.l.s4 1934713408
        %v602 = vunpack.c.0.s8 %v601
        %v603 = vlaneseq
        %v604 = vshrl.u32 %v603, 7
        %v605 = vsub.s32 %v602, %v604
        %v606 = vrot.slane %v598, %v605
        %v608 = vunpack.c.l.s4 1934713408
        %v609 = vunpack.c.0.s8 %v608
        %v610 = vlaneseq
        %v611 = vshrl.u32 %v610, 7
        %v612 = vsub.s32 %v609, %v611
        %v613 = vrot.slane %v599, %v612
        %v614 = vcombine.low %v581, %v597
        %v615 = vcombine.high %v581, %v597
        %v617 = vunpack.c.l.s4 1934713408
        %v618 = vunpack.c.0.s8 %v617
        %v619 = vlaneseq
        %v620 = vshrl.u32 %v619, 7
        %v621 = vsub.s32 %v618, %v620
        %v622 = vrot.slane %v614, %v621
        %v624 = vunpack.c.l.s4 1934713408
        %v625 = vunpack.c.0.s8 %v624
        %v626 = vlaneseq
        %v627 = vshrl.u32 %v626, 7
        %v628 = vsub.s32 %v625, %v627
        %v629 = vrot.slane %v615, %v628
        %v630 = vcombine.high %v606, 0.0
        %v631 = vcombine.high %v613, 0.0
        %v632 = vcombine.high %v622, 0.0
        %v633 = vcombine.high %v629, 0.0
        %v634 = vcombine.low %v388, %v452
        %v635 = vcombine.high %v388, %v452
        %v637 = vunpack.c.l.s4 1983009808
        %v638 = vunpack.c.0.s8 %v637
        %v639 = vlaneseq
        %v640 = vshrl.u32 %v639, 7
        %v641 = vsub.s32 %v638, %v640
        %v642 = vrot.slane %v634, %v641
        %v644 = vunpack.c.l.s4 1983009808
        %v645 = vunpack.c.0.s8 %v644
        %v646 = vlaneseq
        %v647 = vshrl.u32 %v646, 7
        %v648 = vsub.s32 %v645, %v647
        %v649 = vrot.slane %v635, %v648
        %v650 = vcombine.low %v420, %v484
        %v651 = vcombine.high %v420, %v484
        %v653 = vunpack.c.l.s4 1983009808
        %v654 = vunpack.c.0.s8 %v653
        %v655 = vlaneseq
        %v656 = vshrl.u32 %v655, 7
        %v657 = vsub.s32 %v654, %v656
        %v658 = vrot.slane %v650, %v657
        %v660 = vunpack.c.l.s4 1983009808
        %v661 = vunpack.c.0.s8 %v660
        %v662 = vlaneseq
        %v663 = vshrl.u32 %v662, 7
        %v664 = vsub.s32 %v661, %v663
        %v665 = vrot.slane %v651, %v664
        %v666 = vcombine.low %v642, %v658
        %v667 = vcombine.high %v642, %v658
        %v669 = vunpack.c.l.s4 1934713408
        %v670 = vunpack.c.0.s8 %v669
        %v671 = vlaneseq
        %v672 = vshrl.u32 %v671, 7
        %v673 = vsub.s32 %v670, %v672
        %v674 = vrot.slane %v666, %v673
        %v676 = vunpack.c.l.s4 1934713408
        %v677 = vunpack.c.0.s8 %v676
        %v678 = vlaneseq
        %v679 = vshrl.u32 %v678, 7
        %v680 = vsub.s32 %v677, %v679
        %v681 = vrot.slane %v667, %v680
        %v682 = vcombine.low %v649, %v665
        %v683 = vcombine.high %v649, %v665
        %v685 = vunpack.c.l.s4 1934713408
        %v686 = vunpack.c.0.s8 %v685
        %v687 = vlaneseq
        %v688 = vshrl.u32 %v687, 7
        %v689 = vsub.s32 %v686, %v688
        %v690 = vrot.slane %v682, %v689
        %v692 = vunpack.c.l.s4 1934713408
        %v693 = vunpack.c.0.s8 %v692
        %v694 = vlaneseq
        %v695 = vshrl.u32 %v694, 7
        %v696 = vsub.s32 %v693, %v695
        %v697 = vrot.slane %v683, %v696
        %v698 = vcombine.high %v674, 0.0
        %v699 = vcombine.high %v681, 0.0
        %v700 = vcombine.high %v690, 0.0
        %v701 = vcombine.high %v697, 0.0
        %v702 = vcombine.low %v389, %v453
        %v703 = vcombine.high %v389, %v453
        %v705 = vunpack.c.l.s4 1983009808
        %v706 = vunpack.c.0.s8 %v705
        %v707 = vlaneseq
        %v708 = vshrl.u32 %v707, 7
        %v709 = vsub.s32 %v706, %v708
        %v710 = vrot.slane %v702, %v709
        %v712 = vunpack.c.l.s4 1983009808
        %v713 = vunpack.c.0.s8 %v712
        %v714 = vlaneseq
        %v715 = vshrl.u32 %v714, 7
        %v716 = vsub.s32 %v713, %v715
        %v717 = vrot.slane %v703, %v716
        %v718 = vcombine.low %v421, %v485
        %v719 = vcombine.high %v421, %v485
        %v721 = vunpack.c.l.s4 1983009808
        %v722 = vunpack.c.0.s8 %v721
        %v723 = vlaneseq
        %v724 = vshrl.u32 %v723, 7
        %v725 = vsub.s32 %v722, %v724
        %v726 = vrot.slane %v718, %v725
        %v728 = vunpack.c.l.s4 1983009808
        %v729 = vunpack.c.0.s8 %v728
        %v730 = vlaneseq
        %v731 = vshrl.u32 %v730, 7
        %v732 = vsub.s32 %v729, %v731
        %v733 = vrot.slane %v719, %v732
        %v734 = vcombine.low %v710, %v726
        %v735 = vcombine.high %v710, %v726
        %v737 = vunpack.c.l.s4 1934713408
        %v738 = vunpack.c.0.s8 %v737
        %v739 = vlaneseq
        %v740 = vshrl.u32 %v739, 7
        %v741 = vsub.s32 %v738, %v740
        %v742 = vrot.slane %v734, %v741
        %v744 = vunpack.c.l.s4 1934713408
        %v745 = vunpack.c.0.s8 %v744
        %v746 = vlaneseq
        %v747 = vshrl.u32 %v746, 7
        %v748 = vsub.s32 %v745, %v747
        %v749 = vrot.slane %v735, %v748
        %v750 = vcombine.low %v717, %v733
        %v751 = vcombine.high %v717, %v733
        %v753 = vunpack.c.l.s4 1934713408
        %v754 = vunpack.c.0.s8 %v753
        %v755 = vlaneseq
        %v756 = vshrl.u32 %v755, 7
        %v757 = vsub.s32 %v754, %v756
        %v758 = vrot.slane %v750, %v757
        %v760 = vunpack.c.l.s4 1934713408
        %v761 = vunpack.c.0.s8 %v760
        %v762 = vlaneseq
        %v763 = vshrl.u32 %v762, 7
        %v764 = vsub.s32 %v761, %v763
        %v765 = vrot.slane %v751, %v764
        %v766 = vcombine.high %v742, 0.0
        %v767 = vcombine.high %v749, 0.0
        %v768 = vcombine.high %v758, 0.0
        %v769 = vcombine.high %v765, 0.0
        %770 = vxpose.xlu0.b32.start [1/16] %v538, 128
        %771 = vxpose.xlu0.b32.cont [2/16] 0.0, 128
        %772 = vxpose.xlu0.b32.cont [3/16] 0.0, 128
        %773 = vxpose.xlu0.b32.cont [4/16] 0.0, 128
        %774 = vxpose.xlu0.b32.cont [5/16] 0.0, 128
        %775 = vxpose.xlu0.b32.cont [6/16] 0.0, 128
        %776 = vxpose.xlu0.b32.cont [7/16] 0.0, 128
        %777 = vxpose.xlu0.b32.cont [8/16] 0.0, 128
        %778 = vxpose.xlu0.b32.cont [9/16] 0.0, 128
        %779 = vxpose.xlu0.b32.cont [10/16] 0.0, 128
        %780 = vxpose.xlu0.b32.cont [11/16] 0.0, 128
        %781 = vxpose.xlu0.b32.cont [12/16] 0.0, 128
        %782 = vxpose.xlu0.b32.cont [13/16] 0.0, 128
        %783 = vxpose.xlu0.b32.cont [14/16] 0.0, 128
        %784 = vxpose.xlu0.b32.cont [15/16] 0.0, 128
        %785 = vxpose.xlu0.b32.end [16/16] 0.0, 128
        %v786 = vpop.trf.xlu0
        %v787 = vpop.trf.xlu0
        %v788 = vpop.trf.xlu0
        %v789 = vpop.trf.xlu0
        %v790 = vpop.trf.xlu0
        %v791 = vpop.trf.xlu0
        %v792 = vpop.trf.xlu0
        %v793 = vpop.trf.xlu0
        %v794 = vpop.trf.xlu0
        %v795 = vpop.trf.xlu0
        %v796 = vpop.trf.xlu0
        %v797 = vpop.trf.xlu0
        %v798 = vpop.trf.xlu0
        %v799 = vpop.trf.xlu0
        %v800 = vpop.trf.xlu0
        %v801 = vpop.trf.xlu0
        %802 = vxpose.xlu0.b32.start [1/16] %v562, 128
        %803 = vxpose.xlu0.b32.cont [2/16] 0.0, 128
        %804 = vxpose.xlu0.b32.cont [3/16] 0.0, 128
        %805 = vxpose.xlu0.b32.cont [4/16] 0.0, 128
        %806 = vxpose.xlu0.b32.cont [5/16] 0.0, 128
        %807 = vxpose.xlu0.b32.cont [6/16] 0.0, 128
        %808 = vxpose.xlu0.b32.cont [7/16] 0.0, 128
        %809 = vxpose.xlu0.b32.cont [8/16] 0.0, 128
        %810 = vxpose.xlu0.b32.cont [9/16] 0.0, 128
        %811 = vxpose.xlu0.b32.cont [10/16] 0.0, 128
        %812 = vxpose.xlu0.b32.cont [11/16] 0.0, 128
        %813 = vxpose.xlu0.b32.cont [12/16] 0.0, 128
        %814 = vxpose.xlu0.b32.cont [13/16] 0.0, 128
        %815 = vxpose.xlu0.b32.cont [14/16] 0.0, 128
        %816 = vxpose.xlu0.b32.cont [15/16] 0.0, 128
        %817 = vxpose.xlu0.b32.end [16/16] 0.0, 128
        %v818 = vpop.trf.xlu0
        %v819 = vpop.trf.xlu0
        %v820 = vpop.trf.xlu0
        %v821 = vpop.trf.xlu0
        %v822 = vpop.trf.xlu0
        %v823 = vpop.trf.xlu0
        %v824 = vpop.trf.xlu0
        %v825 = vpop.trf.xlu0
        %v826 = vpop.trf.xlu0
        %v827 = vpop.trf.xlu0
        %v828 = vpop.trf.xlu0
        %v829 = vpop.trf.xlu0
        %v830 = vpop.trf.xlu0
        %v831 = vpop.trf.xlu0
        %v832 = vpop.trf.xlu0
        %v833 = vpop.trf.xlu0
        %834 = vxpose.xlu0.b32.start [1/16] %v545, 128
        %835 = vxpose.xlu0.b32.cont [2/16] 0.0, 128
        %836 = vxpose.xlu0.b32.cont [3/16] 0.0, 128
        %837 = vxpose.xlu0.b32.cont [4/16] 0.0, 128
        %838 = vxpose.xlu0.b32.cont [5/16] 0.0, 128
        %839 = vxpose.xlu0.b32.cont [6/16] 0.0, 128
        %840 = vxpose.xlu0.b32.cont [7/16] 0.0, 128
        %841 = vxpose.xlu0.b32.cont [8/16] 0.0, 128
        %842 = vxpose.xlu0.b32.cont [9/16] 0.0, 128
        %843 = vxpose.xlu0.b32.cont [10/16] 0.0, 128
        %844 = vxpose.xlu0.b32.cont [11/16] 0.0, 128
        %845 = vxpose.xlu0.b32.cont [12/16] 0.0, 128
        %846 = vxpose.xlu0.b32.cont [13/16] 0.0, 128
        %847 = vxpose.xlu0.b32.cont [14/16] 0.0, 128
        %848 = vxpose.xlu0.b32.cont [15/16] 0.0, 128
        %849 = vxpose.xlu0.b32.end [16/16] 0.0, 128
        %v850 = vpop.trf.xlu0
        %v851 = vpop.trf.xlu0
        %v852 = vpop.trf.xlu0
        %v853 = vpop.trf.xlu0
        %v854 = vpop.trf.xlu0
        %v855 = vpop.trf.xlu0
        %v856 = vpop.trf.xlu0
        %v857 = vpop.trf.xlu0
        %v858 = vpop.trf.xlu0
        %v859 = vpop.trf.xlu0
        %v860 = vpop.trf.xlu0
        %v861 = vpop.trf.xlu0
        %v862 = vpop.trf.xlu0
        %v863 = vpop.trf.xlu0
        %v864 = vpop.trf.xlu0
        %v865 = vpop.trf.xlu0
        %866 = vxpose.xlu0.b32.start [1/16] %v563, 128
        %867 = vxpose.xlu0.b32.cont [2/16] 0.0, 128
        %868 = vxpose.xlu0.b32.cont [3/16] 0.0, 128
        %869 = vxpose.xlu0.b32.cont [4/16] 0.0, 128
        %870 = vxpose.xlu0.b32.cont [5/16] 0.0, 128
        %871 = vxpose.xlu0.b32.cont [6/16] 0.0, 128
        %872 = vxpose.xlu0.b32.cont [7/16] 0.0, 128
        %873 = vxpose.xlu0.b32.cont [8/16] 0.0, 128
        %874 = vxpose.xlu0.b32.cont [9/16] 0.0, 128
        %875 = vxpose.xlu0.b32.cont [10/16] 0.0, 128
        %876 = vxpose.xlu0.b32.cont [11/16] 0.0, 128
        %877 = vxpose.xlu0.b32.cont [12/16] 0.0, 128
        %878 = vxpose.xlu0.b32.cont [13/16] 0.0, 128
        %879 = vxpose.xlu0.b32.cont [14/16] 0.0, 128
        %880 = vxpose.xlu0.b32.cont [15/16] 0.0, 128
        %881 = vxpose.xlu0.b32.end [16/16] 0.0, 128
        %v882 = vpop.trf.xlu0
        %v883 = vpop.trf.xlu0
        %v884 = vpop.trf.xlu0
        %v885 = vpop.trf.xlu0
        %v886 = vpop.trf.xlu0
        %v887 = vpop.trf.xlu0
        %v888 = vpop.trf.xlu0
        %v889 = vpop.trf.xlu0
        %v890 = vpop.trf.xlu0
        %v891 = vpop.trf.xlu0
        %v892 = vpop.trf.xlu0
        %v893 = vpop.trf.xlu0
        %v894 = vpop.trf.xlu0
        %v895 = vpop.trf.xlu0
        %v896 = vpop.trf.xlu0
        %v897 = vpop.trf.xlu0
        %898 = vxpose.xlu0.b32.start [1/16] %v554, 128
        %899 = vxpose.xlu0.b32.cont [2/16] 0.0, 128
        %900 = vxpose.xlu0.b32.cont [3/16] 0.0, 128
        %901 = vxpose.xlu0.b32.cont [4/16] 0.0, 128
        %902 = vxpose.xlu0.b32.cont [5/16] 0.0, 128
        %903 = vxpose.xlu0.b32.cont [6/16] 0.0, 128
        %904 = vxpose.xlu0.b32.cont [7/16] 0.0, 128
        %905 = vxpose.xlu0.b32.cont [8/16] 0.0, 128
        %906 = vxpose.xlu0.b32.cont [9/16] 0.0, 128
        %907 = vxpose.xlu0.b32.cont [10/16] 0.0, 128
        %908 = vxpose.xlu0.b32.cont [11/16] 0.0, 128
        %909 = vxpose.xlu0.b32.cont [12/16] 0.0, 128
        %910 = vxpose.xlu0.b32.cont [13/16] 0.0, 128
        %911 = vxpose.xlu0.b32.cont [14/16] 0.0, 128
        %912 = vxpose.xlu0.b32.cont [15/16] 0.0, 128
        %913 = vxpose.xlu0.b32.end [16/16] 0.0, 128
        %v914 = vpop.trf.xlu0
        %v915 = vpop.trf.xlu0
        %v916 = vpop.trf.xlu0
        %v917 = vpop.trf.xlu0
        %v918 = vpop.trf.xlu0
        %v919 = vpop.trf.xlu0
        %v920 = vpop.trf.xlu0
        %v921 = vpop.trf.xlu0
        %v922 = vpop.trf.xlu0
        %v923 = vpop.trf.xlu0
        %v924 = vpop.trf.xlu0
        %v925 = vpop.trf.xlu0
        %v926 = vpop.trf.xlu0
        %v927 = vpop.trf.xlu0
        %v928 = vpop.trf.xlu0
        %v929 = vpop.trf.xlu0
        %930 = vxpose.xlu0.b32.start [1/16] %v564, 128
        %931 = vxpose.xlu0.b32.cont [2/16] 0.0, 128
        %932 = vxpose.xlu0.b32.cont [3/16] 0.0, 128
        %933 = vxpose.xlu0.b32.cont [4/16] 0.0, 128
        %934 = vxpose.xlu0.b32.cont [5/16] 0.0, 128
        %935 = vxpose.xlu0.b32.cont [6/16] 0.0, 128
        %936 = vxpose.xlu0.b32.cont [7/16] 0.0, 128
        %937 = vxpose.xlu0.b32.cont [8/16] 0.0, 128
        %938 = vxpose.xlu0.b32.cont [9/16] 0.0, 128
        %939 = vxpose.xlu0.b32.cont [10/16] 0.0, 128
        %940 = vxpose.xlu0.b32.cont [11/16] 0.0, 128
        %941 = vxpose.xlu0.b32.cont [12/16] 0.0, 128
        %942 = vxpose.xlu0.b32.cont [13/16] 0.0, 128
        %943 = vxpose.xlu0.b32.cont [14/16] 0.0, 128
        %944 = vxpose.xlu0.b32.cont [15/16] 0.0, 128
        %945 = vxpose.xlu0.b32.end [16/16] 0.0, 128
        %v946 = vpop.trf.xlu0
        %v947 = vpop.trf.xlu0
        %v948 = vpop.trf.xlu0
        %v949 = vpop.trf.xlu0
        %v950 = vpop.trf.xlu0
        %v951 = vpop.trf.xlu0
        %v952 = vpop.trf.xlu0
        %v953 = vpop.trf.xlu0
        %v954 = vpop.trf.xlu0
        %v955 = vpop.trf.xlu0
        %v956 = vpop.trf.xlu0
        %v957 = vpop.trf.xlu0
        %v958 = vpop.trf.xlu0
        %v959 = vpop.trf.xlu0
        %v960 = vpop.trf.xlu0
        %v961 = vpop.trf.xlu0
        %962 = vxpose.xlu0.b32.start [1/16] %v561, 128
        %963 = vxpose.xlu0.b32.cont [2/16] 0.0, 128
        %964 = vxpose.xlu0.b32.cont [3/16] 0.0, 128
        %965 = vxpose.xlu0.b32.cont [4/16] 0.0, 128
        %966 = vxpose.xlu0.b32.cont [5/16] 0.0, 128
        %967 = vxpose.xlu0.b32.cont [6/16] 0.0, 128
        %968 = vxpose.xlu0.b32.cont [7/16] 0.0, 128
        %969 = vxpose.xlu0.b32.cont [8/16] 0.0, 128
        %970 = vxpose.xlu0.b32.cont [9/16] 0.0, 128
        %971 = vxpose.xlu0.b32.cont [10/16] 0.0, 128
        %972 = vxpose.xlu0.b32.cont [11/16] 0.0, 128
        %973 = vxpose.xlu0.b32.cont [12/16] 0.0, 128
        %974 = vxpose.xlu0.b32.cont [13/16] 0.0, 128
        %975 = vxpose.xlu0.b32.cont [14/16] 0.0, 128
        %976 = vxpose.xlu0.b32.cont [15/16] 0.0, 128
        %977 = vxpose.xlu0.b32.end [16/16] 0.0, 128
        %v978 = vpop.trf.xlu0
        %v979 = vpop.trf.xlu0
        %v980 = vpop.trf.xlu0
        %v981 = vpop.trf.xlu0
        %v982 = vpop.trf.xlu0
        %v983 = vpop.trf.xlu0
        %v984 = vpop.trf.xlu0
        %v985 = vpop.trf.xlu0
        %v986 = vpop.trf.xlu0
        %v987 = vpop.trf.xlu0
        %v988 = vpop.trf.xlu0
        %v989 = vpop.trf.xlu0
        %v990 = vpop.trf.xlu0
        %v991 = vpop.trf.xlu0
        %v992 = vpop.trf.xlu0
        %v993 = vpop.trf.xlu0
        %994 = vxpose.xlu0.b32.start [1/16] %v565, 128
        %995 = vxpose.xlu0.b32.cont [2/16] 0.0, 128
        %996 = vxpose.xlu0.b32.cont [3/16] 0.0, 128
        %997 = vxpose.xlu0.b32.cont [4/16] 0.0, 128
        %998 = vxpose.xlu0.b32.cont [5/16] 0.0, 128
        %999 = vxpose.xlu0.b32.cont [6/16] 0.0, 128
        %1000 = vxpose.xlu0.b32.cont [7/16] 0.0, 128
        %1001 = vxpose.xlu0.b32.cont [8/16] 0.0, 128
        %1002 = vxpose.xlu0.b32.cont [9/16] 0.0, 128
        %1003 = vxpose.xlu0.b32.cont [10/16] 0.0, 128
        %1004 = vxpose.xlu0.b32.cont [11/16] 0.0, 128
        %1005 = vxpose.xlu0.b32.cont [12/16] 0.0, 128
        %1006 = vxpose.xlu0.b32.cont [13/16] 0.0, 128
        %1007 = vxpose.xlu0.b32.cont [14/16] 0.0, 128
        %1008 = vxpose.xlu0.b32.cont [15/16] 0.0, 128
        %1009 = vxpose.xlu0.b32.end [16/16] 0.0, 128
        %v1010 = vpop.trf.xlu0
        %v1011 = vpop.trf.xlu0
        %v1012 = vpop.trf.xlu0
        %v1013 = vpop.trf.xlu0
        %v1014 = vpop.trf.xlu0
        %v1015 = vpop.trf.xlu0
        %v1016 = vpop.trf.xlu0
        %v1017 = vpop.trf.xlu0
        %v1018 = vpop.trf.xlu0
        %v1019 = vpop.trf.xlu0
        %v1020 = vpop.trf.xlu0
        %v1021 = vpop.trf.xlu0
        %v1022 = vpop.trf.xlu0
        %v1023 = vpop.trf.xlu0
        %v1024 = vpop.trf.xlu0
        %v1025 = vpop.trf.xlu0
        %1026 = vxpose.xlu0.b32.start [1/16] %v606, 128
        %1027 = vxpose.xlu0.b32.cont [2/16] 0.0, 128
        %1028 = vxpose.xlu0.b32.cont [3/16] 0.0, 128
        %1029 = vxpose.xlu0.b32.cont [4/16] 0.0, 128
        %1030 = vxpose.xlu0.b32.cont [5/16] 0.0, 128
        %1031 = vxpose.xlu0.b32.cont [6/16] 0.0, 128
        %1032 = vxpose.xlu0.b32.cont [7/16] 0.0, 128
        %1033 = vxpose.xlu0.b32.cont [8/16] 0.0, 128
        %1034 = vxpose.xlu0.b32.cont [9/16] 0.0, 128
        %1035 = vxpose.xlu0.b32.cont [10/16] 0.0, 128
        %1036 = vxpose.xlu0.b32.cont [11/16] 0.0, 128
        %1037 = vxpose.xlu0.b32.cont [12/16] 0.0, 128
        %1038 = vxpose.xlu0.b32.cont [13/16] 0.0, 128
        %1039 = vxpose.xlu0.b32.cont [14/16] 0.0, 128
        %1040 = vxpose.xlu0.b32.cont [15/16] 0.0, 128
        %1041 = vxpose.xlu0.b32.end [16/16] 0.0, 128
        %v1042 = vpop.trf.xlu0
        %v1043 = vpop.trf.xlu0
        %v1044 = vpop.trf.xlu0
        %v1045 = vpop.trf.xlu0
        %v1046 = vpop.trf.xlu0
        %v1047 = vpop.trf.xlu0
        %v1048 = vpop.trf.xlu0
        %v1049 = vpop.trf.xlu0
        %v1050 = vpop.trf.xlu0
        %v1051 = vpop.trf.xlu0
        %v1052 = vpop.trf.xlu0
        %v1053 = vpop.trf.xlu0
        %v1054 = vpop.trf.xlu0
        %v1055 = vpop.trf.xlu0
        %v1056 = vpop.trf.xlu0
        %v1057 = vpop.trf.xlu0
        %1058 = vxpose.xlu0.b32.start [1/16] %v630, 128
        %1059 = vxpose.xlu0.b32.cont [2/16] 0.0, 128
        %1060 = vxpose.xlu0.b32.cont [3/16] 0.0, 128
        %1061 = vxpose.xlu0.b32.cont [4/16] 0.0, 128
        %1062 = vxpose.xlu0.b32.cont [5/16] 0.0, 128
        %1063 = vxpose.xlu0.b32.cont [6/16] 0.0, 128
        %1064 = vxpose.xlu0.b32.cont [7/16] 0.0, 128
        %1065 = vxpose.xlu0.b32.cont [8/16] 0.0, 128
        %1066 = vxpose.xlu0.b32.cont [9/16] 0.0, 128
        %1067 = vxpose.xlu0.b32.cont [10/16] 0.0, 128
        %1068 = vxpose.xlu0.b32.cont [11/16] 0.0, 128
        %1069 = vxpose.xlu0.b32.cont [12/16] 0.0, 128
        %1070 = vxpose.xlu0.b32.cont [13/16] 0.0, 128
        %1071 = vxpose.xlu0.b32.cont [14/16] 0.0, 128
        %1072 = vxpose.xlu0.b32.cont [15/16] 0.0, 128
        %1073 = vxpose.xlu0.b32.end [16/16] 0.0, 128
        %v1074 = vpop.trf.xlu0
        %v1075 = vpop.trf.xlu0
        %v1076 = vpop.trf.xlu0
        %v1077 = vpop.trf.xlu0
        %v1078 = vpop.trf.xlu0
        %v1079 = vpop.trf.xlu0
        %v1080 = vpop.trf.xlu0
        %v1081 = vpop.trf.xlu0
        %v1082 = vpop.trf.xlu0
        %v1083 = vpop.trf.xlu0
        %v1084 = vpop.trf.xlu0
        %v1085 = vpop.trf.xlu0
        %v1086 = vpop.trf.xlu0
        %v1087 = vpop.trf.xlu0
        %v1088 = vpop.trf.xlu0
        %v1089 = vpop.trf.xlu0
        %1090 = vxpose.xlu0.b32.start [1/16] %v613, 128
        %1091 = vxpose.xlu0.b32.cont [2/16] 0.0, 128
        %1092 = vxpose.xlu0.b32.cont [3/16] 0.0, 128
        %1093 = vxpose.xlu0.b32.cont [4/16] 0.0, 128
        %1094 = vxpose.xlu0.b32.cont [5/16] 0.0, 128
        %1095 = vxpose.xlu0.b32.cont [6/16] 0.0, 128
        %1096 = vxpose.xlu0.b32.cont [7/16] 0.0, 128
        %1097 = vxpose.xlu0.b32.cont [8/16] 0.0, 128
        %1098 = vxpose.xlu0.b32.cont [9/16] 0.0, 128
        %1099 = vxpose.xlu0.b32.cont [10/16] 0.0, 128
        %1100 = vxpose.xlu0.b32.cont [11/16] 0.0, 128
        %1101 = vxpose.xlu0.b32.cont [12/16] 0.0, 128
        %1102 = vxpose.xlu0.b32.cont [13/16] 0.0, 128
        %1103 = vxpose.xlu0.b32.cont [14/16] 0.0, 128
        %1104 = vxpose.xlu0.b32.cont [15/16] 0.0, 128
        %1105 = vxpose.xlu0.b32.end [16/16] 0.0, 128
        %v1106 = vpop.trf.xlu0
        %v1107 = vpop.trf.xlu0
        %v1108 = vpop.trf.xlu0
        %v1109 = vpop.trf.xlu0
        %v1110 = vpop.trf.xlu0
        %v1111 = vpop.trf.xlu0
        %v1112 = vpop.trf.xlu0
        %v1113 = vpop.trf.xlu0
        %v1114 = vpop.trf.xlu0
        %v1115 = vpop.trf.xlu0
        %v1116 = vpop.trf.xlu0
        %v1117 = vpop.trf.xlu0
        %v1118 = vpop.trf.xlu0
        %v1119 = vpop.trf.xlu0
        %v1120 = vpop.trf.xlu0
        %v1121 = vpop.trf.xlu0
        %1122 = vxpose.xlu0.b32.start [1/16] %v631, 128
        %1123 = vxpose.xlu0.b32.cont [2/16] 0.0, 128
        %1124 = vxpose.xlu0.b32.cont [3/16] 0.0, 128
        %1125 = vxpose.xlu0.b32.cont [4/16] 0.0, 128
        %1126 = vxpose.xlu0.b32.cont [5/16] 0.0, 128
        %1127 = vxpose.xlu0.b32.cont [6/16] 0.0, 128
        %1128 = vxpose.xlu0.b32.cont [7/16] 0.0, 128
        %1129 = vxpose.xlu0.b32.cont [8/16] 0.0, 128
        %1130 = vxpose.xlu0.b32.cont [9/16] 0.0, 128
        %1131 = vxpose.xlu0.b32.cont [10/16] 0.0, 128
        %1132 = vxpose.xlu0.b32.cont [11/16] 0.0, 128
        %1133 = vxpose.xlu0.b32.cont [12/16] 0.0, 128
        %1134 = vxpose.xlu0.b32.cont [13/16] 0.0, 128
        %1135 = vxpose.xlu0.b32.cont [14/16] 0.0, 128
        %1136 = vxpose.xlu0.b32.cont [15/16] 0.0, 128
        %1137 = vxpose.xlu0.b32.end [16/16] 0.0, 128
        %v1138 = vpop.trf.xlu0
        %v1139 = vpop.trf.xlu0
        %v1140 = vpop.trf.xlu0
        %v1141 = vpop.trf.xlu0
        %v1142 = vpop.trf.xlu0
        %v1143 = vpop.trf.xlu0
        %v1144 = vpop.trf.xlu0
        %v1145 = vpop.trf.xlu0
        %v1146 = vpop.trf.xlu0
        %v1147 = vpop.trf.xlu0
        %v1148 = vpop.trf.xlu0
        %v1149 = vpop.trf.xlu0
        %v1150 = vpop.trf.xlu0
        %v1151 = vpop.trf.xlu0
        %v1152 = vpop.trf.xlu0
        %v1153 = vpop.trf.xlu0
        %1154 = vxpose.xlu0.b32.start [1/16] %v622, 128
        %1155 = vxpose.xlu0.b32.cont [2/16] 0.0, 128
        %1156 = vxpose.xlu0.b32.cont [3/16] 0.0, 128
        %1157 = vxpose.xlu0.b32.cont [4/16] 0.0, 128
        %1158 = vxpose.xlu0.b32.cont [5/16] 0.0, 128
        %1159 = vxpose.xlu0.b32.cont [6/16] 0.0, 128
        %1160 = vxpose.xlu0.b32.cont [7/16] 0.0, 128
        %1161 = vxpose.xlu0.b32.cont [8/16] 0.0, 128
        %1162 = vxpose.xlu0.b32.cont [9/16] 0.0, 128
        %1163 = vxpose.xlu0.b32.cont [10/16] 0.0, 128
        %1164 = vxpose.xlu0.b32.cont [11/16] 0.0, 128
        %1165 = vxpose.xlu0.b32.cont [12/16] 0.0, 128
        %1166 = vxpose.xlu0.b32.cont [13/16] 0.0, 128
        %1167 = vxpose.xlu0.b32.cont [14/16] 0.0, 128
        %1168 = vxpose.xlu0.b32.cont [15/16] 0.0, 128
        %1169 = vxpose.xlu0.b32.end [16/16] 0.0, 128
        %v1170 = vpop.trf.xlu0
        %v1171 = vpop.trf.xlu0
        %v1172 = vpop.trf.xlu0
        %v1173 = vpop.trf.xlu0
        %v1174 = vpop.trf.xlu0
        %v1175 = vpop.trf.xlu0
        %v1176 = vpop.trf.xlu0
        %v1177 = vpop.trf.xlu0
        %v1178 = vpop.trf.xlu0
        %v1179 = vpop.trf.xlu0
        %v1180 = vpop.trf.xlu0
        %v1181 = vpop.trf.xlu0
        %v1182 = vpop.trf.xlu0
        %v1183 = vpop.trf.xlu0
        %v1184 = vpop.trf.xlu0
        %v1185 = vpop.trf.xlu0
        %1186 = vxpose.xlu0.b32.start [1/16] %v632, 128
        %1187 = vxpose.xlu0.b32.cont [2/16] 0.0, 128
        %1188 = vxpose.xlu0.b32.cont [3/16] 0.0, 128
        %1189 = vxpose.xlu0.b32.cont [4/16] 0.0, 128
        %1190 = vxpose.xlu0.b32.cont [5/16] 0.0, 128
        %1191 = vxpose.xlu0.b32.cont [6/16] 0.0, 128
        %1192 = vxpose.xlu0.b32.cont [7/16] 0.0, 128
        %1193 = vxpose.xlu0.b32.cont [8/16] 0.0, 128
        %1194 = vxpose.xlu0.b32.cont [9/16] 0.0, 128
        %1195 = vxpose.xlu0.b32.cont [10/16] 0.0, 128
        %1196 = vxpose.xlu0.b32.cont [11/16] 0.0, 128
        %1197 = vxpose.xlu0.b32.cont [12/16] 0.0, 128
        %1198 = vxpose.xlu0.b32.cont [13/16] 0.0, 128
        %1199 = vxpose.xlu0.b32.cont [14/16] 0.0, 128
        %1200 = vxpose.xlu0.b32.cont [15/16] 0.0, 128
        %1201 = vxpose.xlu0.b32.end [16/16] 0.0, 128
        %v1202 = vpop.trf.xlu0
        %v1203 = vpop.trf.xlu0
        %v1204 = vpop.trf.xlu0
        %v1205 = vpop.trf.xlu0
        %v1206 = vpop.trf.xlu0
        %v1207 = vpop.trf.xlu0
        %v1208 = vpop.trf.xlu0
        %v1209 = vpop.trf.xlu0
        %v1210 = vpop.trf.xlu0
        %v1211 = vpop.trf.xlu0
        %v1212 = vpop.trf.xlu0
        %v1213 = vpop.trf.xlu0
        %v1214 = vpop.trf.xlu0
        %v1215 = vpop.trf.xlu0
        %v1216 = vpop.trf.xlu0
        %v1217 = vpop.trf.xlu0
        %1218 = vxpose.xlu0.b32.start [1/16] %v629, 128
        %1219 = vxpose.xlu0.b32.cont [2/16] 0.0, 128
        %1220 = vxpose.xlu0.b32.cont [3/16] 0.0, 128
        %1221 = vxpose.xlu0.b32.cont [4/16] 0.0, 128
        %1222 = vxpose.xlu0.b32.cont [5/16] 0.0, 128
        %1223 = vxpose.xlu0.b32.cont [6/16] 0.0, 128
        %1224 = vxpose.xlu0.b32.cont [7/16] 0.0, 128
        %1225 = vxpose.xlu0.b32.cont [8/16] 0.0, 128
        %1226 = vxpose.xlu0.b32.cont [9/16] 0.0, 128
        %1227 = vxpose.xlu0.b32.cont [10/16] 0.0, 128
        %1228 = vxpose.xlu0.b32.cont [11/16] 0.0, 128
        %1229 = vxpose.xlu0.b32.cont [12/16] 0.0, 128
        %1230 = vxpose.xlu0.b32.cont [13/16] 0.0, 128
        %1231 = vxpose.xlu0.b32.cont [14/16] 0.0, 128
        %1232 = vxpose.xlu0.b32.cont [15/16] 0.0, 128
        %1233 = vxpose.xlu0.b32.end [16/16] 0.0, 128
        %v1234 = vpop.trf.xlu0
        %v1235 = vpop.trf.xlu0
        %v1236 = vpop.trf.xlu0
        %v1237 = vpop.trf.xlu0
        %v1238 = vpop.trf.xlu0
        %v1239 = vpop.trf.xlu0
        %v1240 = vpop.trf.xlu0
        %v1241 = vpop.trf.xlu0
        %v1242 = vpop.trf.xlu0
        %v1243 = vpop.trf.xlu0
        %v1244 = vpop.trf.xlu0
        %v1245 = vpop.trf.xlu0
        %v1246 = vpop.trf.xlu0
        %v1247 = vpop.trf.xlu0
        %v1248 = vpop.trf.xlu0
        %v1249 = vpop.trf.xlu0
        %1250 = vxpose.xlu0.b32.start [1/16] %v633, 128
        %1251 = vxpose.xlu0.b32.cont [2/16] 0.0, 128
        %1252 = vxpose.xlu0.b32.cont [3/16] 0.0, 128
        %1253 = vxpose.xlu0.b32.cont [4/16] 0.0, 128
        %1254 = vxpose.xlu0.b32.cont [5/16] 0.0, 128
        %1255 = vxpose.xlu0.b32.cont [6/16] 0.0, 128
        %1256 = vxpose.xlu0.b32.cont [7/16] 0.0, 128
        %1257 = vxpose.xlu0.b32.cont [8/16] 0.0, 128
        %1258 = vxpose.xlu0.b32.cont [9/16] 0.0, 128
        %1259 = vxpose.xlu0.b32.cont [10/16] 0.0, 128
        %1260 = vxpose.xlu0.b32.cont [11/16] 0.0, 128
        %1261 = vxpose.xlu0.b32.cont [12/16] 0.0, 128
        %1262 = vxpose.xlu0.b32.cont [13/16] 0.0, 128
        %1263 = vxpose.xlu0.b32.cont [14/16] 0.0, 128
        %1264 = vxpose.xlu0.b32.cont [15/16] 0.0, 128
        %1265 = vxpose.xlu0.b32.end [16/16] 0.0, 128
        %v1266 = vpop.trf.xlu0
        %v1267 = vpop.trf.xlu0
        %v1268 = vpop.trf.xlu0
        %v1269 = vpop.trf.xlu0
        %v1270 = vpop.trf.xlu0
        %v1271 = vpop.trf.xlu0
        %v1272 = vpop.trf.xlu0
        %v1273 = vpop.trf.xlu0
        %v1274 = vpop.trf.xlu0
        %v1275 = vpop.trf.xlu0
        %v1276 = vpop.trf.xlu0
        %v1277 = vpop.trf.xlu0
        %v1278 = vpop.trf.xlu0
        %v1279 = vpop.trf.xlu0
        %v1280 = vpop.trf.xlu0
        %v1281 = vpop.trf.xlu0
        %1282 = vxpose.xlu0.b32.start [1/16] %v674, 128
        %1283 = vxpose.xlu0.b32.cont [2/16] 0.0, 128
        %1284 = vxpose.xlu0.b32.cont [3/16] 0.0, 128
        %1285 = vxpose.xlu0.b32.cont [4/16] 0.0, 128
        %1286 = vxpose.xlu0.b32.cont [5/16] 0.0, 128
        %1287 = vxpose.xlu0.b32.cont [6/16] 0.0, 128
        %1288 = vxpose.xlu0.b32.cont [7/16] 0.0, 128
        %1289 = vxpose.xlu0.b32.cont [8/16] 0.0, 128
        %1290 = vxpose.xlu0.b32.cont [9/16] 0.0, 128
        %1291 = vxpose.xlu0.b32.cont [10/16] 0.0, 128
        %1292 = vxpose.xlu0.b32.cont [11/16] 0.0, 128
        %1293 = vxpose.xlu0.b32.cont [12/16] 0.0, 128
        %1294 = vxpose.xlu0.b32.cont [13/16] 0.0, 128
        %1295 = vxpose.xlu0.b32.cont [14/16] 0.0, 128
        %1296 = vxpose.xlu0.b32.cont [15/16] 0.0, 128
        %1297 = vxpose.xlu0.b32.end [16/16] 0.0, 128
        %v1298 = vpop.trf.xlu0
        %v1299 = vpop.trf.xlu0
        %v1300 = vpop.trf.xlu0
        %v1301 = vpop.trf.xlu0
        %v1302 = vpop.trf.xlu0
        %v1303 = vpop.trf.xlu0
        %v1304 = vpop.trf.xlu0
        %v1305 = vpop.trf.xlu0
        %v1306 = vpop.trf.xlu0
        %v1307 = vpop.trf.xlu0
        %v1308 = vpop.trf.xlu0
        %v1309 = vpop.trf.xlu0
        %v1310 = vpop.trf.xlu0
        %v1311 = vpop.trf.xlu0
        %v1312 = vpop.trf.xlu0
        %v1313 = vpop.trf.xlu0
        %1314 = vxpose.xlu0.b32.start [1/16] %v698, 128
        %1315 = vxpose.xlu0.b32.cont [2/16] 0.0, 128
        %1316 = vxpose.xlu0.b32.cont [3/16] 0.0, 128
        %1317 = vxpose.xlu0.b32.cont [4/16] 0.0, 128
        %1318 = vxpose.xlu0.b32.cont [5/16] 0.0, 128
        %1319 = vxpose.xlu0.b32.cont [6/16] 0.0, 128
        %1320 = vxpose.xlu0.b32.cont [7/16] 0.0, 128
        %1321 = vxpose.xlu0.b32.cont [8/16] 0.0, 128
        %1322 = vxpose.xlu0.b32.cont [9/16] 0.0, 128
        %1323 = vxpose.xlu0.b32.cont [10/16] 0.0, 128
        %1324 = vxpose.xlu0.b32.cont [11/16] 0.0, 128
        %1325 = vxpose.xlu0.b32.cont [12/16] 0.0, 128
        %1326 = vxpose.xlu0.b32.cont [13/16] 0.0, 128
        %1327 = vxpose.xlu0.b32.cont [14/16] 0.0, 128
        %1328 = vxpose.xlu0.b32.cont [15/16] 0.0, 128
        %1329 = vxpose.xlu0.b32.end [16/16] 0.0, 128
        %v1330 = vpop.trf.xlu0
        %v1331 = vpop.trf.xlu0
        %v1332 = vpop.trf.xlu0
        %v1333 = vpop.trf.xlu0
        %v1334 = vpop.trf.xlu0
        %v1335 = vpop.trf.xlu0
        %v1336 = vpop.trf.xlu0
        %v1337 = vpop.trf.xlu0
        %v1338 = vpop.trf.xlu0
        %v1339 = vpop.trf.xlu0
        %v1340 = vpop.trf.xlu0
        %v1341 = vpop.trf.xlu0
        %v1342 = vpop.trf.xlu0
        %v1343 = vpop.trf.xlu0
        %v1344 = vpop.trf.xlu0
        %v1345 = vpop.trf.xlu0
        %1346 = vxpose.xlu0.b32.start [1/16] %v681, 128
        %1347 = vxpose.xlu0.b32.cont [2/16] 0.0, 128
        %1348 = vxpose.xlu0.b32.cont [3/16] 0.0, 128
        %1349 = vxpose.xlu0.b32.cont [4/16] 0.0, 128
        %1350 = vxpose.xlu0.b32.cont [5/16] 0.0, 128
        %1351 = vxpose.xlu0.b32.cont [6/16] 0.0, 128
        %1352 = vxpose.xlu0.b32.cont [7/16] 0.0, 128
        %1353 = vxpose.xlu0.b32.cont [8/16] 0.0, 128
        %1354 = vxpose.xlu0.b32.cont [9/16] 0.0, 128
        %1355 = vxpose.xlu0.b32.cont [10/16] 0.0, 128
        %1356 = vxpose.xlu0.b32.cont [11/16] 0.0, 128
        %1357 = vxpose.xlu0.b32.cont [12/16] 0.0, 128
        %1358 = vxpose.xlu0.b32.cont [13/16] 0.0, 128
        %1359 = vxpose.xlu0.b32.cont [14/16] 0.0, 128
        %1360 = vxpose.xlu0.b32.cont [15/16] 0.0, 128
        %1361 = vxpose.xlu0.b32.end [16/16] 0.0, 128
        %v1362 = vpop.trf.xlu0
        %v1363 = vpop.trf.xlu0
        %v1364 = vpop.trf.xlu0
        %v1365 = vpop.trf.xlu0
        %v1366 = vpop.trf.xlu0
        %v1367 = vpop.trf.xlu0
        %v1368 = vpop.trf.xlu0
        %v1369 = vpop.trf.xlu0
        %v1370 = vpop.trf.xlu0
        %v1371 = vpop.trf.xlu0
        %v1372 = vpop.trf.xlu0
        %v1373 = vpop.trf.xlu0
        %v1374 = vpop.trf.xlu0
        %v1375 = vpop.trf.xlu0
        %v1376 = vpop.trf.xlu0
        %v1377 = vpop.trf.xlu0
        %1378 = vxpose.xlu0.b32.start [1/16] %v699, 128
        %1379 = vxpose.xlu0.b32.cont [2/16] 0.0, 128
        %1380 = vxpose.xlu0.b32.cont [3/16] 0.0, 128
        %1381 = vxpose.xlu0.b32.cont [4/16] 0.0, 128
        %1382 = vxpose.xlu0.b32.cont [5/16] 0.0, 128
        %1383 = vxpose.xlu0.b32.cont [6/16] 0.0, 128
        %1384 = vxpose.xlu0.b32.cont [7/16] 0.0, 128
        %1385 = vxpose.xlu0.b32.cont [8/16] 0.0, 128
        %1386 = vxpose.xlu0.b32.cont [9/16] 0.0, 128
        %1387 = vxpose.xlu0.b32.cont [10/16] 0.0, 128
        %1388 = vxpose.xlu0.b32.cont [11/16] 0.0, 128
        %1389 = vxpose.xlu0.b32.cont [12/16] 0.0, 128
        %1390 = vxpose.xlu0.b32.cont [13/16] 0.0, 128
        %1391 = vxpose.xlu0.b32.cont [14/16] 0.0, 128
        %1392 = vxpose.xlu0.b32.cont [15/16] 0.0, 128
        %1393 = vxpose.xlu0.b32.end [16/16] 0.0, 128
        %v1394 = vpop.trf.xlu0
        %v1395 = vpop.trf.xlu0
        %v1396 = vpop.trf.xlu0
        %v1397 = vpop.trf.xlu0
        %v1398 = vpop.trf.xlu0
        %v1399 = vpop.trf.xlu0
        %v1400 = vpop.trf.xlu0
        %v1401 = vpop.trf.xlu0
        %v1402 = vpop.trf.xlu0
        %v1403 = vpop.trf.xlu0
        %v1404 = vpop.trf.xlu0
        %v1405 = vpop.trf.xlu0
        %v1406 = vpop.trf.xlu0
        %v1407 = vpop.trf.xlu0
        %v1408 = vpop.trf.xlu0
        %v1409 = vpop.trf.xlu0
        %1410 = vxpose.xlu0.b32.start [1/16] %v690, 128
        %1411 = vxpose.xlu0.b32.cont [2/16] 0.0, 128
        %1412 = vxpose.xlu0.b32.cont [3/16] 0.0, 128
        %1413 = vxpose.xlu0.b32.cont [4/16] 0.0, 128
        %1414 = vxpose.xlu0.b32.cont [5/16] 0.0, 128
        %1415 = vxpose.xlu0.b32.cont [6/16] 0.0, 128
        %1416 = vxpose.xlu0.b32.cont [7/16] 0.0, 128
        %1417 = vxpose.xlu0.b32.cont [8/16] 0.0, 128
        %1418 = vxpose.xlu0.b32.cont [9/16] 0.0, 128
        %1419 = vxpose.xlu0.b32.cont [10/16] 0.0, 128
        %1420 = vxpose.xlu0.b32.cont [11/16] 0.0, 128
        %1421 = vxpose.xlu0.b32.cont [12/16] 0.0, 128
        %1422 = vxpose.xlu0.b32.cont [13/16] 0.0, 128
        %1423 = vxpose.xlu0.b32.cont [14/16] 0.0, 128
        %1424 = vxpose.xlu0.b32.cont [15/16] 0.0, 128
        %1425 = vxpose.xlu0.b32.end [16/16] 0.0, 128
        %v1426 = vpop.trf.xlu0
        %v1427 = vpop.trf.xlu0
        %v1428 = vpop.trf.xlu0
        %v1429 = vpop.trf.xlu0
        %v1430 = vpop.trf.xlu0
        %v1431 = vpop.trf.xlu0
        %v1432 = vpop.trf.xlu0
        %v1433 = vpop.trf.xlu0
        %v1434 = vpop.trf.xlu0
        %v1435 = vpop.trf.xlu0
        %v1436 = vpop.trf.xlu0
        %v1437 = vpop.trf.xlu0
        %v1438 = vpop.trf.xlu0
        %v1439 = vpop.trf.xlu0
        %v1440 = vpop.trf.xlu0
        %v1441 = vpop.trf.xlu0
        %1442 = vxpose.xlu0.b32.start [1/16] %v700, 128
        %1443 = vxpose.xlu0.b32.cont [2/16] 0.0, 128
        %1444 = vxpose.xlu0.b32.cont [3/16] 0.0, 128
        %1445 = vxpose.xlu0.b32.cont [4/16] 0.0, 128
        %1446 = vxpose.xlu0.b32.cont [5/16] 0.0, 128
        %1447 = vxpose.xlu0.b32.cont [6/16] 0.0, 128
        %1448 = vxpose.xlu0.b32.cont [7/16] 0.0, 128
        %1449 = vxpose.xlu0.b32.cont [8/16] 0.0, 128
        %1450 = vxpose.xlu0.b32.cont [9/16] 0.0, 128
        %1451 = vxpose.xlu0.b32.cont [10/16] 0.0, 128
        %1452 = vxpose.xlu0.b32.cont [11/16] 0.0, 128
        %1453 = vxpose.xlu0.b32.cont [12/16] 0.0, 128
        %1454 = vxpose.xlu0.b32.cont [13/16] 0.0, 128
        %1455 = vxpose.xlu0.b32.cont [14/16] 0.0, 128
        %1456 = vxpose.xlu0.b32.cont [15/16] 0.0, 128
        %1457 = vxpose.xlu0.b32.end [16/16] 0.0, 128
        %v1458 = vpop.trf.xlu0
        %v1459 = vpop.trf.xlu0
        %v1460 = vpop.trf.xlu0
        %v1461 = vpop.trf.xlu0
        %v1462 = vpop.trf.xlu0
        %v1463 = vpop.trf.xlu0
        %v1464 = vpop.trf.xlu0
        %v1465 = vpop.trf.xlu0
        %v1466 = vpop.trf.xlu0
        %v1467 = vpop.trf.xlu0
        %v1468 = vpop.trf.xlu0
        %v1469 = vpop.trf.xlu0
        %v1470 = vpop.trf.xlu0
        %v1471 = vpop.trf.xlu0
        %v1472 = vpop.trf.xlu0
        %v1473 = vpop.trf.xlu0
        %1474 = vxpose.xlu0.b32.start [1/16] %v697, 128
        %1475 = vxpose.xlu0.b32.cont [2/16] 0.0, 128
        %1476 = vxpose.xlu0.b32.cont [3/16] 0.0, 128
        %1477 = vxpose.xlu0.b32.cont [4/16] 0.0, 128
        %1478 = vxpose.xlu0.b32.cont [5/16] 0.0, 128
        %1479 = vxpose.xlu0.b32.cont [6/16] 0.0, 128
        %1480 = vxpose.xlu0.b32.cont [7/16] 0.0, 128
        %1481 = vxpose.xlu0.b32.cont [8/16] 0.0, 128
        %1482 = vxpose.xlu0.b32.cont [9/16] 0.0, 128
        %1483 = vxpose.xlu0.b32.cont [10/16] 0.0, 128
        %1484 = vxpose.xlu0.b32.cont [11/16] 0.0, 128
        %1485 = vxpose.xlu0.b32.cont [12/16] 0.0, 128
        %1486 = vxpose.xlu0.b32.cont [13/16] 0.0, 128
        %1487 = vxpose.xlu0.b32.cont [14/16] 0.0, 128
        %1488 = vxpose.xlu0.b32.cont [15/16] 0.0, 128
        %1489 = vxpose.xlu0.b32.end [16/16] 0.0, 128
        %v1490 = vpop.trf.xlu0
        %v1491 = vpop.trf.xlu0
        %v1492 = vpop.trf.xlu0
        %v1493 = vpop.trf.xlu0
        %v1494 = vpop.trf.xlu0
        %v1495 = vpop.trf.xlu0
        %v1496 = vpop.trf.xlu0
        %v1497 = vpop.trf.xlu0
        %v1498 = vpop.trf.xlu0
        %v1499 = vpop.trf.xlu0
        %v1500 = vpop.trf.xlu0
        %v1501 = vpop.trf.xlu0
        %v1502 = vpop.trf.xlu0
        %v1503 = vpop.trf.xlu0
        %v1504 = vpop.trf.xlu0
        %v1505 = vpop.trf.xlu0
        %1506 = vxpose.xlu0.b32.start [1/16] %v701, 128
        %1507 = vxpose.xlu0.b32.cont [2/16] 0.0, 128
        %1508 = vxpose.xlu0.b32.cont [3/16] 0.0, 128
        %1509 = vxpose.xlu0.b32.cont [4/16] 0.0, 128
        %1510 = vxpose.xlu0.b32.cont [5/16] 0.0, 128
        %1511 = vxpose.xlu0.b32.cont [6/16] 0.0, 128
        %1512 = vxpose.xlu0.b32.cont [7/16] 0.0, 128
        %1513 = vxpose.xlu0.b32.cont [8/16] 0.0, 128
        %1514 = vxpose.xlu0.b32.cont [9/16] 0.0, 128
        %1515 = vxpose.xlu0.b32.cont [10/16] 0.0, 128
        %1516 = vxpose.xlu0.b32.cont [11/16] 0.0, 128
        %1517 = vxpose.xlu0.b32.cont [12/16] 0.0, 128
        %1518 = vxpose.xlu0.b32.cont [13/16] 0.0, 128
        %1519 = vxpose.xlu0.b32.cont [14/16] 0.0, 128
        %1520 = vxpose.xlu0.b32.cont [15/16] 0.0, 128
        %1521 = vxpose.xlu0.b32.end [16/16] 0.0, 128
        %v1522 = vpop.trf.xlu0
        %v1523 = vpop.trf.xlu0
        %v1524 = vpop.trf.xlu0
        %v1525 = vpop.trf.xlu0
        %v1526 = vpop.trf.xlu0
        %v1527 = vpop.trf.xlu0
        %v1528 = vpop.trf.xlu0
        %v1529 = vpop.trf.xlu0
        %v1530 = vpop.trf.xlu0
        %v1531 = vpop.trf.xlu0
        %v1532 = vpop.trf.xlu0
        %v1533 = vpop.trf.xlu0
        %v1534 = vpop.trf.xlu0
        %v1535 = vpop.trf.xlu0
        %v1536 = vpop.trf.xlu0
        %v1537 = vpop.trf.xlu0
        %1538 = vxpose.xlu0.b32.start [1/16] %v742, 128
        %1539 = vxpose.xlu0.b32.cont [2/16] 0.0, 128
        %1540 = vxpose.xlu0.b32.cont [3/16] 0.0, 128
        %1541 = vxpose.xlu0.b32.cont [4/16] 0.0, 128
        %1542 = vxpose.xlu0.b32.cont [5/16] 0.0, 128
        %1543 = vxpose.xlu0.b32.cont [6/16] 0.0, 128
        %1544 = vxpose.xlu0.b32.cont [7/16] 0.0, 128
        %1545 = vxpose.xlu0.b32.cont [8/16] 0.0, 128
        %1546 = vxpose.xlu0.b32.cont [9/16] 0.0, 128
        %1547 = vxpose.xlu0.b32.cont [10/16] 0.0, 128
        %1548 = vxpose.xlu0.b32.cont [11/16] 0.0, 128
        %1549 = vxpose.xlu0.b32.cont [12/16] 0.0, 128
        %1550 = vxpose.xlu0.b32.cont [13/16] 0.0, 128
        %1551 = vxpose.xlu0.b32.cont [14/16] 0.0, 128
        %1552 = vxpose.xlu0.b32.cont [15/16] 0.0, 128
        %1553 = vxpose.xlu0.b32.end [16/16] 0.0, 128
        %v1554 = vpop.trf.xlu0
        %v1555 = vpop.trf.xlu0
        %v1556 = vpop.trf.xlu0
        %v1557 = vpop.trf.xlu0
        %v1558 = vpop.trf.xlu0
        %v1559 = vpop.trf.xlu0
        %v1560 = vpop.trf.xlu0
        %v1561 = vpop.trf.xlu0
        %v1562 = vpop.trf.xlu0
        %v1563 = vpop.trf.xlu0
        %v1564 = vpop.trf.xlu0
        %v1565 = vpop.trf.xlu0
        %v1566 = vpop.trf.xlu0
        %v1567 = vpop.trf.xlu0
        %v1568 = vpop.trf.xlu0
        %v1569 = vpop.trf.xlu0
        %1570 = vxpose.xlu0.b32.start [1/16] %v766, 128
        %1571 = vxpose.xlu0.b32.cont [2/16] 0.0, 128
        %1572 = vxpose.xlu0.b32.cont [3/16] 0.0, 128
        %1573 = vxpose.xlu0.b32.cont [4/16] 0.0, 128
        %1574 = vxpose.xlu0.b32.cont [5/16] 0.0, 128
        %1575 = vxpose.xlu0.b32.cont [6/16] 0.0, 128
        %1576 = vxpose.xlu0.b32.cont [7/16] 0.0, 128
        %1577 = vxpose.xlu0.b32.cont [8/16] 0.0, 128
        %1578 = vxpose.xlu0.b32.cont [9/16] 0.0, 128
        %1579 = vxpose.xlu0.b32.cont [10/16] 0.0, 128
        %1580 = vxpose.xlu0.b32.cont [11/16] 0.0, 128
        %1581 = vxpose.xlu0.b32.cont [12/16] 0.0, 128
        %1582 = vxpose.xlu0.b32.cont [13/16] 0.0, 128
        %1583 = vxpose.xlu0.b32.cont [14/16] 0.0, 128
        %1584 = vxpose.xlu0.b32.cont [15/16] 0.0, 128
        %1585 = vxpose.xlu0.b32.end [16/16] 0.0, 128
        %v1586 = vpop.trf.xlu0
        %v1587 = vpop.trf.xlu0
        %v1588 = vpop.trf.xlu0
        %v1589 = vpop.trf.xlu0
        %v1590 = vpop.trf.xlu0
        %v1591 = vpop.trf.xlu0
        %v1592 = vpop.trf.xlu0
        %v1593 = vpop.trf.xlu0
        %v1594 = vpop.trf.xlu0
        %v1595 = vpop.trf.xlu0
        %v1596 = vpop.trf.xlu0
        %v1597 = vpop.trf.xlu0
        %v1598 = vpop.trf.xlu0
        %v1599 = vpop.trf.xlu0
        %v1600 = vpop.trf.xlu0
        %v1601 = vpop.trf.xlu0
        %1602 = vxpose.xlu0.b32.start [1/16] %v749, 128
        %1603 = vxpose.xlu0.b32.cont [2/16] 0.0, 128
        %1604 = vxpose.xlu0.b32.cont [3/16] 0.0, 128
        %1605 = vxpose.xlu0.b32.cont [4/16] 0.0, 128
        %1606 = vxpose.xlu0.b32.cont [5/16] 0.0, 128
        %1607 = vxpose.xlu0.b32.cont [6/16] 0.0, 128
        %1608 = vxpose.xlu0.b32.cont [7/16] 0.0, 128
        %1609 = vxpose.xlu0.b32.cont [8/16] 0.0, 128
        %1610 = vxpose.xlu0.b32.cont [9/16] 0.0, 128
        %1611 = vxpose.xlu0.b32.cont [10/16] 0.0, 128
        %1612 = vxpose.xlu0.b32.cont [11/16] 0.0, 128
        %1613 = vxpose.xlu0.b32.cont [12/16] 0.0, 128
        %1614 = vxpose.xlu0.b32.cont [13/16] 0.0, 128
        %1615 = vxpose.xlu0.b32.cont [14/16] 0.0, 128
        %1616 = vxpose.xlu0.b32.cont [15/16] 0.0, 128
        %1617 = vxpose.xlu0.b32.end [16/16] 0.0, 128
        %v1618 = vpop.trf.xlu0
        %v1619 = vpop.trf.xlu0
        %v1620 = vpop.trf.xlu0
        %v1621 = vpop.trf.xlu0
        %v1622 = vpop.trf.xlu0
        %v1623 = vpop.trf.xlu0
        %v1624 = vpop.trf.xlu0
        %v1625 = vpop.trf.xlu0
        %v1626 = vpop.trf.xlu0
        %v1627 = vpop.trf.xlu0
        %v1628 = vpop.trf.xlu0
        %v1629 = vpop.trf.xlu0
        %v1630 = vpop.trf.xlu0
        %v1631 = vpop.trf.xlu0
        %v1632 = vpop.trf.xlu0
        %v1633 = vpop.trf.xlu0
        %1634 = vxpose.xlu0.b32.start [1/16] %v767, 128
        %1635 = vxpose.xlu0.b32.cont [2/16] 0.0, 128
        %1636 = vxpose.xlu0.b32.cont [3/16] 0.0, 128
        %1637 = vxpose.xlu0.b32.cont [4/16] 0.0, 128
        %1638 = vxpose.xlu0.b32.cont [5/16] 0.0, 128
        %1639 = vxpose.xlu0.b32.cont [6/16] 0.0, 128
        %1640 = vxpose.xlu0.b32.cont [7/16] 0.0, 128
        %1641 = vxpose.xlu0.b32.cont [8/16] 0.0, 128
        %1642 = vxpose.xlu0.b32.cont [9/16] 0.0, 128
        %1643 = vxpose.xlu0.b32.cont [10/16] 0.0, 128
        %1644 = vxpose.xlu0.b32.cont [11/16] 0.0, 128
        %1645 = vxpose.xlu0.b32.cont [12/16] 0.0, 128
        %1646 = vxpose.xlu0.b32.cont [13/16] 0.0, 128
        %1647 = vxpose.xlu0.b32.cont [14/16] 0.0, 128
        %1648 = vxpose.xlu0.b32.cont [15/16] 0.0, 128
        %1649 = vxpose.xlu0.b32.end [16/16] 0.0, 128
        %v1650 = vpop.trf.xlu0
        %v1651 = vpop.trf.xlu0
        %v1652 = vpop.trf.xlu0
        %v1653 = vpop.trf.xlu0
        %v1654 = vpop.trf.xlu0
        %v1655 = vpop.trf.xlu0
        %v1656 = vpop.trf.xlu0
        %v1657 = vpop.trf.xlu0
        %v1658 = vpop.trf.xlu0
        %v1659 = vpop.trf.xlu0
        %v1660 = vpop.trf.xlu0
        %v1661 = vpop.trf.xlu0
        %v1662 = vpop.trf.xlu0
        %v1663 = vpop.trf.xlu0
        %v1664 = vpop.trf.xlu0
        %v1665 = vpop.trf.xlu0
        %1666 = vxpose.xlu0.b32.start [1/16] %v758, 128
        %1667 = vxpose.xlu0.b32.cont [2/16] 0.0, 128
        %1668 = vxpose.xlu0.b32.cont [3/16] 0.0, 128
        %1669 = vxpose.xlu0.b32.cont [4/16] 0.0, 128
        %1670 = vxpose.xlu0.b32.cont [5/16] 0.0, 128
        %1671 = vxpose.xlu0.b32.cont [6/16] 0.0, 128
        %1672 = vxpose.xlu0.b32.cont [7/16] 0.0, 128
        %1673 = vxpose.xlu0.b32.cont [8/16] 0.0, 128
        %1674 = vxpose.xlu0.b32.cont [9/16] 0.0, 128
        %1675 = vxpose.xlu0.b32.cont [10/16] 0.0, 128
        %1676 = vxpose.xlu0.b32.cont [11/16] 0.0, 128
        %1677 = vxpose.xlu0.b32.cont [12/16] 0.0, 128
        %1678 = vxpose.xlu0.b32.cont [13/16] 0.0, 128
        %1679 = vxpose.xlu0.b32.cont [14/16] 0.0, 128
        %1680 = vxpose.xlu0.b32.cont [15/16] 0.0, 128
        %1681 = vxpose.xlu0.b32.end [16/16] 0.0, 128
        %v1682 = vpop.trf.xlu0
        %v1683 = vpop.trf.xlu0
        %v1684 = vpop.trf.xlu0
        %v1685 = vpop.trf.xlu0
        %v1686 = vpop.trf.xlu0
        %v1687 = vpop.trf.xlu0
        %v1688 = vpop.trf.xlu0
        %v1689 = vpop.trf.xlu0
        %v1690 = vpop.trf.xlu0
        %v1691 = vpop.trf.xlu0
        %v1692 = vpop.trf.xlu0
        %v1693 = vpop.trf.xlu0
        %v1694 = vpop.trf.xlu0
        %v1695 = vpop.trf.xlu0
        %v1696 = vpop.trf.xlu0
        %v1697 = vpop.trf.xlu0
        %1698 = vxpose.xlu0.b32.start [1/16] %v768, 128
        %1699 = vxpose.xlu0.b32.cont [2/16] 0.0, 128
        %1700 = vxpose.xlu0.b32.cont [3/16] 0.0, 128
        %1701 = vxpose.xlu0.b32.cont [4/16] 0.0, 128
        %1702 = vxpose.xlu0.b32.cont [5/16] 0.0, 128
        %1703 = vxpose.xlu0.b32.cont [6/16] 0.0, 128
        %1704 = vxpose.xlu0.b32.cont [7/16] 0.0, 128
        %1705 = vxpose.xlu0.b32.cont [8/16] 0.0, 128
        %1706 = vxpose.xlu0.b32.cont [9/16] 0.0, 128
        %1707 = vxpose.xlu0.b32.cont [10/16] 0.0, 128
        %1708 = vxpose.xlu0.b32.cont [11/16] 0.0, 128
        %1709 = vxpose.xlu0.b32.cont [12/16] 0.0, 128
        %1710 = vxpose.xlu0.b32.cont [13/16] 0.0, 128
        %1711 = vxpose.xlu0.b32.cont [14/16] 0.0, 128
        %1712 = vxpose.xlu0.b32.cont [15/16] 0.0, 128
        %1713 = vxpose.xlu0.b32.end [16/16] 0.0, 128
        %v1714 = vpop.trf.xlu0
        %v1715 = vpop.trf.xlu0
        %v1716 = vpop.trf.xlu0
        %v1717 = vpop.trf.xlu0
        %v1718 = vpop.trf.xlu0
        %v1719 = vpop.trf.xlu0
        %v1720 = vpop.trf.xlu0
        %v1721 = vpop.trf.xlu0
        %v1722 = vpop.trf.xlu0
        %v1723 = vpop.trf.xlu0
        %v1724 = vpop.trf.xlu0
        %v1725 = vpop.trf.xlu0
        %v1726 = vpop.trf.xlu0
        %v1727 = vpop.trf.xlu0
        %v1728 = vpop.trf.xlu0
        %v1729 = vpop.trf.xlu0
        %1730 = vxpose.xlu0.b32.start [1/16] %v765, 128
        %1731 = vxpose.xlu0.b32.cont [2/16] 0.0, 128
        %1732 = vxpose.xlu0.b32.cont [3/16] 0.0, 128
        %1733 = vxpose.xlu0.b32.cont [4/16] 0.0, 128
        %1734 = vxpose.xlu0.b32.cont [5/16] 0.0, 128
        %1735 = vxpose.xlu0.b32.cont [6/16] 0.0, 128
        %1736 = vxpose.xlu0.b32.cont [7/16] 0.0, 128
        %1737 = vxpose.xlu0.b32.cont [8/16] 0.0, 128
        %1738 = vxpose.xlu0.b32.cont [9/16] 0.0, 128
        %1739 = vxpose.xlu0.b32.cont [10/16] 0.0, 128
        %1740 = vxpose.xlu0.b32.cont [11/16] 0.0, 128
        %1741 = vxpose.xlu0.b32.cont [12/16] 0.0, 128
        %1742 = vxpose.xlu0.b32.cont [13/16] 0.0, 128
        %1743 = vxpose.xlu0.b32.cont [14/16] 0.0, 128
        %1744 = vxpose.xlu0.b32.cont [15/16] 0.0, 128
        %1745 = vxpose.xlu0.b32.end [16/16] 0.0, 128
        %v1746 = vpop.trf.xlu0
        %v1747 = vpop.trf.xlu0
        %v1748 = vpop.trf.xlu0
        %v1749 = vpop.trf.xlu0
        %v1750 = vpop.trf.xlu0
        %v1751 = vpop.trf.xlu0
        %v1752 = vpop.trf.xlu0
        %v1753 = vpop.trf.xlu0
        %v1754 = vpop.trf.xlu0
        %v1755 = vpop.trf.xlu0
        %v1756 = vpop.trf.xlu0
        %v1757 = vpop.trf.xlu0
        %v1758 = vpop.trf.xlu0
        %v1759 = vpop.trf.xlu0
        %v1760 = vpop.trf.xlu0
        %v1761 = vpop.trf.xlu0
        %1762 = vxpose.xlu0.b32.start [1/16] %v769, 128
        %1763 = vxpose.xlu0.b32.cont [2/16] 0.0, 128
        %1764 = vxpose.xlu0.b32.cont [3/16] 0.0, 128
        %1765 = vxpose.xlu0.b32.cont [4/16] 0.0, 128
        %1766 = vxpose.xlu0.b32.cont [5/16] 0.0, 128
        %1767 = vxpose.xlu0.b32.cont [6/16] 0.0, 128
        %1768 = vxpose.xlu0.b32.cont [7/16] 0.0, 128
        %1769 = vxpose.xlu0.b32.cont [8/16] 0.0, 128
        %1770 = vxpose.xlu0.b32.cont [9/16] 0.0, 128
        %1771 = vxpose.xlu0.b32.cont [10/16] 0.0, 128
        %1772 = vxpose.xlu0.b32.cont [11/16] 0.0, 128
        %1773 = vxpose.xlu0.b32.cont [12/16] 0.0, 128
        %1774 = vxpose.xlu0.b32.cont [13/16] 0.0, 128
        %1775 = vxpose.xlu0.b32.cont [14/16] 0.0, 128
        %1776 = vxpose.xlu0.b32.cont [15/16] 0.0, 128
        %1777 = vxpose.xlu0.b32.end [16/16] 0.0, 128
        %v1778 = vpop.trf.xlu0
        %v1779 = vpop.trf.xlu0
        %v1780 = vpop.trf.xlu0
        %v1781 = vpop.trf.xlu0
        %v1782 = vpop.trf.xlu0
        %v1783 = vpop.trf.xlu0
        %v1784 = vpop.trf.xlu0
        %v1785 = vpop.trf.xlu0
        %v1786 = vpop.trf.xlu0
        %v1787 = vpop.trf.xlu0
        %v1788 = vpop.trf.xlu0
        %v1789 = vpop.trf.xlu0
        %v1790 = vpop.trf.xlu0
        %v1791 = vpop.trf.xlu0
        %v1792 = vpop.trf.xlu0
        %v1793 = vpop.trf.xlu0
        %v1794 = vcombine.low %v786, %v850
        %v1795 = vcombine.high %v786, %v850
        %v1797 = vunpack.c.l.s4 1983009808
        %v1798 = vunpack.c.0.s8 %v1797
        %v1799 = vlaneseq
        %v1800 = vshrl.u32 %v1799, 7
        %v1801 = vsub.s32 %v1798, %v1800
        %v1802 = vrot.slane %v1794, %v1801
        %v1804 = vunpack.c.l.s4 1983009808
        %v1805 = vunpack.c.0.s8 %v1804
        %v1806 = vlaneseq
        %v1807 = vshrl.u32 %v1806, 7
        %v1808 = vsub.s32 %v1805, %v1807
        %v1809 = vrot.slane %v1795, %v1808
        %v1810 = vcombine.low %v818, %v882
        %v1811 = vcombine.high %v818, %v882
        %v1813 = vunpack.c.l.s4 1983009808
        %v1814 = vunpack.c.0.s8 %v1813
        %v1815 = vlaneseq
        %v1816 = vshrl.u32 %v1815, 7
        %v1817 = vsub.s32 %v1814, %v1816
        %v1818 = vrot.slane %v1810, %v1817
        %v1820 = vunpack.c.l.s4 1983009808
        %v1821 = vunpack.c.0.s8 %v1820
        %v1822 = vlaneseq
        %v1823 = vshrl.u32 %v1822, 7
        %v1824 = vsub.s32 %v1821, %v1823
        %v1825 = vrot.slane %v1811, %v1824
        %v1826 = vcombine.low %v914, %v978
        %v1827 = vcombine.high %v914, %v978
        %v1829 = vunpack.c.l.s4 1983009808
        %v1830 = vunpack.c.0.s8 %v1829
        %v1831 = vlaneseq
        %v1832 = vshrl.u32 %v1831, 7
        %v1833 = vsub.s32 %v1830, %v1832
        %v1834 = vrot.slane %v1826, %v1833
        %v1836 = vunpack.c.l.s4 1983009808
        %v1837 = vunpack.c.0.s8 %v1836
        %v1838 = vlaneseq
        %v1839 = vshrl.u32 %v1838, 7
        %v1840 = vsub.s32 %v1837, %v1839
        %v1841 = vrot.slane %v1827, %v1840
        %v1842 = vcombine.low %v946, %v1010
        %v1843 = vcombine.high %v946, %v1010
        %v1845 = vunpack.c.l.s4 1983009808
        %v1846 = vunpack.c.0.s8 %v1845
        %v1847 = vlaneseq
        %v1848 = vshrl.u32 %v1847, 7
        %v1849 = vsub.s32 %v1846, %v1848
        %v1850 = vrot.slane %v1842, %v1849
        %v1852 = vunpack.c.l.s4 1983009808
        %v1853 = vunpack.c.0.s8 %v1852
        %v1854 = vlaneseq
        %v1855 = vshrl.u32 %v1854, 7
        %v1856 = vsub.s32 %v1853, %v1855
        %v1857 = vrot.slane %v1843, %v1856
        %v1858 = vcombine.low %v1802, %v1818
        %v1859 = vcombine.high %v1802, %v1818
        %v1861 = vunpack.c.l.s4 1934713408
        %v1862 = vunpack.c.0.s8 %v1861
        %v1863 = vlaneseq
        %v1864 = vshrl.u32 %v1863, 7
        %v1865 = vsub.s32 %v1862, %v1864
        %v1866 = vrot.slane %v1858, %v1865
        %v1868 = vunpack.c.l.s4 1934713408
        %v1869 = vunpack.c.0.s8 %v1868
        %v1870 = vlaneseq
        %v1871 = vshrl.u32 %v1870, 7
        %v1872 = vsub.s32 %v1869, %v1871
        %v1873 = vrot.slane %v1859, %v1872
        %v1874 = vcombine.low %v1809, %v1825
        %v1875 = vcombine.high %v1809, %v1825
        %v1877 = vunpack.c.l.s4 1934713408
        %v1878 = vunpack.c.0.s8 %v1877
        %v1879 = vlaneseq
        %v1880 = vshrl.u32 %v1879, 7
        %v1881 = vsub.s32 %v1878, %v1880
        %v1882 = vrot.slane %v1874, %v1881
        %v1884 = vunpack.c.l.s4 1934713408
        %v1885 = vunpack.c.0.s8 %v1884
        %v1886 = vlaneseq
        %v1887 = vshrl.u32 %v1886, 7
        %v1888 = vsub.s32 %v1885, %v1887
        %v1889 = vrot.slane %v1875, %v1888
        %v1890 = vcombine.low %v1834, %v1850
        %v1891 = vcombine.high %v1834, %v1850
        %v1893 = vunpack.c.l.s4 1934713408
        %v1894 = vunpack.c.0.s8 %v1893
        %v1895 = vlaneseq
        %v1896 = vshrl.u32 %v1895, 7
        %v1897 = vsub.s32 %v1894, %v1896
        %v1898 = vrot.slane %v1890, %v1897
        %v1900 = vunpack.c.l.s4 1934713408
        %v1901 = vunpack.c.0.s8 %v1900
        %v1902 = vlaneseq
        %v1903 = vshrl.u32 %v1902, 7
        %v1904 = vsub.s32 %v1901, %v1903
        %v1905 = vrot.slane %v1891, %v1904
        %v1906 = vcombine.low %v1841, %v1857
        %v1907 = vcombine.high %v1841, %v1857
        %v1909 = vunpack.c.l.s4 1934713408
        %v1910 = vunpack.c.0.s8 %v1909
        %v1911 = vlaneseq
        %v1912 = vshrl.u32 %v1911, 7
        %v1913 = vsub.s32 %v1910, %v1912
        %v1914 = vrot.slane %v1906, %v1913
        %v1916 = vunpack.c.l.s4 1934713408
        %v1917 = vunpack.c.0.s8 %v1916
        %v1918 = vlaneseq
        %v1919 = vshrl.u32 %v1918, 7
        %v1920 = vsub.s32 %v1917, %v1919
        %v1921 = vrot.slane %v1907, %v1920
        %v1922 = vcombine.low %v1866, %v1898
        %v1923 = vcombine.high %v1866, %v1898
        %v1924 = vcombine.low %v1873, %v1905
        %v1925 = vcombine.high %v1873, %v1905
        %v1926 = vcombine.low %v1882, %v1914
        %v1927 = vcombine.high %v1882, %v1914
        %v1928 = vcombine.low %v1889, %v1921
        %v1929 = vcombine.high %v1889, %v1921
        %v1930 = vcombine.low %v1042, %v1106
        %v1931 = vcombine.high %v1042, %v1106
        %v1933 = vunpack.c.l.s4 1983009808
        %v1934 = vunpack.c.0.s8 %v1933
        %v1935 = vlaneseq
        %v1936 = vshrl.u32 %v1935, 7
        %v1937 = vsub.s32 %v1934, %v1936
        %v1938 = vrot.slane %v1930, %v1937
        %v1940 = vunpack.c.l.s4 1983009808
        %v1941 = vunpack.c.0.s8 %v1940
        %v1942 = vlaneseq
        %v1943 = vshrl.u32 %v1942, 7
        %v1944 = vsub.s32 %v1941, %v1943
        %v1945 = vrot.slane %v1931, %v1944
        %v1946 = vcombine.low %v1074, %v1138
        %v1947 = vcombine.high %v1074, %v1138
        %v1949 = vunpack.c.l.s4 1983009808
        %v1950 = vunpack.c.0.s8 %v1949
        %v1951 = vlaneseq
        %v1952 = vshrl.u32 %v1951, 7
        %v1953 = vsub.s32 %v1950, %v1952
        %v1954 = vrot.slane %v1946, %v1953
        %v1956 = vunpack.c.l.s4 1983009808
        %v1957 = vunpack.c.0.s8 %v1956
        %v1958 = vlaneseq
        %v1959 = vshrl.u32 %v1958, 7
        %v1960 = vsub.s32 %v1957, %v1959
        %v1961 = vrot.slane %v1947, %v1960
        %v1962 = vcombine.low %v1170, %v1234
        %v1963 = vcombine.high %v1170, %v1234
        %v1965 = vunpack.c.l.s4 1983009808
        %v1966 = vunpack.c.0.s8 %v1965
        %v1967 = vlaneseq
        %v1968 = vshrl.u32 %v1967, 7
        %v1969 = vsub.s32 %v1966, %v1968
        %v1970 = vrot.slane %v1962, %v1969
        %v1972 = vunpack.c.l.s4 1983009808
        %v1973 = vunpack.c.0.s8 %v1972
        %v1974 = vlaneseq
        %v1975 = vshrl.u32 %v1974, 7
        %v1976 = vsub.s32 %v1973, %v1975
        %v1977 = vrot.slane %v1963, %v1976
        %v1978 = vcombine.low %v1202, %v1266
        %v1979 = vcombine.high %v1202, %v1266
        %v1981 = vunpack.c.l.s4 1983009808
        %v1982 = vunpack.c.0.s8 %v1981
        %v1983 = vlaneseq
        %v1984 = vshrl.u32 %v1983, 7
        %v1985 = vsub.s32 %v1982, %v1984
        %v1986 = vrot.slane %v1978, %v1985
        %v1988 = vunpack.c.l.s4 1983009808
        %v1989 = vunpack.c.0.s8 %v1988
        %v1990 = vlaneseq
        %v1991 = vshrl.u32 %v1990, 7
        %v1992 = vsub.s32 %v1989, %v1991
        %v1993 = vrot.slane %v1979, %v1992
        %v1994 = vcombine.low %v1938, %v1954
        %v1995 = vcombine.high %v1938, %v1954
        %v1997 = vunpack.c.l.s4 1934713408
        %v1998 = vunpack.c.0.s8 %v1997
        %v1999 = vlaneseq
        %v2000 = vshrl.u32 %v1999, 7
        %v2001 = vsub.s32 %v1998, %v2000
        %v2002 = vrot.slane %v1994, %v2001
        %v2004 = vunpack.c.l.s4 1934713408
        %v2005 = vunpack.c.0.s8 %v2004
        %v2006 = vlaneseq
        %v2007 = vshrl.u32 %v2006, 7
        %v2008 = vsub.s32 %v2005, %v2007
        %v2009 = vrot.slane %v1995, %v2008
        %v2010 = vcombine.low %v1945, %v1961
        %v2011 = vcombine.high %v1945, %v1961
        %v2013 = vunpack.c.l.s4 1934713408
        %v2014 = vunpack.c.0.s8 %v2013
        %v2015 = vlaneseq
        %v2016 = vshrl.u32 %v2015, 7
        %v2017 = vsub.s32 %v2014, %v2016
        %v2018 = vrot.slane %v2010, %v2017
        %v2020 = vunpack.c.l.s4 1934713408
        %v2021 = vunpack.c.0.s8 %v2020
        %v2022 = vlaneseq
        %v2023 = vshrl.u32 %v2022, 7
        %v2024 = vsub.s32 %v2021, %v2023
        %v2025 = vrot.slane %v2011, %v2024
        %v2026 = vcombine.low %v1970, %v1986
        %v2027 = vcombine.high %v1970, %v1986
        %v2029 = vunpack.c.l.s4 1934713408
        %v2030 = vunpack.c.0.s8 %v2029
        %v2031 = vlaneseq
        %v2032 = vshrl.u32 %v2031, 7
        %v2033 = vsub.s32 %v2030, %v2032
        %v2034 = vrot.slane %v2026, %v2033
        %v2036 = vunpack.c.l.s4 1934713408
        %v2037 = vunpack.c.0.s8 %v2036
        %v2038 = vlaneseq
        %v2039 = vshrl.u32 %v2038, 7
        %v2040 = vsub.s32 %v2037, %v2039
        %v2041 = vrot.slane %v2027, %v2040
        %v2042 = vcombine.low %v1977, %v1993
        %v2043 = vcombine.high %v1977, %v1993
        %v2045 = vunpack.c.l.s4 1934713408
        %v2046 = vunpack.c.0.s8 %v2045
        %v2047 = vlaneseq
        %v2048 = vshrl.u32 %v2047, 7
        %v2049 = vsub.s32 %v2046, %v2048
        %v2050 = vrot.slane %v2042, %v2049
        %v2052 = vunpack.c.l.s4 1934713408
        %v2053 = vunpack.c.0.s8 %v2052
        %v2054 = vlaneseq
        %v2055 = vshrl.u32 %v2054, 7
        %v2056 = vsub.s32 %v2053, %v2055
        %v2057 = vrot.slane %v2043, %v2056
        %v2058 = vcombine.low %v2002, %v2034
        %v2059 = vcombine.high %v2002, %v2034
        %v2060 = vcombine.low %v2009, %v2041
        %v2061 = vcombine.high %v2009, %v2041
        %v2062 = vcombine.low %v2018, %v2050
        %v2063 = vcombine.high %v2018, %v2050
        %v2064 = vcombine.low %v2025, %v2057
        %v2065 = vcombine.high %v2025, %v2057
        %v2066 = vcombine.low %v1298, %v1362
        %v2067 = vcombine.high %v1298, %v1362
        %v2069 = vunpack.c.l.s4 1983009808
        %v2070 = vunpack.c.0.s8 %v2069
        %v2071 = vlaneseq
        %v2072 = vshrl.u32 %v2071, 7
        %v2073 = vsub.s32 %v2070, %v2072
        %v2074 = vrot.slane %v2066, %v2073
        %v2076 = vunpack.c.l.s4 1983009808
        %v2077 = vunpack.c.0.s8 %v2076
        %v2078 = vlaneseq
        %v2079 = vshrl.u32 %v2078, 7
        %v2080 = vsub.s32 %v2077, %v2079
        %v2081 = vrot.slane %v2067, %v2080
        %v2082 = vcombine.low %v1330, %v1394
        %v2083 = vcombine.high %v1330, %v1394
        %v2085 = vunpack.c.l.s4 1983009808
        %v2086 = vunpack.c.0.s8 %v2085
        %v2087 = vlaneseq
        %v2088 = vshrl.u32 %v2087, 7
        %v2089 = vsub.s32 %v2086, %v2088
        %v2090 = vrot.slane %v2082, %v2089
        %v2092 = vunpack.c.l.s4 1983009808
        %v2093 = vunpack.c.0.s8 %v2092
        %v2094 = vlaneseq
        %v2095 = vshrl.u32 %v2094, 7
        %v2096 = vsub.s32 %v2093, %v2095
        %v2097 = vrot.slane %v2083, %v2096
        %v2098 = vcombine.low %v1426, %v1490
        %v2099 = vcombine.high %v1426, %v1490
        %v2101 = vunpack.c.l.s4 1983009808
        %v2102 = vunpack.c.0.s8 %v2101
        %v2103 = vlaneseq
        %v2104 = vshrl.u32 %v2103, 7
        %v2105 = vsub.s32 %v2102, %v2104
        %v2106 = vrot.slane %v2098, %v2105
        %v2108 = vunpack.c.l.s4 1983009808
        %v2109 = vunpack.c.0.s8 %v2108
        %v2110 = vlaneseq
        %v2111 = vshrl.u32 %v2110, 7
        %v2112 = vsub.s32 %v2109, %v2111
        %v2113 = vrot.slane %v2099, %v2112
        %v2114 = vcombine.low %v1458, %v1522
        %v2115 = vcombine.high %v1458, %v1522
        %v2117 = vunpack.c.l.s4 1983009808
        %v2118 = vunpack.c.0.s8 %v2117
        %v2119 = vlaneseq
        %v2120 = vshrl.u32 %v2119, 7
        %v2121 = vsub.s32 %v2118, %v2120
        %v2122 = vrot.slane %v2114, %v2121
        %v2124 = vunpack.c.l.s4 1983009808
        %v2125 = vunpack.c.0.s8 %v2124
        %v2126 = vlaneseq
        %v2127 = vshrl.u32 %v2126, 7
        %v2128 = vsub.s32 %v2125, %v2127
        %v2129 = vrot.slane %v2115, %v2128
        %v2130 = vcombine.low %v2074, %v2090
        %v2131 = vcombine.high %v2074, %v2090
        %v2133 = vunpack.c.l.s4 1934713408
        %v2134 = vunpack.c.0.s8 %v2133
        %v2135 = vlaneseq
        %v2136 = vshrl.u32 %v2135, 7
        %v2137 = vsub.s32 %v2134, %v2136
        %v2138 = vrot.slane %v2130, %v2137
        %v2140 = vunpack.c.l.s4 1934713408
        %v2141 = vunpack.c.0.s8 %v2140
        %v2142 = vlaneseq
        %v2143 = vshrl.u32 %v2142, 7
        %v2144 = vsub.s32 %v2141, %v2143
        %v2145 = vrot.slane %v2131, %v2144
        %v2146 = vcombine.low %v2081, %v2097
        %v2147 = vcombine.high %v2081, %v2097
        %v2149 = vunpack.c.l.s4 1934713408
        %v2150 = vunpack.c.0.s8 %v2149
        %v2151 = vlaneseq
        %v2152 = vshrl.u32 %v2151, 7
        %v2153 = vsub.s32 %v2150, %v2152
        %v2154 = vrot.slane %v2146, %v2153
        %v2156 = vunpack.c.l.s4 1934713408
        %v2157 = vunpack.c.0.s8 %v2156
        %v2158 = vlaneseq
        %v2159 = vshrl.u32 %v2158, 7
        %v2160 = vsub.s32 %v2157, %v2159
        %v2161 = vrot.slane %v2147, %v2160
        %v2162 = vcombine.low %v2106, %v2122
        %v2163 = vcombine.high %v2106, %v2122
        %v2165 = vunpack.c.l.s4 1934713408
        %v2166 = vunpack.c.0.s8 %v2165
        %v2167 = vlaneseq
        %v2168 = vshrl.u32 %v2167, 7
        %v2169 = vsub.s32 %v2166, %v2168
        %v2170 = vrot.slane %v2162, %v2169
        %v2172 = vunpack.c.l.s4 1934713408
        %v2173 = vunpack.c.0.s8 %v2172
        %v2174 = vlaneseq
        %v2175 = vshrl.u32 %v2174, 7
        %v2176 = vsub.s32 %v2173, %v2175
        %v2177 = vrot.slane %v2163, %v2176
        %v2178 = vcombine.low %v2113, %v2129
        %v2179 = vcombine.high %v2113, %v2129
        %v2181 = vunpack.c.l.s4 1934713408
        %v2182 = vunpack.c.0.s8 %v2181
        %v2183 = vlaneseq
        %v2184 = vshrl.u32 %v2183, 7
        %v2185 = vsub.s32 %v2182, %v2184
        %v2186 = vrot.slane %v2178, %v2185
        %v2188 = vunpack.c.l.s4 1934713408
        %v2189 = vunpack.c.0.s8 %v2188
        %v2190 = vlaneseq
        %v2191 = vshrl.u32 %v2190, 7
        %v2192 = vsub.s32 %v2189, %v2191
        %v2193 = vrot.slane %v2179, %v2192
        %v2194 = vcombine.low %v2138, %v2170
        %v2195 = vcombine.high %v2138, %v2170
        %v2196 = vcombine.low %v2145, %v2177
        %v2197 = vcombine.high %v2145, %v2177
        %v2198 = vcombine.low %v2154, %v2186
        %v2199 = vcombine.high %v2154, %v2186
        %v2200 = vcombine.low %v2161, %v2193
        %v2201 = vcombine.high %v2161, %v2193
        %v2202 = vcombine.low %v1554, %v1618
        %v2203 = vcombine.high %v1554, %v1618
        %v2205 = vunpack.c.l.s4 1983009808
        %v2206 = vunpack.c.0.s8 %v2205
        %v2207 = vlaneseq
        %v2208 = vshrl.u32 %v2207, 7
        %v2209 = vsub.s32 %v2206, %v2208
        %v2210 = vrot.slane %v2202, %v2209
        %v2212 = vunpack.c.l.s4 1983009808
        %v2213 = vunpack.c.0.s8 %v2212
        %v2214 = vlaneseq
        %v2215 = vshrl.u32 %v2214, 7
        %v2216 = vsub.s32 %v2213, %v2215
        %v2217 = vrot.slane %v2203, %v2216
        %v2218 = vcombine.low %v1586, %v1650
        %v2219 = vcombine.high %v1586, %v1650
        %v2221 = vunpack.c.l.s4 1983009808
        %v2222 = vunpack.c.0.s8 %v2221
        %v2223 = vlaneseq
        %v2224 = vshrl.u32 %v2223, 7
        %v2225 = vsub.s32 %v2222, %v2224
        %v2226 = vrot.slane %v2218, %v2225
        %v2228 = vunpack.c.l.s4 1983009808
        %v2229 = vunpack.c.0.s8 %v2228
        %v2230 = vlaneseq
        %v2231 = vshrl.u32 %v2230, 7
        %v2232 = vsub.s32 %v2229, %v2231
        %v2233 = vrot.slane %v2219, %v2232
        %v2234 = vcombine.low %v1682, %v1746
        %v2235 = vcombine.high %v1682, %v1746
        %v2237 = vunpack.c.l.s4 1983009808
        %v2238 = vunpack.c.0.s8 %v2237
        %v2239 = vlaneseq
        %v2240 = vshrl.u32 %v2239, 7
        %v2241 = vsub.s32 %v2238, %v2240
        %v2242 = vrot.slane %v2234, %v2241
        %v2244 = vunpack.c.l.s4 1983009808
        %v2245 = vunpack.c.0.s8 %v2244
        %v2246 = vlaneseq
        %v2247 = vshrl.u32 %v2246, 7
        %v2248 = vsub.s32 %v2245, %v2247
        %v2249 = vrot.slane %v2235, %v2248
        %v2250 = vcombine.low %v1714, %v1778
        %v2251 = vcombine.high %v1714, %v1778
        %v2253 = vunpack.c.l.s4 1983009808
        %v2254 = vunpack.c.0.s8 %v2253
        %v2255 = vlaneseq
        %v2256 = vshrl.u32 %v2255, 7
        %v2257 = vsub.s32 %v2254, %v2256
        %v2258 = vrot.slane %v2250, %v2257
        %v2260 = vunpack.c.l.s4 1983009808
        %v2261 = vunpack.c.0.s8 %v2260
        %v2262 = vlaneseq
        %v2263 = vshrl.u32 %v2262, 7
        %v2264 = vsub.s32 %v2261, %v2263
        %v2265 = vrot.slane %v2251, %v2264
        %v2266 = vcombine.low %v2210, %v2226
        %v2267 = vcombine.high %v2210, %v2226
        %v2269 = vunpack.c.l.s4 1934713408
        %v2270 = vunpack.c.0.s8 %v2269
        %v2271 = vlaneseq
        %v2272 = vshrl.u32 %v2271, 7
        %v2273 = vsub.s32 %v2270, %v2272
        %v2274 = vrot.slane %v2266, %v2273
        %v2276 = vunpack.c.l.s4 1934713408
        %v2277 = vunpack.c.0.s8 %v2276
        %v2278 = vlaneseq
        %v2279 = vshrl.u32 %v2278, 7
        %v2280 = vsub.s32 %v2277, %v2279
        %v2281 = vrot.slane %v2267, %v2280
        %v2282 = vcombine.low %v2217, %v2233
        %v2283 = vcombine.high %v2217, %v2233
        %v2285 = vunpack.c.l.s4 1934713408
        %v2286 = vunpack.c.0.s8 %v2285
        %v2287 = vlaneseq
        %v2288 = vshrl.u32 %v2287, 7
        %v2289 = vsub.s32 %v2286, %v2288
        %v2290 = vrot.slane %v2282, %v2289
        %v2292 = vunpack.c.l.s4 1934713408
        %v2293 = vunpack.c.0.s8 %v2292
        %v2294 = vlaneseq
        %v2295 = vshrl.u32 %v2294, 7
        %v2296 = vsub.s32 %v2293, %v2295
        %v2297 = vrot.slane %v2283, %v2296
        %v2298 = vcombine.low %v2242, %v2258
        %v2299 = vcombine.high %v2242, %v2258
        %v2301 = vunpack.c.l.s4 1934713408
        %v2302 = vunpack.c.0.s8 %v2301
        %v2303 = vlaneseq
        %v2304 = vshrl.u32 %v2303, 7
        %v2305 = vsub.s32 %v2302, %v2304
        %v2306 = vrot.slane %v2298, %v2305
        %v2308 = vunpack.c.l.s4 1934713408
        %v2309 = vunpack.c.0.s8 %v2308
        %v2310 = vlaneseq
        %v2311 = vshrl.u32 %v2310, 7
        %v2312 = vsub.s32 %v2309, %v2311
        %v2313 = vrot.slane %v2299, %v2312
        %v2314 = vcombine.low %v2249, %v2265
        %v2315 = vcombine.high %v2249, %v2265
        %v2317 = vunpack.c.l.s4 1934713408
        %v2318 = vunpack.c.0.s8 %v2317
        %v2319 = vlaneseq
        %v2320 = vshrl.u32 %v2319, 7
        %v2321 = vsub.s32 %v2318, %v2320
        %v2322 = vrot.slane %v2314, %v2321
        %v2324 = vunpack.c.l.s4 1934713408
        %v2325 = vunpack.c.0.s8 %v2324
        %v2326 = vlaneseq
        %v2327 = vshrl.u32 %v2326, 7
        %v2328 = vsub.s32 %v2325, %v2327
        %v2329 = vrot.slane %v2315, %v2328
        %v2330 = vcombine.low %v2274, %v2306
        %v2331 = vcombine.high %v2274, %v2306
        %v2332 = vcombine.low %v2281, %v2313
        %v2333 = vcombine.high %v2281, %v2313
        %v2334 = vcombine.low %v2290, %v2322
        %v2335 = vcombine.high %v2290, %v2322
        %v2336 = vcombine.low %v2297, %v2329
        %v2337 = vcombine.high %v2297, %v2329
        %v2339 = vsel %vm272, %v256, 0
        %2341 = vmatprep.subr.mxu0 0.0
        %2342 = vmatpush1.msra.mxu0 %v1922
        %2343 = vmatprep.subr.mxu0 0.0
        %2344 = vmatpush1.msra.mxu0 %v2058
        %2345 = vmatprep.subr.mxu0 0.0
        %2346 = vmatpush1.msra.mxu0 %v2194
        %2347 = vmatprep.subr.mxu0 0.0
        %2348 = vmatpush1.msra.mxu0 %v2330
        %2349 = vmatprep.subr.mxu0 0.0
        %2350 = vmatpush1.msra.mxu0 0.0
        %2351 = vmatprep.subr.mxu0 0.0
        %2352 = vmatpush1.msra.mxu0 0.0
        %2353 = vmatprep.subr.mxu0 0.0
        %2354 = vmatpush1.msra.mxu0 0.0
        %2355 = vmatprep.subr.mxu0 0.0
        %2356 = vmatpush1.msra.mxu0 0.0
        %2357 = vmatprep.subr.mxu0 0.0
        %2358 = vmatpush1.msra.mxu0 0.0
        %2359 = vmatprep.subr.mxu0 0.0
        %2360 = vmatpush1.msra.mxu0 0.0
        %2361 = vmatprep.subr.mxu0 0.0
        %2362 = vmatpush1.msra.mxu0 0.0
        %2363 = vmatprep.subr.mxu0 0.0
        %2364 = vmatpush1.msra.mxu0 0.0
        %2365 = vmatprep.subr.mxu0 0.0
        %2366 = vmatpush1.msra.mxu0 0.0
        %2367 = vmatprep.subr.mxu0 0.0
        %2368 = vmatpush1.msra.mxu0 0.0
        %2369 = vmatprep.subr.mxu0 0.0
        %2370 = vmatpush1.msra.mxu0 0.0
        %2371 = vmatprep.subr.mxu0 0.0
        %2372 = vmatpush1.msra.mxu0 0.0
        %2373 = vmatprep.subr.mxu0 0.0
        %2374 = vmatpush1.msra.mxu0 0.0
        %2375 = vmatprep.subr.mxu0 0.0
        %2376 = vmatpush1.msra.mxu0 0.0
        %2377 = vmatprep.subr.mxu0 0.0
        %2378 = vmatpush1.msra.mxu0 0.0
        %2379 = vmatprep.subr.mxu0 0.0
        %2380 = vmatpush1.msra.mxu0 0.0
        %2381 = vmatprep.subr.mxu0 0.0
        %2382 = vmatpush1.msra.mxu0 0.0
        %2383 = vmatprep.subr.mxu0 0.0
        %2384 = vmatpush1.msra.mxu0 0.0
        %2385 = vmatprep.subr.mxu0 0.0
        %2386 = vmatpush1.msra.mxu0 0.0
        %2387 = vmatprep.subr.mxu0 0.0
        %2388 = vmatpush1.msra.mxu0 0.0
        %2389 = vmatprep.subr.mxu0 0.0
        %2390 = vmatpush1.msra.mxu0 0.0
        %2391 = vmatprep.subr.mxu0 0.0
        %2392 = vmatpush1.msra.mxu0 0.0
        %2393 = vmatprep.subr.mxu0 0.0
        %2394 = vmatpush1.msra.mxu0 0.0
        %2395 = vmatprep.subr.mxu0 0.0
        %2396 = vmatpush1.msra.mxu0 0.0
        %2397 = vmatprep.subr.mxu0 0.0
        %2398 = vmatpush1.msra.mxu0 0.0
        %2399 = vmatprep.subr.mxu0 0.0
        %2400 = vmatpush1.msra.mxu0 0.0
        %2401 = vmatprep.subr.mxu0 0.0
        %2402 = vmatpush1.msra.mxu0 0.0
        %2403 = vmatprep.subr.mxu0 0.0
        %2404 = vmatpush1.msra.mxu0 0.0
        %2405 = vmatprep.mubr.f32.mxu0 0.0
        %2406 = vmatmul.mubr.f32.gmra.mrb[0].mxu0 %v2339
        %v2407 = vpop.f32.mrb[0].mxu0
        %v2408 = vadd.f32 0.0, %v2407
        %v2409 = vpop.f32.mrb[0].mxu0
        %2410 = vdwg.mxu0
        %v2412 = vsel %vm272, %v257, 0
        %2414 = vmatprep.subr.mxu0 0.0
        %2415 = vmatpush1.msra.mxu0 %v1923
        %2416 = vmatprep.subr.mxu0 0.0
        %2417 = vmatpush1.msra.mxu0 %v2059
        %2418 = vmatprep.subr.mxu0 0.0
        %2419 = vmatpush1.msra.mxu0 %v2195
        %2420 = vmatprep.subr.mxu0 0.0
        %2421 = vmatpush1.msra.mxu0 %v2331
        %2422 = vmatprep.subr.mxu0 0.0
        %2423 = vmatpush1.msra.mxu0 0.0
        %2424 = vmatprep.subr.mxu0 0.0
        %2425 = vmatpush1.msra.mxu0 0.0
        %2426 = vmatprep.subr.mxu0 0.0
        %2427 = vmatpush1.msra.mxu0 0.0
        %2428 = vmatprep.subr.mxu0 0.0
        %2429 = vmatpush1.msra.mxu0 0.0
        %2430 = vmatprep.subr.mxu0 0.0
        %2431 = vmatpush1.msra.mxu0 0.0
        %2432 = vmatprep.subr.mxu0 0.0
        %2433 = vmatpush1.msra.mxu0 0.0
        %2434 = vmatprep.subr.mxu0 0.0
        %2435 = vmatpush1.msra.mxu0 0.0
        %2436 = vmatprep.subr.mxu0 0.0
        %2437 = vmatpush1.msra.mxu0 0.0
        %2438 = vmatprep.subr.mxu0 0.0
        %2439 = vmatpush1.msra.mxu0 0.0
        %2440 = vmatprep.subr.mxu0 0.0
        %2441 = vmatpush1.msra.mxu0 0.0
        %2442 = vmatprep.subr.mxu0 0.0
        %2443 = vmatpush1.msra.mxu0 0.0
        %2444 = vmatprep.subr.mxu0 0.0
        %2445 = vmatpush1.msra.mxu0 0.0
        %2446 = vmatprep.subr.mxu0 0.0
        %2447 = vmatpush1.msra.mxu0 0.0
        %2448 = vmatprep.subr.mxu0 0.0
        %2449 = vmatpush1.msra.mxu0 0.0
        %2450 = vmatprep.subr.mxu0 0.0
        %2451 = vmatpush1.msra.mxu0 0.0
        %2452 = vmatprep.subr.mxu0 0.0
        %2453 = vmatpush1.msra.mxu0 0.0
        %2454 = vmatprep.subr.mxu0 0.0
        %2455 = vmatpush1.msra.mxu0 0.0
        %2456 = vmatprep.subr.mxu0 0.0
        %2457 = vmatpush1.msra.mxu0 0.0
        %2458 = vmatprep.subr.mxu0 0.0
        %2459 = vmatpush1.msra.mxu0 0.0
        %2460 = vmatprep.subr.mxu0 0.0
        %2461 = vmatpush1.msra.mxu0 0.0
        %2462 = vmatprep.subr.mxu0 0.0
        %2463 = vmatpush1.msra.mxu0 0.0
        %2464 = vmatprep.subr.mxu0 0.0
        %2465 = vmatpush1.msra.mxu0 0.0
        %2466 = vmatprep.subr.mxu0 0.0
        %2467 = vmatpush1.msra.mxu0 0.0
        %2468 = vmatprep.subr.mxu0 0.0
        %2469 = vmatpush1.msra.mxu0 0.0
        %2470 = vmatprep.subr.mxu0 0.0
        %2471 = vmatpush1.msra.mxu0 0.0
        %2472 = vmatprep.subr.mxu0 0.0
        %2473 = vmatpush1.msra.mxu0 0.0
        %2474 = vmatprep.subr.mxu0 0.0
        %2475 = vmatpush1.msra.mxu0 0.0
        %2476 = vmatprep.subr.mxu0 0.0
        %2477 = vmatpush1.msra.mxu0 0.0
        %2478 = vmatprep.mubr.f32.mxu0 0.0
        %2479 = vmatmul.mubr.f32.gmra.mrb[0].mxu0 %v2412
        %v2480 = vpop.f32.mrb[0].mxu0
        %v2481 = vadd.f32 0.0, %v2480
        %v2482 = vpop.f32.mrb[0].mxu0
        %2483 = vdwg.mxu0
        %v2485 = vsel %vm272, %v258, 0
        %2487 = vmatprep.subr.mxu0 0.0
        %2488 = vmatpush1.msra.mxu0 %v1924
        %2489 = vmatprep.subr.mxu0 0.0
        %2490 = vmatpush1.msra.mxu0 %v2060
        %2491 = vmatprep.subr.mxu0 0.0
        %2492 = vmatpush1.msra.mxu0 %v2196
        %2493 = vmatprep.subr.mxu0 0.0
        %2494 = vmatpush1.msra.mxu0 %v2332
        %2495 = vmatprep.subr.mxu0 0.0
        %2496 = vmatpush1.msra.mxu0 0.0
        %2497 = vmatprep.subr.mxu0 0.0
        %2498 = vmatpush1.msra.mxu0 0.0
        %2499 = vmatprep.subr.mxu0 0.0
        %2500 = vmatpush1.msra.mxu0 0.0
        %2501 = vmatprep.subr.mxu0 0.0
        %2502 = vmatpush1.msra.mxu0 0.0
        %2503 = vmatprep.subr.mxu0 0.0
        %2504 = vmatpush1.msra.mxu0 0.0
        %2505 = vmatprep.subr.mxu0 0.0
        %2506 = vmatpush1.msra.mxu0 0.0
        %2507 = vmatprep.subr.mxu0 0.0
        %2508 = vmatpush1.msra.mxu0 0.0
        %2509 = vmatprep.subr.mxu0 0.0
        %2510 = vmatpush1.msra.mxu0 0.0
        %2511 = vmatprep.subr.mxu0 0.0
        %2512 = vmatpush1.msra.mxu0 0.0
        %2513 = vmatprep.subr.mxu0 0.0
        %2514 = vmatpush1.msra.mxu0 0.0
        %2515 = vmatprep.subr.mxu0 0.0
        %2516 = vmatpush1.msra.mxu0 0.0
        %2517 = vmatprep.subr.mxu0 0.0
        %2518 = vmatpush1.msra.mxu0 0.0
        %2519 = vmatprep.subr.mxu0 0.0
        %2520 = vmatpush1.msra.mxu0 0.0
        %2521 = vmatprep.subr.mxu0 0.0
        %2522 = vmatpush1.msra.mxu0 0.0
        %2523 = vmatprep.subr.mxu0 0.0
        %2524 = vmatpush1.msra.mxu0 0.0
        %2525 = vmatprep.subr.mxu0 0.0
        %2526 = vmatpush1.msra.mxu0 0.0
        %2527 = vmatprep.subr.mxu0 0.0
        %2528 = vmatpush1.msra.mxu0 0.0
        %2529 = vmatprep.subr.mxu0 0.0
        %2530 = vmatpush1.msra.mxu0 0.0
        %2531 = vmatprep.subr.mxu0 0.0
        %2532 = vmatpush1.msra.mxu0 0.0
        %2533 = vmatprep.subr.mxu0 0.0
        %2534 = vmatpush1.msra.mxu0 0.0
        %2535 = vmatprep.subr.mxu0 0.0
        %2536 = vmatpush1.msra.mxu0 0.0
        %2537 = vmatprep.subr.mxu0 0.0
        %2538 = vmatpush1.msra.mxu0 0.0
        %2539 = vmatprep.subr.mxu0 0.0
        %2540 = vmatpush1.msra.mxu0 0.0
        %2541 = vmatprep.subr.mxu0 0.0
        %2542 = vmatpush1.msra.mxu0 0.0
        %2543 = vmatprep.subr.mxu0 0.0
        %2544 = vmatpush1.msra.mxu0 0.0
        %2545 = vmatprep.subr.mxu0 0.0
        %2546 = vmatpush1.msra.mxu0 0.0
        %2547 = vmatprep.subr.mxu0 0.0
        %2548 = vmatpush1.msra.mxu0 0.0
        %2549 = vmatprep.subr.mxu0 0.0
        %2550 = vmatpush1.msra.mxu0 0.0
        %2551 = vmatprep.mubr.f32.mxu0 0.0
        %2552 = vmatmul.mubr.f32.gmra.mrb[0].mxu0 %v2485
        %v2553 = vpop.f32.mrb[0].mxu0
        %v2554 = vadd.f32 0.0, %v2553
        %v2555 = vpop.f32.mrb[0].mxu0
        %2556 = vdwg.mxu0
        %v2558 = vsel %vm272, %v259, 0
        %2560 = vmatprep.subr.mxu0 0.0
        %2561 = vmatpush1.msra.mxu0 %v1925
        %2562 = vmatprep.subr.mxu0 0.0
        %2563 = vmatpush1.msra.mxu0 %v2061
        %2564 = vmatprep.subr.mxu0 0.0
        %2565 = vmatpush1.msra.mxu0 %v2197
        %2566 = vmatprep.subr.mxu0 0.0
        %2567 = vmatpush1.msra.mxu0 %v2333
        %2568 = vmatprep.subr.mxu0 0.0
        %2569 = vmatpush1.msra.mxu0 0.0
        %2570 = vmatprep.subr.mxu0 0.0
        %2571 = vmatpush1.msra.mxu0 0.0
        %2572 = vmatprep.subr.mxu0 0.0
        %2573 = vmatpush1.msra.mxu0 0.0
        %2574 = vmatprep.subr.mxu0 0.0
        %2575 = vmatpush1.msra.mxu0 0.0
        %2576 = vmatprep.subr.mxu0 0.0
        %2577 = vmatpush1.msra.mxu0 0.0
        %2578 = vmatprep.subr.mxu0 0.0
        %2579 = vmatpush1.msra.mxu0 0.0
        %2580 = vmatprep.subr.mxu0 0.0
        %2581 = vmatpush1.msra.mxu0 0.0
        %2582 = vmatprep.subr.mxu0 0.0
        %2583 = vmatpush1.msra.mxu0 0.0
        %2584 = vmatprep.subr.mxu0 0.0
        %2585 = vmatpush1.msra.mxu0 0.0
        %2586 = vmatprep.subr.mxu0 0.0
        %2587 = vmatpush1.msra.mxu0 0.0
        %2588 = vmatprep.subr.mxu0 0.0
        %2589 = vmatpush1.msra.mxu0 0.0
        %2590 = vmatprep.subr.mxu0 0.0
        %2591 = vmatpush1.msra.mxu0 0.0
        %2592 = vmatprep.subr.mxu0 0.0
        %2593 = vmatpush1.msra.mxu0 0.0
        %2594 = vmatprep.subr.mxu0 0.0
        %2595 = vmatpush1.msra.mxu0 0.0
        %2596 = vmatprep.subr.mxu0 0.0
        %2597 = vmatpush1.msra.mxu0 0.0
        %2598 = vmatprep.subr.mxu0 0.0
        %2599 = vmatpush1.msra.mxu0 0.0
        %2600 = vmatprep.subr.mxu0 0.0
        %2601 = vmatpush1.msra.mxu0 0.0
        %2602 = vmatprep.subr.mxu0 0.0
        %2603 = vmatpush1.msra.mxu0 0.0
        %2604 = vmatprep.subr.mxu0 0.0
        %2605 = vmatpush1.msra.mxu0 0.0
        %2606 = vmatprep.subr.mxu0 0.0
        %2607 = vmatpush1.msra.mxu0 0.0
        %2608 = vmatprep.subr.mxu0 0.0
        %2609 = vmatpush1.msra.mxu0 0.0
        %2610 = vmatprep.subr.mxu0 0.0
        %2611 = vmatpush1.msra.mxu0 0.0
        %2612 = vmatprep.subr.mxu0 0.0
        %2613 = vmatpush1.msra.mxu0 0.0
        %2614 = vmatprep.subr.mxu0 0.0
        %2615 = vmatpush1.msra.mxu0 0.0
        %2616 = vmatprep.subr.mxu0 0.0
        %2617 = vmatpush1.msra.mxu0 0.0
        %2618 = vmatprep.subr.mxu0 0.0
        %2619 = vmatpush1.msra.mxu0 0.0
        %2620 = vmatprep.subr.mxu0 0.0
        %2621 = vmatpush1.msra.mxu0 0.0
        %2622 = vmatprep.subr.mxu0 0.0
        %2623 = vmatpush1.msra.mxu0 0.0
        %2624 = vmatprep.mubr.f32.mxu0 0.0
        %2625 = vmatmul.mubr.f32.gmra.mrb[0].mxu0 %v2558
        %v2626 = vpop.f32.mrb[0].mxu0
        %v2627 = vadd.f32 0.0, %v2626
        %v2628 = vpop.f32.mrb[0].mxu0
        %2629 = vdwg.mxu0
        %v2631 = vsel %vm272, %v260, 0
        %2633 = vmatprep.subr.mxu0 0.0
        %2634 = vmatpush1.msra.mxu0 %v1926
        %2635 = vmatprep.subr.mxu0 0.0
        %2636 = vmatpush1.msra.mxu0 %v2062
        %2637 = vmatprep.subr.mxu0 0.0
        %2638 = vmatpush1.msra.mxu0 %v2198
        %2639 = vmatprep.subr.mxu0 0.0
        %2640 = vmatpush1.msra.mxu0 %v2334
        %2641 = vmatprep.subr.mxu0 0.0
        %2642 = vmatpush1.msra.mxu0 0.0
        %2643 = vmatprep.subr.mxu0 0.0
        %2644 = vmatpush1.msra.mxu0 0.0
        %2645 = vmatprep.subr.mxu0 0.0
        %2646 = vmatpush1.msra.mxu0 0.0
        %2647 = vmatprep.subr.mxu0 0.0
        %2648 = vmatpush1.msra.mxu0 0.0
        %2649 = vmatprep.subr.mxu0 0.0
        %2650 = vmatpush1.msra.mxu0 0.0
        %2651 = vmatprep.subr.mxu0 0.0
        %2652 = vmatpush1.msra.mxu0 0.0
        %2653 = vmatprep.subr.mxu0 0.0
        %2654 = vmatpush1.msra.mxu0 0.0
        %2655 = vmatprep.subr.mxu0 0.0
        %2656 = vmatpush1.msra.mxu0 0.0
        %2657 = vmatprep.subr.mxu0 0.0
        %2658 = vmatpush1.msra.mxu0 0.0
        %2659 = vmatprep.subr.mxu0 0.0
        %2660 = vmatpush1.msra.mxu0 0.0
        %2661 = vmatprep.subr.mxu0 0.0
        %2662 = vmatpush1.msra.mxu0 0.0
        %2663 = vmatprep.subr.mxu0 0.0
        %2664 = vmatpush1.msra.mxu0 0.0
        %2665 = vmatprep.subr.mxu0 0.0
        %2666 = vmatpush1.msra.mxu0 0.0
        %2667 = vmatprep.subr.mxu0 0.0
        %2668 = vmatpush1.msra.mxu0 0.0
        %2669 = vmatprep.subr.mxu0 0.0
        %2670 = vmatpush1.msra.mxu0 0.0
        %2671 = vmatprep.subr.mxu0 0.0
        %2672 = vmatpush1.msra.mxu0 0.0
        %2673 = vmatprep.subr.mxu0 0.0
        %2674 = vmatpush1.msra.mxu0 0.0
        %2675 = vmatprep.subr.mxu0 0.0
        %2676 = vmatpush1.msra.mxu0 0.0
        %2677 = vmatprep.subr.mxu0 0.0
        %2678 = vmatpush1.msra.mxu0 0.0
        %2679 = vmatprep.subr.mxu0 0.0
        %2680 = vmatpush1.msra.mxu0 0.0
        %2681 = vmatprep.subr.mxu0 0.0
        %2682 = vmatpush1.msra.mxu0 0.0
        %2683 = vmatprep.subr.mxu0 0.0
        %2684 = vmatpush1.msra.mxu0 0.0
        %2685 = vmatprep.subr.mxu0 0.0
        %2686 = vmatpush1.msra.mxu0 0.0
        %2687 = vmatprep.subr.mxu0 0.0
        %2688 = vmatpush1.msra.mxu0 0.0
        %2689 = vmatprep.subr.mxu0 0.0
        %2690 = vmatpush1.msra.mxu0 0.0
        %2691 = vmatprep.subr.mxu0 0.0
        %2692 = vmatpush1.msra.mxu0 0.0
        %2693 = vmatprep.subr.mxu0 0.0
        %2694 = vmatpush1.msra.mxu0 0.0
        %2695 = vmatprep.subr.mxu0 0.0
        %2696 = vmatpush1.msra.mxu0 0.0
        %2697 = vmatprep.mubr.f32.mxu0 0.0
        %2698 = vmatmul.mubr.f32.gmra.mrb[0].mxu0 %v2631
        %v2699 = vpop.f32.mrb[0].mxu0
        %v2700 = vadd.f32 0.0, %v2699
        %v2701 = vpop.f32.mrb[0].mxu0
        %2702 = vdwg.mxu0
        %v2704 = vsel %vm272, %v261, 0
        %2706 = vmatprep.subr.mxu0 0.0
        %2707 = vmatpush1.msra.mxu0 %v1927
        %2708 = vmatprep.subr.mxu0 0.0
        %2709 = vmatpush1.msra.mxu0 %v2063
        %2710 = vmatprep.subr.mxu0 0.0
        %2711 = vmatpush1.msra.mxu0 %v2199
        %2712 = vmatprep.subr.mxu0 0.0
        %2713 = vmatpush1.msra.mxu0 %v2335
        %2714 = vmatprep.subr.mxu0 0.0
        %2715 = vmatpush1.msra.mxu0 0.0
        %2716 = vmatprep.subr.mxu0 0.0
        %2717 = vmatpush1.msra.mxu0 0.0
        %2718 = vmatprep.subr.mxu0 0.0
        %2719 = vmatpush1.msra.mxu0 0.0
        %2720 = vmatprep.subr.mxu0 0.0
        %2721 = vmatpush1.msra.mxu0 0.0
        %2722 = vmatprep.subr.mxu0 0.0
        %2723 = vmatpush1.msra.mxu0 0.0
        %2724 = vmatprep.subr.mxu0 0.0
        %2725 = vmatpush1.msra.mxu0 0.0
        %2726 = vmatprep.subr.mxu0 0.0
        %2727 = vmatpush1.msra.mxu0 0.0
        %2728 = vmatprep.subr.mxu0 0.0
        %2729 = vmatpush1.msra.mxu0 0.0
        %2730 = vmatprep.subr.mxu0 0.0
        %2731 = vmatpush1.msra.mxu0 0.0
        %2732 = vmatprep.subr.mxu0 0.0
        %2733 = vmatpush1.msra.mxu0 0.0
        %2734 = vmatprep.subr.mxu0 0.0
        %2735 = vmatpush1.msra.mxu0 0.0
        %2736 = vmatprep.subr.mxu0 0.0
        %2737 = vmatpush1.msra.mxu0 0.0
        %2738 = vmatprep.subr.mxu0 0.0
        %2739 = vmatpush1.msra.mxu0 0.0
        %2740 = vmatprep.subr.mxu0 0.0
        %2741 = vmatpush1.msra.mxu0 0.0
        %2742 = vmatprep.subr.mxu0 0.0
        %2743 = vmatpush1.msra.mxu0 0.0
        %2744 = vmatprep.subr.mxu0 0.0
        %2745 = vmatpush1.msra.mxu0 0.0
        %2746 = vmatprep.subr.mxu0 0.0
        %2747 = vmatpush1.msra.mxu0 0.0
        %2748 = vmatprep.subr.mxu0 0.0
        %2749 = vmatpush1.msra.mxu0 0.0
        %2750 = vmatprep.subr.mxu0 0.0
        %2751 = vmatpush1.msra.mxu0 0.0
        %2752 = vmatprep.subr.mxu0 0.0
        %2753 = vmatpush1.msra.mxu0 0.0
        %2754 = vmatprep.subr.mxu0 0.0
        %2755 = vmatpush1.msra.mxu0 0.0
        %2756 = vmatprep.subr.mxu0 0.0
        %2757 = vmatpush1.msra.mxu0 0.0
        %2758 = vmatprep.subr.mxu0 0.0
        %2759 = vmatpush1.msra.mxu0 0.0
        %2760 = vmatprep.subr.mxu0 0.0
        %2761 = vmatpush1.msra.mxu0 0.0
        %2762 = vmatprep.subr.mxu0 0.0
        %2763 = vmatpush1.msra.mxu0 0.0
        %2764 = vmatprep.subr.mxu0 0.0
        %2765 = vmatpush1.msra.mxu0 0.0
        %2766 = vmatprep.subr.mxu0 0.0
        %2767 = vmatpush1.msra.mxu0 0.0
        %2768 = vmatprep.subr.mxu0 0.0
        %2769 = vmatpush1.msra.mxu0 0.0
        %2770 = vmatprep.mubr.f32.mxu0 0.0
        %2771 = vmatmul.mubr.f32.gmra.mrb[0].mxu0 %v2704
        %v2772 = vpop.f32.mrb[0].mxu0
        %v2773 = vadd.f32 0.0, %v2772
        %v2774 = vpop.f32.mrb[0].mxu0
        %2775 = vdwg.mxu0
        %v2777 = vsel %vm272, %v262, 0
        %2779 = vmatprep.subr.mxu0 0.0
        %2780 = vmatpush1.msra.mxu0 %v1928
        %2781 = vmatprep.subr.mxu0 0.0
        %2782 = vmatpush1.msra.mxu0 %v2064
        %2783 = vmatprep.subr.mxu0 0.0
        %2784 = vmatpush1.msra.mxu0 %v2200
        %2785 = vmatprep.subr.mxu0 0.0
        %2786 = vmatpush1.msra.mxu0 %v2336
        %2787 = vmatprep.subr.mxu0 0.0
        %2788 = vmatpush1.msra.mxu0 0.0
        %2789 = vmatprep.subr.mxu0 0.0
        %2790 = vmatpush1.msra.mxu0 0.0
        %2791 = vmatprep.subr.mxu0 0.0
        %2792 = vmatpush1.msra.mxu0 0.0
        %2793 = vmatprep.subr.mxu0 0.0
        %2794 = vmatpush1.msra.mxu0 0.0
        %2795 = vmatprep.subr.mxu0 0.0
        %2796 = vmatpush1.msra.mxu0 0.0
        %2797 = vmatprep.subr.mxu0 0.0
        %2798 = vmatpush1.msra.mxu0 0.0
        %2799 = vmatprep.subr.mxu0 0.0
        %2800 = vmatpush1.msra.mxu0 0.0
        %2801 = vmatprep.subr.mxu0 0.0
        %2802 = vmatpush1.msra.mxu0 0.0
        %2803 = vmatprep.subr.mxu0 0.0
        %2804 = vmatpush1.msra.mxu0 0.0
        %2805 = vmatprep.subr.mxu0 0.0
        %2806 = vmatpush1.msra.mxu0 0.0
        %2807 = vmatprep.subr.mxu0 0.0
        %2808 = vmatpush1.msra.mxu0 0.0
        %2809 = vmatprep.subr.mxu0 0.0
        %2810 = vmatpush1.msra.mxu0 0.0
        %2811 = vmatprep.subr.mxu0 0.0
        %2812 = vmatpush1.msra.mxu0 0.0
        %2813 = vmatprep.subr.mxu0 0.0
        %2814 = vmatpush1.msra.mxu0 0.0
        %2815 = vmatprep.subr.mxu0 0.0
        %2816 = vmatpush1.msra.mxu0 0.0
        %2817 = vmatprep.subr.mxu0 0.0
        %2818 = vmatpush1.msra.mxu0 0.0
        %2819 = vmatprep.subr.mxu0 0.0
        %2820 = vmatpush1.msra.mxu0 0.0
        %2821 = vmatprep.subr.mxu0 0.0
        %2822 = vmatpush1.msra.mxu0 0.0
        %2823 = vmatprep.subr.mxu0 0.0
        %2824 = vmatpush1.msra.mxu0 0.0
        %2825 = vmatprep.subr.mxu0 0.0
        %2826 = vmatpush1.msra.mxu0 0.0
        %2827 = vmatprep.subr.mxu0 0.0
        %2828 = vmatpush1.msra.mxu0 0.0
        %2829 = vmatprep.subr.mxu0 0.0
        %2830 = vmatpush1.msra.mxu0 0.0
        %2831 = vmatprep.subr.mxu0 0.0
        %2832 = vmatpush1.msra.mxu0 0.0
        %2833 = vmatprep.subr.mxu0 0.0
        %2834 = vmatpush1.msra.mxu0 0.0
        %2835 = vmatprep.subr.mxu0 0.0
        %2836 = vmatpush1.msra.mxu0 0.0
        %2837 = vmatprep.subr.mxu0 0.0
        %2838 = vmatpush1.msra.mxu0 0.0
        %2839 = vmatprep.subr.mxu0 0.0
        %2840 = vmatpush1.msra.mxu0 0.0
        %2841 = vmatprep.subr.mxu0 0.0
        %2842 = vmatpush1.msra.mxu0 0.0
        %2843 = vmatprep.mubr.f32.mxu0 0.0
        %2844 = vmatmul.mubr.f32.gmra.mrb[0].mxu0 %v2777
        %v2845 = vpop.f32.mrb[0].mxu0
        %v2846 = vadd.f32 0.0, %v2845
        %v2847 = vpop.f32.mrb[0].mxu0
        %2848 = vdwg.mxu0
        %v2850 = vsel %vm272, %v263, 0
        %2852 = vmatprep.subr.mxu0 0.0
        %2853 = vmatpush1.msra.mxu0 %v1929
        %2854 = vmatprep.subr.mxu0 0.0
        %2855 = vmatpush1.msra.mxu0 %v2065
        %2856 = vmatprep.subr.mxu0 0.0
        %2857 = vmatpush1.msra.mxu0 %v2201
        %2858 = vmatprep.subr.mxu0 0.0
        %2859 = vmatpush1.msra.mxu0 %v2337
        %2860 = vmatprep.subr.mxu0 0.0
        %2861 = vmatpush1.msra.mxu0 0.0
        %2862 = vmatprep.subr.mxu0 0.0
        %2863 = vmatpush1.msra.mxu0 0.0
        %2864 = vmatprep.subr.mxu0 0.0
        %2865 = vmatpush1.msra.mxu0 0.0
        %2866 = vmatprep.subr.mxu0 0.0
        %2867 = vmatpush1.msra.mxu0 0.0
        %2868 = vmatprep.subr.mxu0 0.0
        %2869 = vmatpush1.msra.mxu0 0.0
        %2870 = vmatprep.subr.mxu0 0.0
        %2871 = vmatpush1.msra.mxu0 0.0
        %2872 = vmatprep.subr.mxu0 0.0
        %2873 = vmatpush1.msra.mxu0 0.0
        %2874 = vmatprep.subr.mxu0 0.0
        %2875 = vmatpush1.msra.mxu0 0.0
        %2876 = vmatprep.subr.mxu0 0.0
        %2877 = vmatpush1.msra.mxu0 0.0
        %2878 = vmatprep.subr.mxu0 0.0
        %2879 = vmatpush1.msra.mxu0 0.0
        %2880 = vmatprep.subr.mxu0 0.0
        %2881 = vmatpush1.msra.mxu0 0.0
        %2882 = vmatprep.subr.mxu0 0.0
        %2883 = vmatpush1.msra.mxu0 0.0
        %2884 = vmatprep.subr.mxu0 0.0
        %2885 = vmatpush1.msra.mxu0 0.0
        %2886 = vmatprep.subr.mxu0 0.0
        %2887 = vmatpush1.msra.mxu0 0.0
        %2888 = vmatprep.subr.mxu0 0.0
        %2889 = vmatpush1.msra.mxu0 0.0
        %2890 = vmatprep.subr.mxu0 0.0
        %2891 = vmatpush1.msra.mxu0 0.0
        %2892 = vmatprep.subr.mxu0 0.0
        %2893 = vmatpush1.msra.mxu0 0.0
        %2894 = vmatprep.subr.mxu0 0.0
        %2895 = vmatpush1.msra.mxu0 0.0
        %2896 = vmatprep.subr.mxu0 0.0
        %2897 = vmatpush1.msra.mxu0 0.0
        %2898 = vmatprep.subr.mxu0 0.0
        %2899 = vmatpush1.msra.mxu0 0.0
        %2900 = vmatprep.subr.mxu0 0.0
        %2901 = vmatpush1.msra.mxu0 0.0
        %2902 = vmatprep.subr.mxu0 0.0
        %2903 = vmatpush1.msra.mxu0 0.0
        %2904 = vmatprep.subr.mxu0 0.0
        %2905 = vmatpush1.msra.mxu0 0.0
        %2906 = vmatprep.subr.mxu0 0.0
        %2907 = vmatpush1.msra.mxu0 0.0
        %2908 = vmatprep.subr.mxu0 0.0
        %2909 = vmatpush1.msra.mxu0 0.0
        %2910 = vmatprep.subr.mxu0 0.0
        %2911 = vmatpush1.msra.mxu0 0.0
        %2912 = vmatprep.subr.mxu0 0.0
        %2913 = vmatpush1.msra.mxu0 0.0
        %2914 = vmatprep.subr.mxu0 0.0
        %2915 = vmatpush1.msra.mxu0 0.0
        %2916 = vmatprep.mubr.f32.mxu0 0.0
        %2917 = vmatmul.mubr.f32.gmra.mrb[0].mxu0 %v2850
        %v2918 = vpop.f32.mrb[0].mxu0
        %v2919 = vadd.f32 0.0, %v2918
        %v2920 = vpop.f32.mrb[0].mxu0
        %2921 = vdwg.mxu0
        %2922 = vxpose.xlu0.b32.start [1/16] %v2408, 128
        %2923 = vxpose.xlu0.b32.cont [2/16] 0.0, 128
        %2924 = vxpose.xlu0.b32.cont [3/16] 0.0, 128
        %2925 = vxpose.xlu0.b32.cont [4/16] 0.0, 128
        %2926 = vxpose.xlu0.b32.cont [5/16] 0.0, 128
        %2927 = vxpose.xlu0.b32.cont [6/16] 0.0, 128
        %2928 = vxpose.xlu0.b32.cont [7/16] 0.0, 128
        %2929 = vxpose.xlu0.b32.cont [8/16] 0.0, 128
        %2930 = vxpose.xlu0.b32.cont [9/16] 0.0, 128
        %2931 = vxpose.xlu0.b32.cont [10/16] 0.0, 128
        %2932 = vxpose.xlu0.b32.cont [11/16] 0.0, 128
        %2933 = vxpose.xlu0.b32.cont [12/16] 0.0, 128
        %2934 = vxpose.xlu0.b32.cont [13/16] 0.0, 128
        %2935 = vxpose.xlu0.b32.cont [14/16] 0.0, 128
        %2936 = vxpose.xlu0.b32.cont [15/16] 0.0, 128
        %2937 = vxpose.xlu0.b32.end [16/16] 0.0, 128
        %v2938 = vpop.trf.xlu0
        %v2939 = vpop.trf.xlu0
        %v2940 = vpop.trf.xlu0
        %v2941 = vpop.trf.xlu0
        %v2942 = vpop.trf.xlu0
        %v2943 = vpop.trf.xlu0
        %v2944 = vpop.trf.xlu0
        %v2945 = vpop.trf.xlu0
        %v2946 = vpop.trf.xlu0
        %v2947 = vpop.trf.xlu0
        %v2948 = vpop.trf.xlu0
        %v2949 = vpop.trf.xlu0
        %v2950 = vpop.trf.xlu0
        %v2951 = vpop.trf.xlu0
        %v2952 = vpop.trf.xlu0
        %v2953 = vpop.trf.xlu0
        %2954 = vxpose.xlu0.b32.start [1/16] %v2481, 128
        %2955 = vxpose.xlu0.b32.cont [2/16] 0.0, 128
        %2956 = vxpose.xlu0.b32.cont [3/16] 0.0, 128
        %2957 = vxpose.xlu0.b32.cont [4/16] 0.0, 128
        %2958 = vxpose.xlu0.b32.cont [5/16] 0.0, 128
        %2959 = vxpose.xlu0.b32.cont [6/16] 0.0, 128
        %2960 = vxpose.xlu0.b32.cont [7/16] 0.0, 128
        %2961 = vxpose.xlu0.b32.cont [8/16] 0.0, 128
        %2962 = vxpose.xlu0.b32.cont [9/16] 0.0, 128
        %2963 = vxpose.xlu0.b32.cont [10/16] 0.0, 128
        %2964 = vxpose.xlu0.b32.cont [11/16] 0.0, 128
        %2965 = vxpose.xlu0.b32.cont [12/16] 0.0, 128
        %2966 = vxpose.xlu0.b32.cont [13/16] 0.0, 128
        %2967 = vxpose.xlu0.b32.cont [14/16] 0.0, 128
        %2968 = vxpose.xlu0.b32.cont [15/16] 0.0, 128
        %2969 = vxpose.xlu0.b32.end [16/16] 0.0, 128
        %v2970 = vpop.trf.xlu0
        %v2971 = vpop.trf.xlu0
        %v2972 = vpop.trf.xlu0
        %v2973 = vpop.trf.xlu0
        %v2974 = vpop.trf.xlu0
        %v2975 = vpop.trf.xlu0
        %v2976 = vpop.trf.xlu0
        %v2977 = vpop.trf.xlu0
        %v2978 = vpop.trf.xlu0
        %v2979 = vpop.trf.xlu0
        %v2980 = vpop.trf.xlu0
        %v2981 = vpop.trf.xlu0
        %v2982 = vpop.trf.xlu0
        %v2983 = vpop.trf.xlu0
        %v2984 = vpop.trf.xlu0
        %v2985 = vpop.trf.xlu0
        %2986 = vxpose.xlu0.b32.start [1/16] %v2554, 128
        %2987 = vxpose.xlu0.b32.cont [2/16] 0.0, 128
        %2988 = vxpose.xlu0.b32.cont [3/16] 0.0, 128
        %2989 = vxpose.xlu0.b32.cont [4/16] 0.0, 128
        %2990 = vxpose.xlu0.b32.cont [5/16] 0.0, 128
        %2991 = vxpose.xlu0.b32.cont [6/16] 0.0, 128
        %2992 = vxpose.xlu0.b32.cont [7/16] 0.0, 128
        %2993 = vxpose.xlu0.b32.cont [8/16] 0.0, 128
        %2994 = vxpose.xlu0.b32.cont [9/16] 0.0, 128
        %2995 = vxpose.xlu0.b32.cont [10/16] 0.0, 128
        %2996 = vxpose.xlu0.b32.cont [11/16] 0.0, 128
        %2997 = vxpose.xlu0.b32.cont [12/16] 0.0, 128
        %2998 = vxpose.xlu0.b32.cont [13/16] 0.0, 128
        %2999 = vxpose.xlu0.b32.cont [14/16] 0.0, 128
        %3000 = vxpose.xlu0.b32.cont [15/16] 0.0, 128
        %3001 = vxpose.xlu0.b32.end [16/16] 0.0, 128
        %v3002 = vpop.trf.xlu0
        %v3003 = vpop.trf.xlu0
        %v3004 = vpop.trf.xlu0
        %v3005 = vpop.trf.xlu0
        %v3006 = vpop.trf.xlu0
        %v3007 = vpop.trf.xlu0
        %v3008 = vpop.trf.xlu0
        %v3009 = vpop.trf.xlu0
        %v3010 = vpop.trf.xlu0
        %v3011 = vpop.trf.xlu0
        %v3012 = vpop.trf.xlu0
        %v3013 = vpop.trf.xlu0
        %v3014 = vpop.trf.xlu0
        %v3015 = vpop.trf.xlu0
        %v3016 = vpop.trf.xlu0
        %v3017 = vpop.trf.xlu0
        %3018 = vxpose.xlu0.b32.start [1/16] %v2627, 128
        %3019 = vxpose.xlu0.b32.cont [2/16] 0.0, 128
        %3020 = vxpose.xlu0.b32.cont [3/16] 0.0, 128
        %3021 = vxpose.xlu0.b32.cont [4/16] 0.0, 128
        %3022 = vxpose.xlu0.b32.cont [5/16] 0.0, 128
        %3023 = vxpose.xlu0.b32.cont [6/16] 0.0, 128
        %3024 = vxpose.xlu0.b32.cont [7/16] 0.0, 128
        %3025 = vxpose.xlu0.b32.cont [8/16] 0.0, 128
        %3026 = vxpose.xlu0.b32.cont [9/16] 0.0, 128
        %3027 = vxpose.xlu0.b32.cont [10/16] 0.0, 128
        %3028 = vxpose.xlu0.b32.cont [11/16] 0.0, 128
        %3029 = vxpose.xlu0.b32.cont [12/16] 0.0, 128
        %3030 = vxpose.xlu0.b32.cont [13/16] 0.0, 128
        %3031 = vxpose.xlu0.b32.cont [14/16] 0.0, 128
        %3032 = vxpose.xlu0.b32.cont [15/16] 0.0, 128
        %3033 = vxpose.xlu0.b32.end [16/16] 0.0, 128
        %v3034 = vpop.trf.xlu0
        %v3035 = vpop.trf.xlu0
        %v3036 = vpop.trf.xlu0
        %v3037 = vpop.trf.xlu0
        %v3038 = vpop.trf.xlu0
        %v3039 = vpop.trf.xlu0
        %v3040 = vpop.trf.xlu0
        %v3041 = vpop.trf.xlu0
        %v3042 = vpop.trf.xlu0
        %v3043 = vpop.trf.xlu0
        %v3044 = vpop.trf.xlu0
        %v3045 = vpop.trf.xlu0
        %v3046 = vpop.trf.xlu0
        %v3047 = vpop.trf.xlu0
        %v3048 = vpop.trf.xlu0
        %v3049 = vpop.trf.xlu0
        %3050 = vxpose.xlu0.b32.start [1/16] %v2700, 128
        %3051 = vxpose.xlu0.b32.cont [2/16] 0.0, 128
        %3052 = vxpose.xlu0.b32.cont [3/16] 0.0, 128
        %3053 = vxpose.xlu0.b32.cont [4/16] 0.0, 128
        %3054 = vxpose.xlu0.b32.cont [5/16] 0.0, 128
        %3055 = vxpose.xlu0.b32.cont [6/16] 0.0, 128
        %3056 = vxpose.xlu0.b32.cont [7/16] 0.0, 128
        %3057 = vxpose.xlu0.b32.cont [8/16] 0.0, 128
        %3058 = vxpose.xlu0.b32.cont [9/16] 0.0, 128
        %3059 = vxpose.xlu0.b32.cont [10/16] 0.0, 128
        %3060 = vxpose.xlu0.b32.cont [11/16] 0.0, 128
        %3061 = vxpose.xlu0.b32.cont [12/16] 0.0, 128
        %3062 = vxpose.xlu0.b32.cont [13/16] 0.0, 128
        %3063 = vxpose.xlu0.b32.cont [14/16] 0.0, 128
        %3064 = vxpose.xlu0.b32.cont [15/16] 0.0, 128
        %3065 = vxpose.xlu0.b32.end [16/16] 0.0, 128
        %v3066 = vpop.trf.xlu0
        %v3067 = vpop.trf.xlu0
        %v3068 = vpop.trf.xlu0
        %v3069 = vpop.trf.xlu0
        %v3070 = vpop.trf.xlu0
        %v3071 = vpop.trf.xlu0
        %v3072 = vpop.trf.xlu0
        %v3073 = vpop.trf.xlu0
        %v3074 = vpop.trf.xlu0
        %v3075 = vpop.trf.xlu0
        %v3076 = vpop.trf.xlu0
        %v3077 = vpop.trf.xlu0
        %v3078 = vpop.trf.xlu0
        %v3079 = vpop.trf.xlu0
        %v3080 = vpop.trf.xlu0
        %v3081 = vpop.trf.xlu0
        %3082 = vxpose.xlu0.b32.start [1/16] %v2773, 128
        %3083 = vxpose.xlu0.b32.cont [2/16] 0.0, 128
        %3084 = vxpose.xlu0.b32.cont [3/16] 0.0, 128
        %3085 = vxpose.xlu0.b32.cont [4/16] 0.0, 128
        %3086 = vxpose.xlu0.b32.cont [5/16] 0.0, 128
        %3087 = vxpose.xlu0.b32.cont [6/16] 0.0, 128
        %3088 = vxpose.xlu0.b32.cont [7/16] 0.0, 128
        %3089 = vxpose.xlu0.b32.cont [8/16] 0.0, 128
        %3090 = vxpose.xlu0.b32.cont [9/16] 0.0, 128
        %3091 = vxpose.xlu0.b32.cont [10/16] 0.0, 128
        %3092 = vxpose.xlu0.b32.cont [11/16] 0.0, 128
        %3093 = vxpose.xlu0.b32.cont [12/16] 0.0, 128
        %3094 = vxpose.xlu0.b32.cont [13/16] 0.0, 128
        %3095 = vxpose.xlu0.b32.cont [14/16] 0.0, 128
        %3096 = vxpose.xlu0.b32.cont [15/16] 0.0, 128
        %3097 = vxpose.xlu0.b32.end [16/16] 0.0, 128
        %v3098 = vpop.trf.xlu0
        %v3099 = vpop.trf.xlu0
        %v3100 = vpop.trf.xlu0
        %v3101 = vpop.trf.xlu0
        %v3102 = vpop.trf.xlu0
        %v3103 = vpop.trf.xlu0
        %v3104 = vpop.trf.xlu0
        %v3105 = vpop.trf.xlu0
        %v3106 = vpop.trf.xlu0
        %v3107 = vpop.trf.xlu0
        %v3108 = vpop.trf.xlu0
        %v3109 = vpop.trf.xlu0
        %v3110 = vpop.trf.xlu0
        %v3111 = vpop.trf.xlu0
        %v3112 = vpop.trf.xlu0
        %v3113 = vpop.trf.xlu0
        %3114 = vxpose.xlu0.b32.start [1/16] %v2846, 128
        %3115 = vxpose.xlu0.b32.cont [2/16] 0.0, 128
        %3116 = vxpose.xlu0.b32.cont [3/16] 0.0, 128
        %3117 = vxpose.xlu0.b32.cont [4/16] 0.0, 128
        %3118 = vxpose.xlu0.b32.cont [5/16] 0.0, 128
        %3119 = vxpose.xlu0.b32.cont [6/16] 0.0, 128
        %3120 = vxpose.xlu0.b32.cont [7/16] 0.0, 128
        %3121 = vxpose.xlu0.b32.cont [8/16] 0.0, 128
        %3122 = vxpose.xlu0.b32.cont [9/16] 0.0, 128
        %3123 = vxpose.xlu0.b32.cont [10/16] 0.0, 128
        %3124 = vxpose.xlu0.b32.cont [11/16] 0.0, 128
        %3125 = vxpose.xlu0.b32.cont [12/16] 0.0, 128
        %3126 = vxpose.xlu0.b32.cont [13/16] 0.0, 128
        %3127 = vxpose.xlu0.b32.cont [14/16] 0.0, 128
        %3128 = vxpose.xlu0.b32.cont [15/16] 0.0, 128
        %3129 = vxpose.xlu0.b32.end [16/16] 0.0, 128
        %v3130 = vpop.trf.xlu0
        %v3131 = vpop.trf.xlu0
        %v3132 = vpop.trf.xlu0
        %v3133 = vpop.trf.xlu0
        %v3134 = vpop.trf.xlu0
        %v3135 = vpop.trf.xlu0
        %v3136 = vpop.trf.xlu0
        %v3137 = vpop.trf.xlu0
        %v3138 = vpop.trf.xlu0
        %v3139 = vpop.trf.xlu0
        %v3140 = vpop.trf.xlu0
        %v3141 = vpop.trf.xlu0
        %v3142 = vpop.trf.xlu0
        %v3143 = vpop.trf.xlu0
        %v3144 = vpop.trf.xlu0
        %v3145 = vpop.trf.xlu0
        %3146 = vxpose.xlu0.b32.start [1/16] %v2919, 128
        %3147 = vxpose.xlu0.b32.cont [2/16] 0.0, 128
        %3148 = vxpose.xlu0.b32.cont [3/16] 0.0, 128
        %3149 = vxpose.xlu0.b32.cont [4/16] 0.0, 128
        %3150 = vxpose.xlu0.b32.cont [5/16] 0.0, 128
        %3151 = vxpose.xlu0.b32.cont [6/16] 0.0, 128
        %3152 = vxpose.xlu0.b32.cont [7/16] 0.0, 128
        %3153 = vxpose.xlu0.b32.cont [8/16] 0.0, 128
        %3154 = vxpose.xlu0.b32.cont [9/16] 0.0, 128
        %3155 = vxpose.xlu0.b32.cont [10/16] 0.0, 128
        %3156 = vxpose.xlu0.b32.cont [11/16] 0.0, 128
        %3157 = vxpose.xlu0.b32.cont [12/16] 0.0, 128
        %3158 = vxpose.xlu0.b32.cont [13/16] 0.0, 128
        %3159 = vxpose.xlu0.b32.cont [14/16] 0.0, 128
        %3160 = vxpose.xlu0.b32.cont [15/16] 0.0, 128
        %3161 = vxpose.xlu0.b32.end [16/16] 0.0, 128
        %v3162 = vpop.trf.xlu0
        %v3163 = vpop.trf.xlu0
        %v3164 = vpop.trf.xlu0
        %v3165 = vpop.trf.xlu0
        %v3166 = vpop.trf.xlu0
        %v3167 = vpop.trf.xlu0
        %v3168 = vpop.trf.xlu0
        %v3169 = vpop.trf.xlu0
        %v3170 = vpop.trf.xlu0
        %v3171 = vpop.trf.xlu0
        %v3172 = vpop.trf.xlu0
        %v3173 = vpop.trf.xlu0
        %v3174 = vpop.trf.xlu0
        %v3175 = vpop.trf.xlu0
        %v3176 = vpop.trf.xlu0
        %v3177 = vpop.trf.xlu0
        %v3178 = vcombine.low %v2938, %v3002
        %v3180 = vunpack.c.l.s4 1983009808
        %v3181 = vunpack.c.0.s8 %v3180
        %v3182 = vlaneseq
        %v3183 = vshrl.u32 %v3182, 7
        %v3184 = vsub.s32 %v3181, %v3183
        %v3185 = vrot.slane %v3178, %v3184
        %v3186 = vcombine.low %v2970, %v3034
        %v3188 = vunpack.c.l.s4 1983009808
        %v3189 = vunpack.c.0.s8 %v3188
        %v3190 = vlaneseq
        %v3191 = vshrl.u32 %v3190, 7
        %v3192 = vsub.s32 %v3189, %v3191
        %v3193 = vrot.slane %v3186, %v3192
        %v3194 = vcombine.low %v3066, %v3130
        %v3196 = vunpack.c.l.s4 1983009808
        %v3197 = vunpack.c.0.s8 %v3196
        %v3198 = vlaneseq
        %v3199 = vshrl.u32 %v3198, 7
        %v3200 = vsub.s32 %v3197, %v3199
        %v3201 = vrot.slane %v3194, %v3200
        %v3202 = vcombine.low %v3098, %v3162
        %v3204 = vunpack.c.l.s4 1983009808
        %v3205 = vunpack.c.0.s8 %v3204
        %v3206 = vlaneseq
        %v3207 = vshrl.u32 %v3206, 7
        %v3208 = vsub.s32 %v3205, %v3207
        %v3209 = vrot.slane %v3202, %v3208
        %v3210 = vcombine.low %v3185, %v3193
        %v3211 = vcombine.high %v3185, %v3193
        %v3213 = vunpack.c.l.s4 1934713408
        %v3214 = vunpack.c.0.s8 %v3213
        %v3215 = vlaneseq
        %v3216 = vshrl.u32 %v3215, 7
        %v3217 = vsub.s32 %v3214, %v3216
        %v3218 = vrot.slane %v3210, %v3217
        %v3220 = vunpack.c.l.s4 1934713408
        %v3221 = vunpack.c.0.s8 %v3220
        %v3222 = vlaneseq
        %v3223 = vshrl.u32 %v3222, 7
        %v3224 = vsub.s32 %v3221, %v3223
        %v3225 = vrot.slane %v3211, %v3224
        %v3226 = vcombine.low %v3201, %v3209
        %v3227 = vcombine.high %v3201, %v3209
        %v3229 = vunpack.c.l.s4 1934713408
        %v3230 = vunpack.c.0.s8 %v3229
        %v3231 = vlaneseq
        %v3232 = vshrl.u32 %v3231, 7
        %v3233 = vsub.s32 %v3230, %v3232
        %v3234 = vrot.slane %v3226, %v3233
        %v3236 = vunpack.c.l.s4 1934713408
        %v3237 = vunpack.c.0.s8 %v3236
        %v3238 = vlaneseq
        %v3239 = vshrl.u32 %v3238, 7
        %v3240 = vsub.s32 %v3237, %v3239
        %v3241 = vrot.slane %v3227, %v3240
        %v3242 = vcombine.low %v3218, %v3234
        %v3243 = vcombine.high %v3218, %v3234
        %v3244 = vcombine.low %v3225, %v3241
        %v3245 = vcombine.high %v3225, %v3241
        %v3246 = vlaneseq
        %v3247 = vshrl.u32 %v3246, 7
        %v3248 = vsub.s32 0, %v3247
        %v3249 = vrot.slane %v352, %v3248
        %3251 = vbcast.lane.b32.xlu0 %v3249, 256
        %v3252 = vpop.permute.xlu0 %3251
        %v3253 = vlaneseq
        %v3254 = vshrl.u32 %v3253, 7
        %v3255 = vsub.s32 1, %v3254
        %v3256 = vrot.slane %v352, %v3255
        %3258 = vbcast.lane.b32.xlu0 %v3256, 256
        %v3259 = vpop.permute.xlu0 %3258
        %v3260 = vlaneseq
        %v3261 = vshrl.u32 %v3260, 7
        %v3262 = vsub.s32 2, %v3261
        %v3263 = vrot.slane %v352, %v3262
        %3265 = vbcast.lane.b32.xlu0 %v3263, 256
        %v3266 = vpop.permute.xlu0 %3265
        %v3267 = vlaneseq
        %v3268 = vshrl.u32 %v3267, 7
        %v3269 = vsub.s32 3, %v3268
        %v3270 = vrot.slane %v352, %v3269
        %3272 = vbcast.lane.b32.xlu0 %v3270, 256
        %v3273 = vpop.permute.xlu0 %3272
        %v3274 = vlaneseq
        %v3275 = vshrl.u32 %v3274, 7
        %v3276 = vsub.s32 4, %v3275
        %v3277 = vrot.slane %v352, %v3276
        %3279 = vbcast.lane.b32.xlu0 %v3277, 256
        %v3280 = vpop.permute.xlu0 %3279
        %v3281 = vlaneseq
        %v3282 = vshrl.u32 %v3281, 7
        %v3283 = vsub.s32 5, %v3282
        %v3284 = vrot.slane %v352, %v3283
        %3286 = vbcast.lane.b32.xlu0 %v3284, 256
        %v3287 = vpop.permute.xlu0 %3286
        %v3288 = vlaneseq
        %v3289 = vshrl.u32 %v3288, 7
        %v3290 = vsub.s32 6, %v3289
        %v3291 = vrot.slane %v352, %v3290
        %3293 = vbcast.lane.b32.xlu0 %v3291, 256
        %v3294 = vpop.permute.xlu0 %3293
        %v3295 = vlaneseq
        %v3296 = vshrl.u32 %v3295, 7
        %v3297 = vsub.s32 7, %v3296
        %v3298 = vrot.slane %v352, %v3297
        %3300 = vbcast.lane.b32.xlu0 %v3298, 256
        %v3301 = vpop.permute.xlu0 %3300
        %v3302 = vlaneseq
        %v3303 = vshrl.u32 %v3302, 7
        %v3304 = vsub.s32 0, %v3303
        %v3305 = vrot.slane %v357, %v3304
        %3307 = vbcast.lane.b32.xlu0 %v3305, 256
        %v3308 = vpop.permute.xlu0 %3307
        %v3309 = vlaneseq
        %v3310 = vshrl.u32 %v3309, 7
        %v3311 = vsub.s32 1, %v3310
        %v3312 = vrot.slane %v357, %v3311
        %3314 = vbcast.lane.b32.xlu0 %v3312, 256
        %v3315 = vpop.permute.xlu0 %3314
        %v3316 = vlaneseq
        %v3317 = vshrl.u32 %v3316, 7
        %v3318 = vsub.s32 2, %v3317
        %v3319 = vrot.slane %v357, %v3318
        %3321 = vbcast.lane.b32.xlu0 %v3319, 256
        %v3322 = vpop.permute.xlu0 %3321
        %v3323 = vlaneseq
        %v3324 = vshrl.u32 %v3323, 7
        %v3325 = vsub.s32 3, %v3324
        %v3326 = vrot.slane %v357, %v3325
        %3328 = vbcast.lane.b32.xlu0 %v3326, 256
        %v3329 = vpop.permute.xlu0 %3328
        %v3330 = vlaneseq
        %v3331 = vshrl.u32 %v3330, 7
        %v3332 = vsub.s32 4, %v3331
        %v3333 = vrot.slane %v357, %v3332
        %3335 = vbcast.lane.b32.xlu0 %v3333, 256
        %v3336 = vpop.permute.xlu0 %3335
        %v3337 = vlaneseq
        %v3338 = vshrl.u32 %v3337, 7
        %v3339 = vsub.s32 5, %v3338
        %v3340 = vrot.slane %v357, %v3339
        %3342 = vbcast.lane.b32.xlu0 %v3340, 256
        %v3343 = vpop.permute.xlu0 %3342
        %v3344 = vlaneseq
        %v3345 = vshrl.u32 %v3344, 7
        %v3346 = vsub.s32 6, %v3345
        %v3347 = vrot.slane %v357, %v3346
        %3349 = vbcast.lane.b32.xlu0 %v3347, 256
        %v3350 = vpop.permute.xlu0 %3349
        %v3351 = vlaneseq
        %v3352 = vshrl.u32 %v3351, 7
        %v3353 = vsub.s32 7, %v3352
        %v3354 = vrot.slane %v357, %v3353
        %3356 = vbcast.lane.b32.xlu0 %v3354, 256
        %v3357 = vpop.permute.xlu0 %3356
        %v3358 = vlaneseq
        %v3359 = vshrl.u32 %v3358, 7
        %v3360 = vsub.s32 0, %v3359
        %v3361 = vrot.slane %v362, %v3360
        %3363 = vbcast.lane.b32.xlu0 %v3361, 256
        %v3364 = vpop.permute.xlu0 %3363
        %v3365 = vlaneseq
        %v3366 = vshrl.u32 %v3365, 7
        %v3367 = vsub.s32 1, %v3366
        %v3368 = vrot.slane %v362, %v3367
        %3370 = vbcast.lane.b32.xlu0 %v3368, 256
        %v3371 = vpop.permute.xlu0 %3370
        %v3372 = vlaneseq
        %v3373 = vshrl.u32 %v3372, 7
        %v3374 = vsub.s32 2, %v3373
        %v3375 = vrot.slane %v362, %v3374
        %3377 = vbcast.lane.b32.xlu0 %v3375, 256
        %v3378 = vpop.permute.xlu0 %3377
        %v3379 = vlaneseq
        %v3380 = vshrl.u32 %v3379, 7
        %v3381 = vsub.s32 3, %v3380
        %v3382 = vrot.slane %v362, %v3381
        %3384 = vbcast.lane.b32.xlu0 %v3382, 256
        %v3385 = vpop.permute.xlu0 %3384
        %v3386 = vlaneseq
        %v3387 = vshrl.u32 %v3386, 7
        %v3388 = vsub.s32 4, %v3387
        %v3389 = vrot.slane %v362, %v3388
        %3391 = vbcast.lane.b32.xlu0 %v3389, 256
        %v3392 = vpop.permute.xlu0 %3391
        %v3393 = vlaneseq
        %v3394 = vshrl.u32 %v3393, 7
        %v3395 = vsub.s32 5, %v3394
        %v3396 = vrot.slane %v362, %v3395
        %3398 = vbcast.lane.b32.xlu0 %v3396, 256
        %v3399 = vpop.permute.xlu0 %3398
        %v3400 = vlaneseq
        %v3401 = vshrl.u32 %v3400, 7
        %v3402 = vsub.s32 6, %v3401
        %v3403 = vrot.slane %v362, %v3402
        %3405 = vbcast.lane.b32.xlu0 %v3403, 256
        %v3406 = vpop.permute.xlu0 %3405
        %v3407 = vlaneseq
        %v3408 = vshrl.u32 %v3407, 7
        %v3409 = vsub.s32 7, %v3408
        %v3410 = vrot.slane %v362, %v3409
        %3412 = vbcast.lane.b32.xlu0 %v3410, 256
        %v3413 = vpop.permute.xlu0 %3412
        %v3414 = vlaneseq
        %v3415 = vshrl.u32 %v3414, 7
        %v3416 = vsub.s32 0, %v3415
        %v3417 = vrot.slane %v367, %v3416
        %3419 = vbcast.lane.b32.xlu0 %v3417, 256
        %v3420 = vpop.permute.xlu0 %3419
        %v3421 = vlaneseq
        %v3422 = vshrl.u32 %v3421, 7
        %v3423 = vsub.s32 1, %v3422
        %v3424 = vrot.slane %v367, %v3423
        %3426 = vbcast.lane.b32.xlu0 %v3424, 256
        %v3427 = vpop.permute.xlu0 %3426
        %v3428 = vlaneseq
        %v3429 = vshrl.u32 %v3428, 7
        %v3430 = vsub.s32 2, %v3429
        %v3431 = vrot.slane %v367, %v3430
        %3433 = vbcast.lane.b32.xlu0 %v3431, 256
        %v3434 = vpop.permute.xlu0 %3433
        %v3435 = vlaneseq
        %v3436 = vshrl.u32 %v3435, 7
        %v3437 = vsub.s32 3, %v3436
        %v3438 = vrot.slane %v367, %v3437
        %3440 = vbcast.lane.b32.xlu0 %v3438, 256
        %v3441 = vpop.permute.xlu0 %3440
        %v3442 = vlaneseq
        %v3443 = vshrl.u32 %v3442, 7
        %v3444 = vsub.s32 4, %v3443
        %v3445 = vrot.slane %v367, %v3444
        %3447 = vbcast.lane.b32.xlu0 %v3445, 256
        %v3448 = vpop.permute.xlu0 %3447
        %v3449 = vlaneseq
        %v3450 = vshrl.u32 %v3449, 7
        %v3451 = vsub.s32 5, %v3450
        %v3452 = vrot.slane %v367, %v3451
        %3454 = vbcast.lane.b32.xlu0 %v3452, 256
        %v3455 = vpop.permute.xlu0 %3454
        %v3456 = vlaneseq
        %v3457 = vshrl.u32 %v3456, 7
        %v3458 = vsub.s32 6, %v3457
        %v3459 = vrot.slane %v367, %v3458
        %3461 = vbcast.lane.b32.xlu0 %v3459, 256
        %v3462 = vpop.permute.xlu0 %3461
        %v3463 = vlaneseq
        %v3464 = vshrl.u32 %v3463, 7
        %v3465 = vsub.s32 7, %v3464
        %v3466 = vrot.slane %v367, %v3465
        %3468 = vbcast.lane.b32.xlu0 %v3466, 256
        %v3469 = vpop.permute.xlu0 %3468
        %v3474 = vcombine.high %v3242, %v3242
        %v3476 = vunpack.c.l.s4 1966171168
        %v3477 = vunpack.c.0.s8 %v3476
        %v3478 = vlaneseq
        %v3479 = vshrl.u32 %v3478, 7
        %v3480 = vsub.s32 %v3477, %v3479
        %v3481 = vrot.slane %v3242, %v3480
        %v3483 = vunpack.c.l.s4 1966171168
        %v3484 = vunpack.c.0.s8 %v3483
        %v3485 = vlaneseq
        %v3486 = vshrl.u32 %v3485, 7
        %v3487 = vsub.s32 %v3484, %v3486
        %v3488 = vrot.slane %v3474, %v3487
        %v3489 = vcombine.high %v3481, %v3481
        %v3490 = vcombine.high %v3488, %v3488
        %v3492 = vunpack.c.l.s4 1966171168
        %v3493 = vunpack.c.0.s8 %v3492
        %v3494 = vlaneseq
        %v3495 = vshrl.u32 %v3494, 7
        %v3496 = vsub.s32 %v3493, %v3495
        %v3497 = vrot.slane %v3481, %v3496
        %v3499 = vunpack.c.l.s4 1966171168
        %v3500 = vunpack.c.0.s8 %v3499
        %v3501 = vlaneseq
        %v3502 = vshrl.u32 %v3501, 7
        %v3503 = vsub.s32 %v3500, %v3502
        %v3504 = vrot.slane %v3488, %v3503
        %v3506 = vunpack.c.l.s4 1966171168
        %v3507 = vunpack.c.0.s8 %v3506
        %v3508 = vlaneseq
        %v3509 = vshrl.u32 %v3508, 7
        %v3510 = vsub.s32 %v3507, %v3509
        %v3511 = vrot.slane %v3489, %v3510
        %v3513 = vunpack.c.l.s4 1966171168
        %v3514 = vunpack.c.0.s8 %v3513
        %v3515 = vlaneseq
        %v3516 = vshrl.u32 %v3515, 7
        %v3517 = vsub.s32 %v3514, %v3516
        %v3518 = vrot.slane %v3490, %v3517
        %v3519 = vcombine.high %v3497, %v3497
        %v3520 = vcombine.high %v3504, %v3504
        %v3521 = vcombine.high %v3511, %v3511
        %v3522 = vcombine.high %v3518, %v3518
        %v3523 = vcombine.high %v3243, %v3243
        %v3525 = vunpack.c.l.s4 1966171168
        %v3526 = vunpack.c.0.s8 %v3525
        %v3527 = vlaneseq
        %v3528 = vshrl.u32 %v3527, 7
        %v3529 = vsub.s32 %v3526, %v3528
        %v3530 = vrot.slane %v3243, %v3529
        %v3532 = vunpack.c.l.s4 1966171168
        %v3533 = vunpack.c.0.s8 %v3532
        %v3534 = vlaneseq
        %v3535 = vshrl.u32 %v3534, 7
        %v3536 = vsub.s32 %v3533, %v3535
        %v3537 = vrot.slane %v3523, %v3536
        %v3538 = vcombine.high %v3530, %v3530
        %v3539 = vcombine.high %v3537, %v3537
        %v3541 = vunpack.c.l.s4 1966171168
        %v3542 = vunpack.c.0.s8 %v3541
        %v3543 = vlaneseq
        %v3544 = vshrl.u32 %v3543, 7
        %v3545 = vsub.s32 %v3542, %v3544
        %v3546 = vrot.slane %v3530, %v3545
        %v3548 = vunpack.c.l.s4 1966171168
        %v3549 = vunpack.c.0.s8 %v3548
        %v3550 = vlaneseq
        %v3551 = vshrl.u32 %v3550, 7
        %v3552 = vsub.s32 %v3549, %v3551
        %v3553 = vrot.slane %v3537, %v3552
        %v3555 = vunpack.c.l.s4 1966171168
        %v3556 = vunpack.c.0.s8 %v3555
        %v3557 = vlaneseq
        %v3558 = vshrl.u32 %v3557, 7
        %v3559 = vsub.s32 %v3556, %v3558
        %v3560 = vrot.slane %v3538, %v3559
        %v3562 = vunpack.c.l.s4 1966171168
        %v3563 = vunpack.c.0.s8 %v3562
        %v3564 = vlaneseq
        %v3565 = vshrl.u32 %v3564, 7
        %v3566 = vsub.s32 %v3563, %v3565
        %v3567 = vrot.slane %v3539, %v3566
        %v3568 = vcombine.high %v3546, %v3546
        %v3569 = vcombine.high %v3553, %v3553
        %v3570 = vcombine.high %v3560, %v3560
        %v3571 = vcombine.high %v3567, %v3567
        %v3572 = vcombine.high %v3244, %v3244
        %v3574 = vunpack.c.l.s4 1966171168
        %v3575 = vunpack.c.0.s8 %v3574
        %v3576 = vlaneseq
        %v3577 = vshrl.u32 %v3576, 7
        %v3578 = vsub.s32 %v3575, %v3577
        %v3579 = vrot.slane %v3244, %v3578
        %v3581 = vunpack.c.l.s4 1966171168
        %v3582 = vunpack.c.0.s8 %v3581
        %v3583 = vlaneseq
        %v3584 = vshrl.u32 %v3583, 7
        %v3585 = vsub.s32 %v3582, %v3584
        %v3586 = vrot.slane %v3572, %v3585
        %v3587 = vcombine.high %v3579, %v3579
        %v3588 = vcombine.high %v3586, %v3586
        %v3590 = vunpack.c.l.s4 1966171168
        %v3591 = vunpack.c.0.s8 %v3590
        %v3592 = vlaneseq
        %v3593 = vshrl.u32 %v3592, 7
        %v3594 = vsub.s32 %v3591, %v3593
        %v3595 = vrot.slane %v3579, %v3594
        %v3597 = vunpack.c.l.s4 1966171168
        %v3598 = vunpack.c.0.s8 %v3597
        %v3599 = vlaneseq
        %v3600 = vshrl.u32 %v3599, 7
        %v3601 = vsub.s32 %v3598, %v3600
        %v3602 = vrot.slane %v3586, %v3601
        %v3604 = vunpack.c.l.s4 1966171168
        %v3605 = vunpack.c.0.s8 %v3604
        %v3606 = vlaneseq
        %v3607 = vshrl.u32 %v3606, 7
        %v3608 = vsub.s32 %v3605, %v3607
        %v3609 = vrot.slane %v3587, %v3608
        %v3611 = vunpack.c.l.s4 1966171168
        %v3612 = vunpack.c.0.s8 %v3611
        %v3613 = vlaneseq
        %v3614 = vshrl.u32 %v3613, 7
        %v3615 = vsub.s32 %v3612, %v3614
        %v3616 = vrot.slane %v3588, %v3615
        %v3617 = vcombine.high %v3595, %v3595
        %v3618 = vcombine.high %v3602, %v3602
        %v3619 = vcombine.high %v3609, %v3609
        %v3620 = vcombine.high %v3616, %v3616
        %v3621 = vcombine.high %v3245, %v3245
        %v3623 = vunpack.c.l.s4 1966171168
        %v3624 = vunpack.c.0.s8 %v3623
        %v3625 = vlaneseq
        %v3626 = vshrl.u32 %v3625, 7
        %v3627 = vsub.s32 %v3624, %v3626
        %v3628 = vrot.slane %v3245, %v3627
        %v3630 = vunpack.c.l.s4 1966171168
        %v3631 = vunpack.c.0.s8 %v3630
        %v3632 = vlaneseq
        %v3633 = vshrl.u32 %v3632, 7
        %v3634 = vsub.s32 %v3631, %v3633
        %v3635 = vrot.slane %v3621, %v3634
        %v3636 = vcombine.high %v3628, %v3628
        %v3637 = vcombine.high %v3635, %v3635
        %v3639 = vunpack.c.l.s4 1966171168
        %v3640 = vunpack.c.0.s8 %v3639
        %v3641 = vlaneseq
        %v3642 = vshrl.u32 %v3641, 7
        %v3643 = vsub.s32 %v3640, %v3642
        %v3644 = vrot.slane %v3628, %v3643
        %v3646 = vunpack.c.l.s4 1966171168
        %v3647 = vunpack.c.0.s8 %v3646
        %v3648 = vlaneseq
        %v3649 = vshrl.u32 %v3648, 7
        %v3650 = vsub.s32 %v3647, %v3649
        %v3651 = vrot.slane %v3635, %v3650
        %v3653 = vunpack.c.l.s4 1966171168
        %v3654 = vunpack.c.0.s8 %v3653
        %v3655 = vlaneseq
        %v3656 = vshrl.u32 %v3655, 7
        %v3657 = vsub.s32 %v3654, %v3656
        %v3658 = vrot.slane %v3636, %v3657
        %v3660 = vunpack.c.l.s4 1966171168
        %v3661 = vunpack.c.0.s8 %v3660
        %v3662 = vlaneseq
        %v3663 = vshrl.u32 %v3662, 7
        %v3664 = vsub.s32 %v3661, %v3663
        %v3665 = vrot.slane %v3637, %v3664
        %v3666 = vcombine.high %v3644, %v3644
        %v3667 = vcombine.high %v3651, %v3651
        %v3668 = vcombine.high %v3658, %v3658
        %v3669 = vcombine.high %v3665, %v3665
        %v3670 = vlaneseq
        %v3671 = vshrl.u32 %v3670, 7
        %v3672 = vsub.s32 0, %v3671
        %v3673 = vrot.slane %v3497, %v3672
        %v3674 = vlaneseq
        %v3675 = vshrl.u32 %v3674, 7
        %v3676 = vsub.s32 0, %v3675
        %v3677 = vrot.slane %v3511, %v3676
        %v3678 = vlaneseq
        %v3679 = vshrl.u32 %v3678, 7
        %v3680 = vsub.s32 0, %v3679
        %v3681 = vrot.slane %v3519, %v3680
        %v3682 = vlaneseq
        %v3683 = vshrl.u32 %v3682, 7
        %v3684 = vsub.s32 0, %v3683
        %v3685 = vrot.slane %v3521, %v3684
        %v3686 = vlaneseq
        %v3687 = vshrl.u32 %v3686, 7
        %v3688 = vsub.s32 0, %v3687
        %v3689 = vrot.slane %v3504, %v3688
        %v3690 = vlaneseq
        %v3691 = vshrl.u32 %v3690, 7
        %v3692 = vsub.s32 0, %v3691
        %v3693 = vrot.slane %v3518, %v3692
        %v3694 = vlaneseq
        %v3695 = vshrl.u32 %v3694, 7
        %v3696 = vsub.s32 0, %v3695
        %v3697 = vrot.slane %v3520, %v3696
        %v3698 = vlaneseq
        %v3699 = vshrl.u32 %v3698, 7
        %v3700 = vsub.s32 0, %v3699
        %v3701 = vrot.slane %v3522, %v3700
        %v3702 = vlaneseq
        %v3703 = vshrl.u32 %v3702, 7
        %v3704 = vsub.s32 0, %v3703
        %v3705 = vrot.slane %v3546, %v3704
        %v3706 = vlaneseq
        %v3707 = vshrl.u32 %v3706, 7
        %v3708 = vsub.s32 0, %v3707
        %v3709 = vrot.slane %v3560, %v3708
        %v3710 = vlaneseq
        %v3711 = vshrl.u32 %v3710, 7
        %v3712 = vsub.s32 0, %v3711
        %v3713 = vrot.slane %v3568, %v3712
        %v3714 = vlaneseq
        %v3715 = vshrl.u32 %v3714, 7
        %v3716 = vsub.s32 0, %v3715
        %v3717 = vrot.slane %v3570, %v3716
        %v3718 = vlaneseq
        %v3719 = vshrl.u32 %v3718, 7
        %v3720 = vsub.s32 0, %v3719
        %v3721 = vrot.slane %v3553, %v3720
        %v3722 = vlaneseq
        %v3723 = vshrl.u32 %v3722, 7
        %v3724 = vsub.s32 0, %v3723
        %v3725 = vrot.slane %v3567, %v3724
        %v3726 = vlaneseq
        %v3727 = vshrl.u32 %v3726, 7
        %v3728 = vsub.s32 0, %v3727
        %v3729 = vrot.slane %v3569, %v3728
        %v3730 = vlaneseq
        %v3731 = vshrl.u32 %v3730, 7
        %v3732 = vsub.s32 0, %v3731
        %v3733 = vrot.slane %v3571, %v3732
        %v3734 = vlaneseq
        %v3735 = vshrl.u32 %v3734, 7
        %v3736 = vsub.s32 0, %v3735
        %v3737 = vrot.slane %v3595, %v3736
        %v3738 = vlaneseq
        %v3739 = vshrl.u32 %v3738, 7
        %v3740 = vsub.s32 0, %v3739
        %v3741 = vrot.slane %v3609, %v3740
        %v3742 = vlaneseq
        %v3743 = vshrl.u32 %v3742, 7
        %v3744 = vsub.s32 0, %v3743
        %v3745 = vrot.slane %v3617, %v3744
        %v3746 = vlaneseq
        %v3747 = vshrl.u32 %v3746, 7
        %v3748 = vsub.s32 0, %v3747
        %v3749 = vrot.slane %v3619, %v3748
        %v3750 = vlaneseq
        %v3751 = vshrl.u32 %v3750, 7
        %v3752 = vsub.s32 0, %v3751
        %v3753 = vrot.slane %v3602, %v3752
        %v3754 = vlaneseq
        %v3755 = vshrl.u32 %v3754, 7
        %v3756 = vsub.s32 0, %v3755
        %v3757 = vrot.slane %v3616, %v3756
        %v3758 = vlaneseq
        %v3759 = vshrl.u32 %v3758, 7
        %v3760 = vsub.s32 0, %v3759
        %v3761 = vrot.slane %v3618, %v3760
        %v3762 = vlaneseq
        %v3763 = vshrl.u32 %v3762, 7
        %v3764 = vsub.s32 0, %v3763
        %v3765 = vrot.slane %v3620, %v3764
        %v3766 = vlaneseq
        %v3767 = vshrl.u32 %v3766, 7
        %v3768 = vsub.s32 0, %v3767
        %v3769 = vrot.slane %v3644, %v3768
        %v3770 = vlaneseq
        %v3771 = vshrl.u32 %v3770, 7
        %v3772 = vsub.s32 0, %v3771
        %v3773 = vrot.slane %v3658, %v3772
        %v3774 = vlaneseq
        %v3775 = vshrl.u32 %v3774, 7
        %v3776 = vsub.s32 0, %v3775
        %v3777 = vrot.slane %v3666, %v3776
        %v3778 = vlaneseq
        %v3779 = vshrl.u32 %v3778, 7
        %v3780 = vsub.s32 0, %v3779
        %v3781 = vrot.slane %v3668, %v3780
        %v3782 = vlaneseq
        %v3783 = vshrl.u32 %v3782, 7
        %v3784 = vsub.s32 0, %v3783
        %v3785 = vrot.slane %v3651, %v3784
        %v3786 = vlaneseq
        %v3787 = vshrl.u32 %v3786, 7
        %v3788 = vsub.s32 0, %v3787
        %v3789 = vrot.slane %v3665, %v3788
        %v3790 = vlaneseq
        %v3791 = vshrl.u32 %v3790, 7
        %v3792 = vsub.s32 0, %v3791
        %v3793 = vrot.slane %v3667, %v3792
        %v3794 = vlaneseq
        %v3795 = vshrl.u32 %v3794, 7
        %v3796 = vsub.s32 0, %v3795
        %v3797 = vrot.slane %v3669, %v3796
        %v3830 = vadd.f32 %v3252, %v3673
        %v3831 = vadd.f32 %v3259, %v3677
        %v3832 = vadd.f32 %v3266, %v3681
        %v3833 = vadd.f32 %v3273, %v3685
        %v3834 = vadd.f32 %v3280, %v3689
        %v3835 = vadd.f32 %v3287, %v3693
        %v3836 = vadd.f32 %v3294, %v3697
        %v3837 = vadd.f32 %v3301, %v3701
        %v3838 = vadd.f32 %v3308, %v3705
        %v3839 = vadd.f32 %v3315, %v3709
        %v3840 = vadd.f32 %v3322, %v3713
        %v3841 = vadd.f32 %v3329, %v3717
        %v3842 = vadd.f32 %v3336, %v3721
        %v3843 = vadd.f32 %v3343, %v3725
        %v3844 = vadd.f32 %v3350, %v3729
        %v3845 = vadd.f32 %v3357, %v3733
        %v3846 = vadd.f32 %v3364, %v3737
        %v3847 = vadd.f32 %v3371, %v3741
        %v3848 = vadd.f32 %v3378, %v3745
        %v3849 = vadd.f32 %v3385, %v3749
        %v3850 = vadd.f32 %v3392, %v3753
        %v3851 = vadd.f32 %v3399, %v3757
        %v3852 = vadd.f32 %v3406, %v3761
        %v3853 = vadd.f32 %v3413, %v3765
        %v3854 = vadd.f32 %v3420, %v3769
        %v3855 = vadd.f32 %v3427, %v3773
        %v3856 = vadd.f32 %v3434, %v3777
        %v3857 = vadd.f32 %v3441, %v3781
        %v3858 = vadd.f32 %v3448, %v3785
        %v3859 = vadd.f32 %v3455, %v3789
        %v3860 = vadd.f32 %v3462, %v3793
        %v3861 = vadd.f32 %v3469, %v3797
        %v3862 = vcombine.low %v3830, %v3832
        %v3863 = vcombine.high %v3830, %v3832
        %v3865 = vunpack.c.l.s4 1983009808
        %v3866 = vunpack.c.0.s8 %v3865
        %v3867 = vlaneseq
        %v3868 = vshrl.u32 %v3867, 7
        %v3869 = vsub.s32 %v3866, %v3868
        %v3870 = vrot.slane %v3862, %v3869
        %v3872 = vunpack.c.l.s4 1983009808
        %v3873 = vunpack.c.0.s8 %v3872
        %v3874 = vlaneseq
        %v3875 = vshrl.u32 %v3874, 7
        %v3876 = vsub.s32 %v3873, %v3875
        %v3877 = vrot.slane %v3863, %v3876
        %v3878 = vcombine.low %v3831, %v3833
        %v3879 = vcombine.high %v3831, %v3833
        %v3881 = vunpack.c.l.s4 1983009808
        %v3882 = vunpack.c.0.s8 %v3881
        %v3883 = vlaneseq
        %v3884 = vshrl.u32 %v3883, 7
        %v3885 = vsub.s32 %v3882, %v3884
        %v3886 = vrot.slane %v3878, %v3885
        %v3888 = vunpack.c.l.s4 1983009808
        %v3889 = vunpack.c.0.s8 %v3888
        %v3890 = vlaneseq
        %v3891 = vshrl.u32 %v3890, 7
        %v3892 = vsub.s32 %v3889, %v3891
        %v3893 = vrot.slane %v3879, %v3892
        %v3894 = vcombine.low %v3834, %v3836
        %v3895 = vcombine.high %v3834, %v3836
        %v3897 = vunpack.c.l.s4 1983009808
        %v3898 = vunpack.c.0.s8 %v3897
        %v3899 = vlaneseq
        %v3900 = vshrl.u32 %v3899, 7
        %v3901 = vsub.s32 %v3898, %v3900
        %v3902 = vrot.slane %v3894, %v3901
        %v3904 = vunpack.c.l.s4 1983009808
        %v3905 = vunpack.c.0.s8 %v3904
        %v3906 = vlaneseq
        %v3907 = vshrl.u32 %v3906, 7
        %v3908 = vsub.s32 %v3905, %v3907
        %v3909 = vrot.slane %v3895, %v3908
        %v3910 = vcombine.low %v3835, %v3837
        %v3911 = vcombine.high %v3835, %v3837
        %v3913 = vunpack.c.l.s4 1983009808
        %v3914 = vunpack.c.0.s8 %v3913
        %v3915 = vlaneseq
        %v3916 = vshrl.u32 %v3915, 7
        %v3917 = vsub.s32 %v3914, %v3916
        %v3918 = vrot.slane %v3910, %v3917
        %v3920 = vunpack.c.l.s4 1983009808
        %v3921 = vunpack.c.0.s8 %v3920
        %v3922 = vlaneseq
        %v3923 = vshrl.u32 %v3922, 7
        %v3924 = vsub.s32 %v3921, %v3923
        %v3925 = vrot.slane %v3911, %v3924
        %v3926 = vcombine.low %v3870, %v3886
        %v3927 = vcombine.high %v3870, %v3886
        %v3929 = vunpack.c.l.s4 1934713408
        %v3930 = vunpack.c.0.s8 %v3929
        %v3931 = vlaneseq
        %v3932 = vshrl.u32 %v3931, 7
        %v3933 = vsub.s32 %v3930, %v3932
        %v3934 = vrot.slane %v3926, %v3933
        %v3936 = vunpack.c.l.s4 1934713408
        %v3937 = vunpack.c.0.s8 %v3936
        %v3938 = vlaneseq
        %v3939 = vshrl.u32 %v3938, 7
        %v3940 = vsub.s32 %v3937, %v3939
        %v3941 = vrot.slane %v3927, %v3940
        %v3942 = vcombine.low %v3877, %v3893
        %v3943 = vcombine.high %v3877, %v3893
        %v3945 = vunpack.c.l.s4 1934713408
        %v3946 = vunpack.c.0.s8 %v3945
        %v3947 = vlaneseq
        %v3948 = vshrl.u32 %v3947, 7
        %v3949 = vsub.s32 %v3946, %v3948
        %v3950 = vrot.slane %v3942, %v3949
        %v3952 = vunpack.c.l.s4 1934713408
        %v3953 = vunpack.c.0.s8 %v3952
        %v3954 = vlaneseq
        %v3955 = vshrl.u32 %v3954, 7
        %v3956 = vsub.s32 %v3953, %v3955
        %v3957 = vrot.slane %v3943, %v3956
        %v3958 = vcombine.low %v3902, %v3918
        %v3959 = vcombine.high %v3902, %v3918
        %v3961 = vunpack.c.l.s4 1934713408
        %v3962 = vunpack.c.0.s8 %v3961
        %v3963 = vlaneseq
        %v3964 = vshrl.u32 %v3963, 7
        %v3965 = vsub.s32 %v3962, %v3964
        %v3966 = vrot.slane %v3958, %v3965
        %v3968 = vunpack.c.l.s4 1934713408
        %v3969 = vunpack.c.0.s8 %v3968
        %v3970 = vlaneseq
        %v3971 = vshrl.u32 %v3970, 7
        %v3972 = vsub.s32 %v3969, %v3971
        %v3973 = vrot.slane %v3959, %v3972
        %v3974 = vcombine.low %v3909, %v3925
        %v3975 = vcombine.high %v3909, %v3925
        %v3977 = vunpack.c.l.s4 1934713408
        %v3978 = vunpack.c.0.s8 %v3977
        %v3979 = vlaneseq
        %v3980 = vshrl.u32 %v3979, 7
        %v3981 = vsub.s32 %v3978, %v3980
        %v3982 = vrot.slane %v3974, %v3981
        %v3984 = vunpack.c.l.s4 1934713408
        %v3985 = vunpack.c.0.s8 %v3984
        %v3986 = vlaneseq
        %v3987 = vshrl.u32 %v3986, 7
        %v3988 = vsub.s32 %v3985, %v3987
        %v3989 = vrot.slane %v3975, %v3988
        %v3990 = vcombine.low %v3934, %v3966
        %v3991 = vcombine.high %v3934, %v3966
        %v3992 = vcombine.low %v3941, %v3973
        %v3993 = vcombine.high %v3941, %v3973
        %v3994 = vcombine.low %v3950, %v3982
        %v3995 = vcombine.high %v3950, %v3982
        %v3996 = vcombine.low %v3957, %v3989
        %v3997 = vcombine.high %v3957, %v3989
        %v3998 = vcombine.low %v3838, %v3840
        %v3999 = vcombine.high %v3838, %v3840
        %v4001 = vunpack.c.l.s4 1983009808
        %v4002 = vunpack.c.0.s8 %v4001
        %v4003 = vlaneseq
        %v4004 = vshrl.u32 %v4003, 7
        %v4005 = vsub.s32 %v4002, %v4004
        %v4006 = vrot.slane %v3998, %v4005
        %v4008 = vunpack.c.l.s4 1983009808
        %v4009 = vunpack.c.0.s8 %v4008
        %v4010 = vlaneseq
        %v4011 = vshrl.u32 %v4010, 7
        %v4012 = vsub.s32 %v4009, %v4011
        %v4013 = vrot.slane %v3999, %v4012
        %v4014 = vcombine.low %v3839, %v3841
        %v4015 = vcombine.high %v3839, %v3841
        %v4017 = vunpack.c.l.s4 1983009808
        %v4018 = vunpack.c.0.s8 %v4017
        %v4019 = vlaneseq
        %v4020 = vshrl.u32 %v4019, 7
        %v4021 = vsub.s32 %v4018, %v4020
        %v4022 = vrot.slane %v4014, %v4021
        %v4024 = vunpack.c.l.s4 1983009808
        %v4025 = vunpack.c.0.s8 %v4024
        %v4026 = vlaneseq
        %v4027 = vshrl.u32 %v4026, 7
        %v4028 = vsub.s32 %v4025, %v4027
        %v4029 = vrot.slane %v4015, %v4028
        %v4030 = vcombine.low %v3842, %v3844
        %v4031 = vcombine.high %v3842, %v3844
        %v4033 = vunpack.c.l.s4 1983009808
        %v4034 = vunpack.c.0.s8 %v4033
        %v4035 = vlaneseq
        %v4036 = vshrl.u32 %v4035, 7
        %v4037 = vsub.s32 %v4034, %v4036
        %v4038 = vrot.slane %v4030, %v4037
        %v4040 = vunpack.c.l.s4 1983009808
        %v4041 = vunpack.c.0.s8 %v4040
        %v4042 = vlaneseq
        %v4043 = vshrl.u32 %v4042, 7
        %v4044 = vsub.s32 %v4041, %v4043
        %v4045 = vrot.slane %v4031, %v4044
        %v4046 = vcombine.low %v3843, %v3845
        %v4047 = vcombine.high %v3843, %v3845
        %v4049 = vunpack.c.l.s4 1983009808
        %v4050 = vunpack.c.0.s8 %v4049
        %v4051 = vlaneseq
        %v4052 = vshrl.u32 %v4051, 7
        %v4053 = vsub.s32 %v4050, %v4052
        %v4054 = vrot.slane %v4046, %v4053
        %v4056 = vunpack.c.l.s4 1983009808
        %v4057 = vunpack.c.0.s8 %v4056
        %v4058 = vlaneseq
        %v4059 = vshrl.u32 %v4058, 7
        %v4060 = vsub.s32 %v4057, %v4059
        %v4061 = vrot.slane %v4047, %v4060
        %v4062 = vcombine.low %v4006, %v4022
        %v4063 = vcombine.high %v4006, %v4022
        %v4065 = vunpack.c.l.s4 1934713408
        %v4066 = vunpack.c.0.s8 %v4065
        %v4067 = vlaneseq
        %v4068 = vshrl.u32 %v4067, 7
        %v4069 = vsub.s32 %v4066, %v4068
        %v4070 = vrot.slane %v4062, %v4069
        %v4072 = vunpack.c.l.s4 1934713408
        %v4073 = vunpack.c.0.s8 %v4072
        %v4074 = vlaneseq
        %v4075 = vshrl.u32 %v4074, 7
        %v4076 = vsub.s32 %v4073, %v4075
        %v4077 = vrot.slane %v4063, %v4076
        %v4078 = vcombine.low %v4013, %v4029
        %v4079 = vcombine.high %v4013, %v4029
        %v4081 = vunpack.c.l.s4 1934713408
        %v4082 = vunpack.c.0.s8 %v4081
        %v4083 = vlaneseq
        %v4084 = vshrl.u32 %v4083, 7
        %v4085 = vsub.s32 %v4082, %v4084
        %v4086 = vrot.slane %v4078, %v4085
        %v4088 = vunpack.c.l.s4 1934713408
        %v4089 = vunpack.c.0.s8 %v4088
        %v4090 = vlaneseq
        %v4091 = vshrl.u32 %v4090, 7
        %v4092 = vsub.s32 %v4089, %v4091
        %v4093 = vrot.slane %v4079, %v4092
        %v4094 = vcombine.low %v4038, %v4054
        %v4095 = vcombine.high %v4038, %v4054
        %v4097 = vunpack.c.l.s4 1934713408
        %v4098 = vunpack.c.0.s8 %v4097
        %v4099 = vlaneseq
        %v4100 = vshrl.u32 %v4099, 7
        %v4101 = vsub.s32 %v4098, %v4100
        %v4102 = vrot.slane %v4094, %v4101
        %v4104 = vunpack.c.l.s4 1934713408
        %v4105 = vunpack.c.0.s8 %v4104
        %v4106 = vlaneseq
        %v4107 = vshrl.u32 %v4106, 7
        %v4108 = vsub.s32 %v4105, %v4107
        %v4109 = vrot.slane %v4095, %v4108
        %v4110 = vcombine.low %v4045, %v4061
        %v4111 = vcombine.high %v4045, %v4061
        %v4113 = vunpack.c.l.s4 1934713408
        %v4114 = vunpack.c.0.s8 %v4113
        %v4115 = vlaneseq
        %v4116 = vshrl.u32 %v4115, 7
        %v4117 = vsub.s32 %v4114, %v4116
        %v4118 = vrot.slane %v4110, %v4117
        %v4120 = vunpack.c.l.s4 1934713408
        %v4121 = vunpack.c.0.s8 %v4120
        %v4122 = vlaneseq
        %v4123 = vshrl.u32 %v4122, 7
        %v4124 = vsub.s32 %v4121, %v4123
        %v4125 = vrot.slane %v4111, %v4124
        %v4126 = vcombine.low %v4070, %v4102
        %v4127 = vcombine.high %v4070, %v4102
        %v4128 = vcombine.low %v4077, %v4109
        %v4129 = vcombine.high %v4077, %v4109
        %v4130 = vcombine.low %v4086, %v4118
        %v4131 = vcombine.high %v4086, %v4118
        %v4132 = vcombine.low %v4093, %v4125
        %v4133 = vcombine.high %v4093, %v4125
        %v4134 = vcombine.low %v3846, %v3848
        %v4135 = vcombine.high %v3846, %v3848
        %v4137 = vunpack.c.l.s4 1983009808
        %v4138 = vunpack.c.0.s8 %v4137
        %v4139 = vlaneseq
        %v4140 = vshrl.u32 %v4139, 7
        %v4141 = vsub.s32 %v4138, %v4140
        %v4142 = vrot.slane %v4134, %v4141
        %v4144 = vunpack.c.l.s4 1983009808
        %v4145 = vunpack.c.0.s8 %v4144
        %v4146 = vlaneseq
        %v4147 = vshrl.u32 %v4146, 7
        %v4148 = vsub.s32 %v4145, %v4147
        %v4149 = vrot.slane %v4135, %v4148
        %v4150 = vcombine.low %v3847, %v3849
        %v4151 = vcombine.high %v3847, %v3849
        %v4153 = vunpack.c.l.s4 1983009808
        %v4154 = vunpack.c.0.s8 %v4153
        %v4155 = vlaneseq
        %v4156 = vshrl.u32 %v4155, 7
        %v4157 = vsub.s32 %v4154, %v4156
        %v4158 = vrot.slane %v4150, %v4157
        %v4160 = vunpack.c.l.s4 1983009808
        %v4161 = vunpack.c.0.s8 %v4160
        %v4162 = vlaneseq
        %v4163 = vshrl.u32 %v4162, 7
        %v4164 = vsub.s32 %v4161, %v4163
        %v4165 = vrot.slane %v4151, %v4164
        %v4166 = vcombine.low %v3850, %v3852
        %v4167 = vcombine.high %v3850, %v3852
        %v4169 = vunpack.c.l.s4 1983009808
        %v4170 = vunpack.c.0.s8 %v4169
        %v4171 = vlaneseq
        %v4172 = vshrl.u32 %v4171, 7
        %v4173 = vsub.s32 %v4170, %v4172
        %v4174 = vrot.slane %v4166, %v4173
        %v4176 = vunpack.c.l.s4 1983009808
        %v4177 = vunpack.c.0.s8 %v4176
        %v4178 = vlaneseq
        %v4179 = vshrl.u32 %v4178, 7
        %v4180 = vsub.s32 %v4177, %v4179
        %v4181 = vrot.slane %v4167, %v4180
        %v4182 = vcombine.low %v3851, %v3853
        %v4183 = vcombine.high %v3851, %v3853
        %v4185 = vunpack.c.l.s4 1983009808
        %v4186 = vunpack.c.0.s8 %v4185
        %v4187 = vlaneseq
        %v4188 = vshrl.u32 %v4187, 7
        %v4189 = vsub.s32 %v4186, %v4188
        %v4190 = vrot.slane %v4182, %v4189
        %v4192 = vunpack.c.l.s4 1983009808
        %v4193 = vunpack.c.0.s8 %v4192
        %v4194 = vlaneseq
        %v4195 = vshrl.u32 %v4194, 7
        %v4196 = vsub.s32 %v4193, %v4195
        %v4197 = vrot.slane %v4183, %v4196
        %v4198 = vcombine.low %v4142, %v4158
        %v4199 = vcombine.high %v4142, %v4158
        %v4201 = vunpack.c.l.s4 1934713408
        %v4202 = vunpack.c.0.s8 %v4201
        %v4203 = vlaneseq
        %v4204 = vshrl.u32 %v4203, 7
        %v4205 = vsub.s32 %v4202, %v4204
        %v4206 = vrot.slane %v4198, %v4205
        %v4208 = vunpack.c.l.s4 1934713408
        %v4209 = vunpack.c.0.s8 %v4208
        %v4210 = vlaneseq
        %v4211 = vshrl.u32 %v4210, 7
        %v4212 = vsub.s32 %v4209, %v4211
        %v4213 = vrot.slane %v4199, %v4212
        %v4214 = vcombine.low %v4149, %v4165
        %v4215 = vcombine.high %v4149, %v4165
        %v4217 = vunpack.c.l.s4 1934713408
        %v4218 = vunpack.c.0.s8 %v4217
        %v4219 = vlaneseq
        %v4220 = vshrl.u32 %v4219, 7
        %v4221 = vsub.s32 %v4218, %v4220
        %v4222 = vrot.slane %v4214, %v4221
        %v4224 = vunpack.c.l.s4 1934713408
        %v4225 = vunpack.c.0.s8 %v4224
        %v4226 = vlaneseq
        %v4227 = vshrl.u32 %v4226, 7
        %v4228 = vsub.s32 %v4225, %v4227
        %v4229 = vrot.slane %v4215, %v4228
        %v4230 = vcombine.low %v4174, %v4190
        %v4231 = vcombine.high %v4174, %v4190
        %v4233 = vunpack.c.l.s4 1934713408
        %v4234 = vunpack.c.0.s8 %v4233
        %v4235 = vlaneseq
        %v4236 = vshrl.u32 %v4235, 7
        %v4237 = vsub.s32 %v4234, %v4236
        %v4238 = vrot.slane %v4230, %v4237
        %v4240 = vunpack.c.l.s4 1934713408
        %v4241 = vunpack.c.0.s8 %v4240
        %v4242 = vlaneseq
        %v4243 = vshrl.u32 %v4242, 7
        %v4244 = vsub.s32 %v4241, %v4243
        %v4245 = vrot.slane %v4231, %v4244
        %v4246 = vcombine.low %v4181, %v4197
        %v4247 = vcombine.high %v4181, %v4197
        %v4249 = vunpack.c.l.s4 1934713408
        %v4250 = vunpack.c.0.s8 %v4249
        %v4251 = vlaneseq
        %v4252 = vshrl.u32 %v4251, 7
        %v4253 = vsub.s32 %v4250, %v4252
        %v4254 = vrot.slane %v4246, %v4253
        %v4256 = vunpack.c.l.s4 1934713408
        %v4257 = vunpack.c.0.s8 %v4256
        %v4258 = vlaneseq
        %v4259 = vshrl.u32 %v4258, 7
        %v4260 = vsub.s32 %v4257, %v4259
        %v4261 = vrot.slane %v4247, %v4260
        %v4262 = vcombine.low %v4206, %v4238
        %v4263 = vcombine.high %v4206, %v4238
        %v4264 = vcombine.low %v4213, %v4245
        %v4265 = vcombine.high %v4213, %v4245
        %v4266 = vcombine.low %v4222, %v4254
        %v4267 = vcombine.high %v4222, %v4254
        %v4268 = vcombine.low %v4229, %v4261
        %v4269 = vcombine.high %v4229, %v4261
        %v4270 = vcombine.low %v3854, %v3856
        %v4271 = vcombine.high %v3854, %v3856
        %v4273 = vunpack.c.l.s4 1983009808
        %v4274 = vunpack.c.0.s8 %v4273
        %v4275 = vlaneseq
        %v4276 = vshrl.u32 %v4275, 7
        %v4277 = vsub.s32 %v4274, %v4276
        %v4278 = vrot.slane %v4270, %v4277
        %v4280 = vunpack.c.l.s4 1983009808
        %v4281 = vunpack.c.0.s8 %v4280
        %v4282 = vlaneseq
        %v4283 = vshrl.u32 %v4282, 7
        %v4284 = vsub.s32 %v4281, %v4283
        %v4285 = vrot.slane %v4271, %v4284
        %v4286 = vcombine.low %v3855, %v3857
        %v4287 = vcombine.high %v3855, %v3857
        %v4289 = vunpack.c.l.s4 1983009808
        %v4290 = vunpack.c.0.s8 %v4289
        %v4291 = vlaneseq
        %v4292 = vshrl.u32 %v4291, 7
        %v4293 = vsub.s32 %v4290, %v4292
        %v4294 = vrot.slane %v4286, %v4293
        %v4296 = vunpack.c.l.s4 1983009808
        %v4297 = vunpack.c.0.s8 %v4296
        %v4298 = vlaneseq
        %v4299 = vshrl.u32 %v4298, 7
        %v4300 = vsub.s32 %v4297, %v4299
        %v4301 = vrot.slane %v4287, %v4300
        %v4302 = vcombine.low %v3858, %v3860
        %v4303 = vcombine.high %v3858, %v3860
        %v4305 = vunpack.c.l.s4 1983009808
        %v4306 = vunpack.c.0.s8 %v4305
        %v4307 = vlaneseq
        %v4308 = vshrl.u32 %v4307, 7
        %v4309 = vsub.s32 %v4306, %v4308
        %v4310 = vrot.slane %v4302, %v4309
        %v4312 = vunpack.c.l.s4 1983009808
        %v4313 = vunpack.c.0.s8 %v4312
        %v4314 = vlaneseq
        %v4315 = vshrl.u32 %v4314, 7
        %v4316 = vsub.s32 %v4313, %v4315
        %v4317 = vrot.slane %v4303, %v4316
        %v4318 = vcombine.low %v3859, %v3861
        %v4319 = vcombine.high %v3859, %v3861
        %v4321 = vunpack.c.l.s4 1983009808
        %v4322 = vunpack.c.0.s8 %v4321
        %v4323 = vlaneseq
        %v4324 = vshrl.u32 %v4323, 7
        %v4325 = vsub.s32 %v4322, %v4324
        %v4326 = vrot.slane %v4318, %v4325
        %v4328 = vunpack.c.l.s4 1983009808
        %v4329 = vunpack.c.0.s8 %v4328
        %v4330 = vlaneseq
        %v4331 = vshrl.u32 %v4330, 7
        %v4332 = vsub.s32 %v4329, %v4331
        %v4333 = vrot.slane %v4319, %v4332
        %v4334 = vcombine.low %v4278, %v4294
        %v4335 = vcombine.high %v4278, %v4294
        %v4337 = vunpack.c.l.s4 1934713408
        %v4338 = vunpack.c.0.s8 %v4337
        %v4339 = vlaneseq
        %v4340 = vshrl.u32 %v4339, 7
        %v4341 = vsub.s32 %v4338, %v4340
        %v4342 = vrot.slane %v4334, %v4341
        %v4344 = vunpack.c.l.s4 1934713408
        %v4345 = vunpack.c.0.s8 %v4344
        %v4346 = vlaneseq
        %v4347 = vshrl.u32 %v4346, 7
        %v4348 = vsub.s32 %v4345, %v4347
        %v4349 = vrot.slane %v4335, %v4348
        %v4350 = vcombine.low %v4285, %v4301
        %v4351 = vcombine.high %v4285, %v4301
        %v4353 = vunpack.c.l.s4 1934713408
        %v4354 = vunpack.c.0.s8 %v4353
        %v4355 = vlaneseq
        %v4356 = vshrl.u32 %v4355, 7
        %v4357 = vsub.s32 %v4354, %v4356
        %v4358 = vrot.slane %v4350, %v4357
        %v4360 = vunpack.c.l.s4 1934713408
        %v4361 = vunpack.c.0.s8 %v4360
        %v4362 = vlaneseq
        %v4363 = vshrl.u32 %v4362, 7
        %v4364 = vsub.s32 %v4361, %v4363
        %v4365 = vrot.slane %v4351, %v4364
        %v4366 = vcombine.low %v4310, %v4326
        %v4367 = vcombine.high %v4310, %v4326
        %v4369 = vunpack.c.l.s4 1934713408
        %v4370 = vunpack.c.0.s8 %v4369
        %v4371 = vlaneseq
        %v4372 = vshrl.u32 %v4371, 7
        %v4373 = vsub.s32 %v4370, %v4372
        %v4374 = vrot.slane %v4366, %v4373
        %v4376 = vunpack.c.l.s4 1934713408
        %v4377 = vunpack.c.0.s8 %v4376
        %v4378 = vlaneseq
        %v4379 = vshrl.u32 %v4378, 7
        %v4380 = vsub.s32 %v4377, %v4379
        %v4381 = vrot.slane %v4367, %v4380
        %v4382 = vcombine.low %v4317, %v4333
        %v4383 = vcombine.high %v4317, %v4333
        %v4385 = vunpack.c.l.s4 1934713408
        %v4386 = vunpack.c.0.s8 %v4385
        %v4387 = vlaneseq
        %v4388 = vshrl.u32 %v4387, 7
        %v4389 = vsub.s32 %v4386, %v4388
        %v4390 = vrot.slane %v4382, %v4389
        %v4392 = vunpack.c.l.s4 1934713408
        %v4393 = vunpack.c.0.s8 %v4392
        %v4394 = vlaneseq
        %v4395 = vshrl.u32 %v4394, 7
        %v4396 = vsub.s32 %v4393, %v4395
        %v4397 = vrot.slane %v4383, %v4396
        %v4398 = vcombine.low %v4342, %v4374
        %v4399 = vcombine.high %v4342, %v4374
        %v4400 = vcombine.low %v4349, %v4381
        %v4401 = vcombine.high %v4349, %v4381
        %v4402 = vcombine.low %v4358, %v4390
        %v4403 = vcombine.high %v4358, %v4390
        %v4404 = vcombine.low %v4365, %v4397
        %v4405 = vcombine.high %v4365, %v4397
        %4410 = vrot.lane.b32.xlu0 %v3991, 8
        %v4411 = vpop.permute.xlu0 %4410
        %4412 = vrot.lane.b32.xlu0 %v4127, 8
        %v4413 = vpop.permute.xlu0 %4412
        %4414 = vrot.lane.b32.xlu0 %v4263, 8
        %v4415 = vpop.permute.xlu0 %4414
        %4416 = vrot.lane.b32.xlu0 %v4399, 8
        %v4417 = vpop.permute.xlu0 %4416
        %4426 = vrot.lane.b32.xlu0 %v3992, 16
        %v4427 = vpop.permute.xlu0 %4426
        %4428 = vrot.lane.b32.xlu0 %v4128, 16
        %v4429 = vpop.permute.xlu0 %4428
        %4430 = vrot.lane.b32.xlu0 %v4264, 16
        %v4431 = vpop.permute.xlu0 %4430
        %4432 = vrot.lane.b32.xlu0 %v4400, 16
        %v4433 = vpop.permute.xlu0 %4432
        %4442 = vrot.lane.b32.xlu0 %v3993, 24
        %v4443 = vpop.permute.xlu0 %4442
        %4444 = vrot.lane.b32.xlu0 %v4129, 24
        %v4445 = vpop.permute.xlu0 %4444
        %4446 = vrot.lane.b32.xlu0 %v4265, 24
        %v4447 = vpop.permute.xlu0 %4446
        %4448 = vrot.lane.b32.xlu0 %v4401, 24
        %v4449 = vpop.permute.xlu0 %4448
        %4458 = vrot.lane.b32.xlu0 %v3994, 32
        %v4459 = vpop.permute.xlu0 %4458
        %4460 = vrot.lane.b32.xlu0 %v4130, 32
        %v4461 = vpop.permute.xlu0 %4460
        %4462 = vrot.lane.b32.xlu0 %v4266, 32
        %v4463 = vpop.permute.xlu0 %4462
        %4464 = vrot.lane.b32.xlu0 %v4402, 32
        %v4465 = vpop.permute.xlu0 %4464
        %4474 = vrot.lane.b32.xlu0 %v3995, 40
        %v4475 = vpop.permute.xlu0 %4474
        %4476 = vrot.lane.b32.xlu0 %v4131, 40
        %v4477 = vpop.permute.xlu0 %4476
        %4478 = vrot.lane.b32.xlu0 %v4267, 40
        %v4479 = vpop.permute.xlu0 %4478
        %4480 = vrot.lane.b32.xlu0 %v4403, 40
        %v4481 = vpop.permute.xlu0 %4480
        %4490 = vrot.lane.b32.xlu0 %v3996, 48
        %v4491 = vpop.permute.xlu0 %4490
        %4492 = vrot.lane.b32.xlu0 %v4132, 48
        %v4493 = vpop.permute.xlu0 %4492
        %4494 = vrot.lane.b32.xlu0 %v4268, 48
        %v4495 = vpop.permute.xlu0 %4494
        %4496 = vrot.lane.b32.xlu0 %v4404, 48
        %v4497 = vpop.permute.xlu0 %4496
        %4506 = vrot.lane.b32.xlu0 %v3997, 56
        %v4507 = vpop.permute.xlu0 %4506
        %4508 = vrot.lane.b32.xlu0 %v4133, 56
        %v4509 = vpop.permute.xlu0 %4508
        %4510 = vrot.lane.b32.xlu0 %v4269, 56
        %v4511 = vpop.permute.xlu0 %4510
        %4512 = vrot.lane.b32.xlu0 %v4405, 56
        %v4513 = vpop.permute.xlu0 %4512
        %vm4518 = vcmask 64512
        %v4519 = vsel %vm4518, %v3990, %v4411
        %v4520 = vsel %vm4518, %v4126, %v4413
        %v4521 = vsel %vm4518, %v4262, %v4415
        %v4522 = vsel %vm4518, %v4398, %v4417
        %vm4523 = vcmask 130048
        %v4524 = vsel %vm4523, %v4519, %v4427
        %v4525 = vsel %vm4523, %v4520, %v4429
        %v4526 = vsel %vm4523, %v4521, %v4431
        %v4527 = vsel %vm4523, %v4522, %v4433
        %vm4528 = vcmask 195584
        %v4529 = vsel %vm4528, %v4524, %v4443
        %v4530 = vsel %vm4528, %v4525, %v4445
        %v4531 = vsel %vm4528, %v4526, %v4447
        %v4532 = vsel %vm4528, %v4527, %v4449
        %v4533 = vsel %vm272, %v4529, %v4459
        %v4534 = vsel %vm272, %v4530, %v4461
        %v4535 = vsel %vm272, %v4531, %v4463
        %v4536 = vsel %vm272, %v4532, %v4465
        %vm4537 = vcmask 326656
        %v4538 = vsel %vm4537, %v4533, %v4475
        %v4539 = vsel %vm4537, %v4534, %v4477
        %v4540 = vsel %vm4537, %v4535, %v4479
        %v4541 = vsel %vm4537, %v4536, %v4481
        %vm4542 = vcmask 392192
        %v4543 = vsel %vm4542, %v4538, %v4491
        %v4544 = vsel %vm4542, %v4539, %v4493
        %v4545 = vsel %vm4542, %v4540, %v4495
        %v4546 = vsel %vm4542, %v4541, %v4497
        %vm4547 = vcmask 457728
        %v4548 = vsel %vm4547, %v4543, %v4507
        %v4549 = vsel %vm4547, %v4544, %v4509
        %v4550 = vsel %vm4547, %v4545, %v4511
        %v4551 = vsel %vm4547, %v4546, %v4513
        %vm4552 = vcmask 523264
        %4553 = vst.msk [vmem:[%s248] sm:$0xff] %vm4552, %v4548
        %4554 = vst.msk [vmem:[%s248 + $0x8] sm:$0xff] %vm4552, %v4549
        %4555 = vst.msk [vmem:[%s248 + $0x10] sm:$0xff] %vm4552, %v4550
        %4556 = vst.msk [vmem:[%s248 + $0x18] sm:$0xff] %vm4552, %v4551
        %s4557 = sand.u32 %s114, 1
        %s4558 = scalar_lea.sflag [#allocation4], %s4557
        %s4559 = sand.u32 %s114, 1
        %s4560 = smul.addr %s4559, 32
        %s4561 = scalar_lea.vmem [#allocation3], %s4560
        // Predicated region
        $region71: #{tpu_custom_call.1} parent=65 // pred_check
          %p4562 = pneg %p124
        $region72: #{tpu_custom_call.1} parent=65 // pred_check_branch
          %4564 = sbr.rel (%p4562) target = $region74
        $region73: #{tpu_custom_call.1} parent=65 // pred_region
          %s4565 = smul.u32 4, %s21
          %s4567 = ssub.s32 512, 512
          %4568 = vsyncadd %s4558, %s4567
          %s4569 = smul.addr %s4565, 8
          %s4570 = sadd.s32 %s22, %s4569
          %s4571 = smul.addr %s4570, 128
          %s4572 = scalar_lea.hbm %s3, %s4571
          %s4573 = sshll.u32 %s4561, 4
          %s4574 = int_to_ptr.vmem [resolvable:$true] %s4573
          %4579 = dma.vmem_to_hbm [thread:$0]  %s4574, 512, %s4572, %s4558, 128, 1024, 8
        $region74: #{tpu_custom_call.1} parent=65 // pred_fallthru
          _
      $region66: #{tpu_custom_call.1} parent=5 // pred_fallthru
        _
      %p4580 = scmp.le.s32.totalorder 2, %s12
      // Predicated region
      $region75: #{tpu_custom_call.1} parent=5 // pred_check
        %p4581 = pneg %p4580
      $region76: #{tpu_custom_call.1} parent=5 // pred_check_branch
        %4583 = sbr.rel (%p4581) target = $region78
      $region77: #{tpu_custom_call.1} parent=5 // pred_region
        %s4584 = ssub.s32 %s12, 2
        // Predicated region
        $region79: #{tpu_custom_call.1} parent=77 // pred_check
          %p4585 = pneg %p130
        $region80: #{tpu_custom_call.1} parent=77 // pred_check_branch
          %4587 = sbr.rel (%p4585) target = $region82
        $region81: #{tpu_custom_call.1} parent=77 // pred_region
          %s4588 = sand.u32 %s115, 1
          %s4589 = scalar_lea.sflag [#allocation4], %s4588
          %s4590 = sand.u32 %s115, 1
          %s4591 = smul.addr %s4590, 32
          %s4592 = scalar_lea.vmem [#allocation3], %s4591
          %4593 = dma.done %s4589, 512
        $region82: #{tpu_custom_call.1} parent=77 // pred_fallthru
          _
      $region78: #{tpu_custom_call.1} parent=5 // pred_fallthru
        _
    $region6: #{tpu_custom_call.1} parent=1 // loop_footer
      %s16 = sadd.s32 1, %s12
    $region7: #{tpu_custom_call.1} parent=1 // loop_footer_branch
      %11 = sbr.rel target = $region3
    $region8: #{tpu_custom_call.1} parent=1 // loop_exit
      _
    %4594 = vsyncpa [#allocation4], 1
    %s4595 = scalar_lea.sflag [#allocation4], 1
    %4596 = vsyncpa %s4595, 1

</llo_original>
